<compile_context>
chip_gen: v7x
topology: tpu7x:2x2x1
jax: 0.10.0
libtpu: 0.0.40
codegen_flags: <defaults>
</compile_context>

<pallas_src>
import functools

import jax
import jax.numpy as jnp
from jax.experimental import pallas as pl
from jax.experimental.pallas import tpu as pltpu

_VMEM_LIMIT = 32 * 1024 * 1024  # explicit budget; safe on v5e/v6e/v7x


# ----------------------------------------------------------------------------
# Pallas kernels
# ----------------------------------------------------------------------------

def _stage_gate_kernel(x_ref, wc_ref, bc_ref, wx_ref, bg_ref, o_ref,
                       x_sc, y_sc, *, H, W, KHs, KWs, KHg, KWg, slope):
    """Fused: Conv2d(stage) + LeakyReLU + Conv2d(x-path of LSTM gates) + bias.

    One image per grid step (batch-parallel).
    x_ref : (H, W, Cin)        un-padded NHWC image (N axis squeezed)
    wc_ref: (KHs*KWs*Cin, C1)  stage conv weights, bf16
    bc_ref: (1, C1)            stage conv bias, f32
    wx_ref: (KHg*KWg*C1, 4F)   gate weights (x path), bf16, columns (i,f,o,g)
    bg_ref: (1, 4F)            gate bias, f32, columns (i,f,o,g)
    o_ref : (H*W, 4F)          lane-dense x-path gate pre-activations, f32
    x_sc  : (H+KHs-1, W+KWs-1, Cin) f32 zero-halo staging
    y_sc  : (H+KHg-1, W+KWg-1, C1)  f32 zero-halo staging
    """
    Cin = x_ref.shape[-1]
    C1 = wc_ref.shape[-1]
    HW = H * W
    phs, pws = (KHs - 1) // 2, (KWs - 1) // 2
    phg, pwg = (KHg - 1) // 2, (KWg - 1) // 2

    # Zero-halo staging buffers: halos stay zero, interiors fully overwritten
    # each grid step (re-zeroed unconditionally -> megacore-safe).
    x_sc[...] = jnp.zeros_like(x_sc)
    y_sc[...] = jnp.zeros_like(y_sc)

    # --- stage conv + LeakyReLU (im2col matmul, bf16 operands, f32 acc) ---
    x_sc[phs:phs + H, pws:pws + W, :] = x_ref[...]
    xcol = jnp.concatenate(
        [x_sc[kh:kh + H, kw:kw + W, :].reshape(HW, Cin)
         for kh in range(KHs) for kw in range(KWs)],
        axis=-1).astype(jnp.bfloat16)                    # (HW, KHs*KWs*Cin)
    y = jax.lax.dot_general(xcol, wc_ref[...], (((1,), (0,)), ((), ())),
                            preferred_element_type=jnp.float32)
    y = y + bc_ref[...]
    y = jnp.where(y >= 0, y, slope * y)                  # LeakyReLU(0.2)

    # --- x-path gate projection (precompute for the ConvLSTM) ---
    y_sc[phg:phg + H, pwg:pwg + W, :] = y.reshape(H, W, C1)
    ycol = jnp.concatenate(
        [y_sc[kh:kh + H, kw:kw + W, :].reshape(HW, C1)
         for kh in range(KHg) for kw in range(KWg)],
        axis=-1).astype(jnp.bfloat16)                    # (HW, KHg*KWg*C1)
    gx = jax.lax.dot_general(ycol, wx_ref[...], (((1,), (0,)), ((), ())),
                             preferred_element_type=jnp.float32)
    o_ref[...] = (gx + bg_ref[...]).astype(o_ref.dtype)


def _convlstm_seq_kernel(gx_ref, wh_ref, o_ref, h_sc, c_sc,
                         *, H, W, F, KH, KW):
    """ConvLSTM recurrence over the whole sequence for ONE batch element.

    gx_ref: (S, H*W, 4F) f32   precomputed x-path gate pre-activations (+bias)
    wh_ref: (KH*KW*F, 4F) bf16 h-path gate weights, columns (i, f, o, g)
    o_ref : (S, H, W*F)        lane-dense h_t outputs
    h_sc  : (H+KH-1, W+KW-1, F) f32  h_{t-1}, zero halo (VMEM resident)
    c_sc  : (H*W, F) f32             c_{t-1}            (VMEM resident)
    """
    S = gx_ref.shape[0]
    HW = H * W
    ph, pw = (KH - 1) // 2, (KW - 1) // 2

    # Fresh zero state per batch element (grid step); no cross-step carry.
    h_sc[...] = jnp.zeros_like(h_sc)
    c_sc[...] = jnp.zeros_like(c_sc)

    @pl.loop(0, S)
    def _step(t):
        # h-path im2col + single big-K matmul (bf16 operands, f32 acc).
        hcol = jnp.concatenate(
            [h_sc[kh:kh + H, kw:kw + W, :].reshape(HW, F)
             for kh in range(KH) for kw in range(KW)],
            axis=-1).astype(jnp.bfloat16)                # (HW, KH*KW*F)
        gates = gx_ref[t] + jax.lax.dot_general(
            hcol, wh_ref[...], (((1,), (0,)), ((), ())),
            preferred_element_type=jnp.float32)          # (HW, 4F)

        # Columns pre-reordered to (i, f, o, g): sigmoid only on [:, :3F].
        sig = jax.nn.sigmoid(gates[:, :3 * F])
        i_g = sig[:, 0:F]
        f_g = sig[:, F:2 * F]
        o_g = sig[:, 2 * F:3 * F]
        g_g = jnp.tanh(gates[:, 3 * F:])

        c_new = f_g * c_sc[...] + i_g * g_g
        h_new = o_g * jnp.tanh(c_new)

        c_sc[...] = c_new
        h_sc[ph:ph + H, pw:pw + W, :] = h_new.reshape(H, W, F)
        o_ref[t] = h_new.reshape(H, W * F).astype(o_ref.dtype)


# ----------------------------------------------------------------------------
# Wrappers
# ----------------------------------------------------------------------------

def stage_gate_precompute(x, wc, bc, wx, bg, *, H, W, KHs, KWs, KHg, KWg,
                          slope=0.2):
    """x: (N, H, W, Cin) NHWC.  Returns (N, H*W, 4F) f32 gate slabs."""
    N, _, _, Cin = x.shape
    C1 = wc.shape[-1]
    F4 = wx.shape[-1]

    kernel = functools.partial(_stage_gate_kernel, H=H, W=W, KHs=KHs, KWs=KWs,
                               KHg=KHg, KWg=KWg, slope=slope)
    flops = 2 * N * H * W * (KHs * KWs * Cin * C1 + KHg * KWg * C1 * F4)
    bytes_accessed = (4 * N * H * W * Cin + 2 * (wc.size + wx.size)
                      + 4 * (bc.size + bg.size) + 4 * N * H * W * F4)

    return pl.pallas_call(
        kernel,
        out_shape=jax.ShapeDtypeStruct((N, H * W, F4), jnp.float32),
        grid=(N,),
        in_specs=[
            pl.BlockSpec((None, H, W, Cin), lambda n: (n, 0, 0, 0)),
            pl.BlockSpec((KHs * KWs * Cin, C1), lambda n: (0, 0)),
            pl.BlockSpec((1, C1), lambda n: (0, 0)),
            pl.BlockSpec((KHg * KWg * C1, F4), lambda n: (0, 0)),
            pl.BlockSpec((1, F4), lambda n: (0, 0)),
        ],
        out_specs=pl.BlockSpec((None, H * W, F4), lambda n: (n, 0, 0)),
        scratch_shapes=[
            pltpu.VMEM((H + KHs - 1, W + KWs - 1, Cin), jnp.float32),
            pltpu.VMEM((H + KHg - 1, W + KWg - 1, C1), jnp.float32),
        ],
        compiler_params=pltpu.CompilerParams(
            dimension_semantics=("parallel",),
            vmem_limit_bytes=_VMEM_LIMIT),
        cost_estimate=pl.CostEstimate(flops=flops, transcendentals=0,
                                      bytes_accessed=bytes_accessed),
    )(x, wc, bc, wx, bg)


def convlstm_sequence(gx, wh, *, S, B, H, W, F, KH, KW, out_dtype):
    """gx: (S, B, H*W, 4F) f32 gate slabs; wh: (KH*KW*F, 4F) bf16.

    Returns h outputs lane-dense: (S, B, H, W*F).  Zero initial (h, c).
    """
    kernel = functools.partial(_convlstm_seq_kernel, H=H, W=W, F=F, KH=KH, KW=KW)
    flops = 2 * S * B * H * W * KH * KW * F * 4 * F
    transcendentals = 5 * S * B * H * W * F
    bytes_accessed = 4 * gx.size + 2 * wh.size + 4 * S * B * H * W * F

    return pl.pallas_call(
        kernel,
        out_shape=jax.ShapeDtypeStruct((S, B, H, W * F), out_dtype),
        grid=(B,),  # one grid step per batch element; time loop inside kernel
        in_specs=[
            pl.BlockSpec((S, None, H * W, 4 * F), lambda b: (0, b, 0, 0)),
            pl.BlockSpec((KH * KW * F, 4 * F), lambda b: (0, 0)),
        ],
        out_specs=pl.BlockSpec((S, None, H, W * F), lambda b: (0, b, 0, 0)),
        scratch_shapes=[
            pltpu.VMEM((H + KH - 1, W + KW - 1, F), jnp.float32),  # h_{t-1}
            pltpu.VMEM((H * W, F), jnp.float32),                   # c_{t-1}
        ],
        compiler_params=pltpu.CompilerParams(
            dimension_semantics=("parallel",),
            vmem_limit_bytes=_VMEM_LIMIT),
        cost_estimate=pl.CostEstimate(flops=flops,
                                      transcendentals=transcendentals,
                                      bytes_accessed=bytes_accessed),
    )(gx, wh)


def forward_by_stage(x_imgs, S, B, H, W, stage_params, rnn_params):
    """x_imgs: (S*B, H, W, Cin) NHWC  ->  h: (S, B, H, W*F) lane-dense."""
    Cin = x_imgs.shape[-1]
    KHs, KWs, _, C1 = stage_params["w"].shape
    F = rnn_params["num_features"]
    KHg, KWg = rnn_params["w"].shape[0], rnn_params["w"].shape[1]

    # Flatten HWIO conv weights once; cast matmul operands to bf16.
    wc = stage_params["w"].reshape(KHs * KWs * Cin, C1).astype(jnp.bfloat16)
    bc = stage_params["b"].reshape(1, C1).astype(jnp.float32)

    # Gate conv: torch.cat((x, h), 1) -> split input channels into x/h paths.
    w = rnn_params["w"]                                   # (KHg,KWg,C1+F,4F)
    wx = w[:, :, :C1, :].reshape(KHg * KWg * C1, 4 * F)
    wh = w[:, :, C1:, :].reshape(KHg * KWg * F, 4 * F)
    bg = rnn_params["b"].reshape(1, 4 * F)

    # Reorder gate columns (i, f, g, o) -> (i, f, o, g) so the kernel applies
    # sigmoid to a contiguous [:, :3F] slab and tanh only to [:, 3F:].
    def reorder_ifog(m):
        return jnp.concatenate(
            [m[..., :2 * F], m[..., 3 * F:], m[..., 2 * F:3 * F]], axis=-1)

    wx = reorder_ifog(wx).astype(jnp.bfloat16)
    wh = reorder_ifog(wh).astype(jnp.bfloat16)
    bg = reorder_ifog(bg).astype(jnp.float32)

    # Batch-parallel stage conv + x-path gate precompute (LeakyReLU output
    # never hits HBM).
    gx = stage_gate_precompute(x_imgs, wc, bc, wx, bg, H=H, W=W,
                               KHs=KHs, KWs=KWs, KHg=KHg, KWg=KWg, slope=0.2)
    gx = gx.reshape(S, B, H * W, 4 * F)                   # free reshape

    # Sequential ConvLSTM (h-path only) over the precomputed gate slabs.
    return convlstm_sequence(gx, wh, S=S, B=B, H=H, W=W, F=F,
                             KH=KHg, KW=KWg, out_dtype=x_imgs.dtype)


def encoder_forward(inputs, stages, rnns):
    """Encoder.forward. inputs: (B, S, C, H, W) -> (S, B, F, H, W)."""
    B, S, C, H, W = inputs.shape
    x = jnp.transpose(inputs, (1, 0, 3, 4, 2))            # (S, B, H, W, C) NHWC
    x_imgs = x.reshape(S * B, H, W, C)
    h = None
    F = C
    for stage_params, rnn_params in zip(stages, rnns):
        h = forward_by_stage(x_imgs, S, B, H, W, stage_params, rnn_params)
        F = rnn_params["num_features"]
        x_imgs = h.reshape(S * B, H, W, F)                # free reshape
    out = h.reshape(S, B, H, W, F)
    return jnp.transpose(out, (0, 1, 4, 2, 3))            # (S, B, F, H, W)


# ----------------------------------------------------------------------------
# Deterministic parameter construction + demo run
# ----------------------------------------------------------------------------

def make_params(key, c_in):
    ks = jax.random.split(key, 8)

    def conv_w(k, kh, kw, ci, co, scale=0.1):
        return scale * jax.random.normal(k, (kh, kw, ci, co), jnp.float32)

    def bias(k, co, scale=0.1):
        return scale * jax.random.normal(k, (co,), jnp.float32)

    # stage1: Conv2d(c_in -> 16, k3 s1 p1) + LeakyReLU ; rnn1: ConvLSTM(16 -> 32)
    c1, f1 = 16, 32
    stage1 = {"w": conv_w(ks[0], 3, 3, c_in, c1), "b": bias(ks[1], c1)}
    rnn1 = {"w": conv_w(ks[2], 3, 3, c1 + f1, 4 * f1),
            "b": bias(ks[3], 4 * f1), "num_features": f1}

    # stage2: Conv2d(32 -> 32, k3 s1 p1) + LeakyReLU ; rnn2: ConvLSTM(32 -> 32)
    c2, f2 = 32, 32
    stage2 = {"w": conv_w(ks[4], 3, 3, f1, c2), "b": bias(ks[5], c2)}
    rnn2 = {"w": conv_w(ks[6], 3, 3, c2 + f2, 4 * f2),
            "b": bias(ks[7], 4 * f2), "num_features": f2}

    return [stage1, stage2], [rnn1, rnn2]


if __name__ == "__main__":
    key = jax.random.PRNGKey(0)
    k_in, k_par = jax.random.split(key)

    B, S, C, H, W = 2, 4, 4, 16, 16
    x = jax.random.normal(k_in, (B, S, C, H, W), jnp.float32)

    stages, rnns = make_params(k_par, C)

    out = encoder_forward(x, stages, rnns)
    out = jax.block_until_ready(out)

    expected = (S, B, rnns[-1]["num_features"], H, W)
    assert out.shape == expected, (out.shape, expected)
    assert jnp.all(jnp.isfinite(out))
    print("KERNEL_OK")
</pallas_src>

<mosaic_0001>
module attributes {stable_mosaic.version = 11 : i64} {
  func.func @_stage_gate_kernel(%arg0: i32, %arg1: memref<1x16x16x4xf32, #tpu.memory_space<vmem>>, %arg2: memref<36x16xbf16, #tpu.memory_space<vmem>>, %arg3: memref<1x16xf32, #tpu.memory_space<vmem>>, %arg4: memref<144x128xbf16, #tpu.memory_space<vmem>>, %arg5: memref<1x128xf32, #tpu.memory_space<vmem>>, %arg6: memref<1x256x128xf32, #tpu.memory_space<vmem>>, %arg7: memref<18x18x4xf32, #tpu.memory_space<vmem>>, %arg8: memref<18x18x16xf32, #tpu.memory_space<vmem>>) attributes {dimension_semantics = [#tpu.dimension_semantics<parallel>], iteration_bounds = array<i64: 8>, scalar_prefetch = 0 : i64, scratch_operands = 2 : i64, tpu.core_type = #tpu.core_type<tc>, window_params = [{transform_indices = @transform_0, window_bounds = array<i64: 1, 16, 16, 4>}, {pipeline_mode = #tpu.pipeline_mode<synchronous>, transform_indices = @transform_1, window_bounds = array<i64: 36, 16>}, {pipeline_mode = #tpu.pipeline_mode<synchronous>, transform_indices = @transform_2, window_bounds = array<i64: 1, 16>}, {pipeline_mode = #tpu.pipeline_mode<synchronous>, transform_indices = @transform_3, window_bounds = array<i64: 144, 128>}, {pipeline_mode = #tpu.pipeline_mode<synchronous>, transform_indices = @transform_4, window_bounds = array<i64: 1, 128>}, {transform_indices = @transform_5, window_bounds = array<i64: 1, 256, 128>}]} {
    %cst = arith.constant 0.000000e+00 : f32
    %0 = vector.broadcast %cst : f32 to vector<18x18x4xf32>
    %c0 = arith.constant 0 : index
    %c0_0 = arith.constant 0 : index
    %c0_1 = arith.constant 0 : index
    %1 = vector.load %arg7[%c0, %c0_0, %c0_1] : memref<18x18x4xf32, #tpu.memory_space<vmem>>, vector<18x18x4xf32>
    tpu.vector_store %arg7[%c0, %c0_0, %c0_1], %0 {strides = array<i32>} : memref<18x18x4xf32, #tpu.memory_space<vmem>>, vector<18x18x4xf32>,
    %cst_2 = arith.constant 0.000000e+00 : f32
    %2 = vector.broadcast %cst_2 : f32 to vector<18x18x16xf32>
    %c0_3 = arith.constant 0 : index
    %c0_4 = arith.constant 0 : index
    %c0_5 = arith.constant 0 : index
    %3 = vector.load %arg8[%c0_3, %c0_4, %c0_5] : memref<18x18x16xf32, #tpu.memory_space<vmem>>, vector<18x18x16xf32>
    tpu.vector_store %arg8[%c0_3, %c0_4, %c0_5], %2 {strides = array<i32>} : memref<18x18x16xf32, #tpu.memory_space<vmem>>, vector<18x18x16xf32>,
    %c0_6 = arith.constant 0 : index
    %c0_7 = arith.constant 0 : index
    %c0_8 = arith.constant 0 : index
    %c0_9 = arith.constant 0 : index
    %4 = vector.load %arg1[%c0_6, %c0_7, %c0_8, %c0_9] : memref<1x16x16x4xf32, #tpu.memory_space<vmem>>, vector<1x16x16x4xf32>
    %5 = vector.shape_cast %4 : vector<1x16x16x4xf32> to vector<16x16x4xf32>
    %c1 = arith.constant 1 : index
    %c1_10 = arith.constant 1 : index
    %c0_11 = arith.constant 0 : index
    %6 = vector.load %arg7[%c1, %c1_10, %c0_11] : memref<18x18x4xf32, #tpu.memory_space<vmem>>, vector<16x16x4xf32>
    tpu.vector_store %arg7[%c1, %c1_10, %c0_11], %5 {strides = array<i32>} : memref<18x18x4xf32, #tpu.memory_space<vmem>>, vector<16x16x4xf32>,
    %c0_12 = arith.constant 0 : index
    %c0_13 = arith.constant 0 : index
    %c0_14 = arith.constant 0 : index
    %7 = vector.load %arg7[%c0_12, %c0_13, %c0_14] : memref<18x18x4xf32, #tpu.memory_space<vmem>>, vector<16x16x4xf32>
    %8 = vector.shape_cast %7 : vector<16x16x4xf32> to vector<256x4xf32>
    %c0_15 = arith.constant 0 : index
    %c1_16 = arith.constant 1 : index
    %c0_17 = arith.constant 0 : index
    %9 = vector.load %arg7[%c0_15, %c1_16, %c0_17] : memref<18x18x4xf32, #tpu.memory_space<vmem>>, vector<16x16x4xf32>
    %10 = vector.shape_cast %9 : vector<16x16x4xf32> to vector<256x4xf32>
    %c0_18 = arith.constant 0 : index
    %c2 = arith.constant 2 : index
    %c0_19 = arith.constant 0 : index
    %11 = vector.load %arg7[%c0_18, %c2, %c0_19] : memref<18x18x4xf32, #tpu.memory_space<vmem>>, vector<16x16x4xf32>
    %12 = vector.shape_cast %11 : vector<16x16x4xf32> to vector<256x4xf32>
    %c1_20 = arith.constant 1 : index
    %c0_21 = arith.constant 0 : index
    %c0_22 = arith.constant 0 : index
    %13 = vector.load %arg7[%c1_20, %c0_21, %c0_22] : memref<18x18x4xf32, #tpu.memory_space<vmem>>, vector<16x16x4xf32>
    %14 = vector.shape_cast %13 : vector<16x16x4xf32> to vector<256x4xf32>
    %c1_23 = arith.constant 1 : index
    %c1_24 = arith.constant 1 : index
    %c0_25 = arith.constant 0 : index
    %15 = vector.load %arg7[%c1_23, %c1_24, %c0_25] : memref<18x18x4xf32, #tpu.memory_space<vmem>>, vector<16x16x4xf32>
    %16 = vector.shape_cast %15 : vector<16x16x4xf32> to vector<256x4xf32>
    %c1_26 = arith.constant 1 : index
    %c2_27 = arith.constant 2 : index
    %c0_28 = arith.constant 0 : index
    %17 = vector.load %arg7[%c1_26, %c2_27, %c0_28] : memref<18x18x4xf32, #tpu.memory_space<vmem>>, vector<16x16x4xf32>
    %18 = vector.shape_cast %17 : vector<16x16x4xf32> to vector<256x4xf32>
    %c2_29 = arith.constant 2 : index
    %c0_30 = arith.constant 0 : index
    %c0_31 = arith.constant 0 : index
    %19 = vector.load %arg7[%c2_29, %c0_30, %c0_31] : memref<18x18x4xf32, #tpu.memory_space<vmem>>, vector<16x16x4xf32>
    %20 = vector.shape_cast %19 : vector<16x16x4xf32> to vector<256x4xf32>
    %c2_32 = arith.constant 2 : index
    %c1_33 = arith.constant 1 : index
    %c0_34 = arith.constant 0 : index
    %21 = vector.load %arg7[%c2_32, %c1_33, %c0_34] : memref<18x18x4xf32, #tpu.memory_space<vmem>>, vector<16x16x4xf32>
    %22 = vector.shape_cast %21 : vector<16x16x4xf32> to vector<256x4xf32>
    %c2_35 = arith.constant 2 : index
    %c2_36 = arith.constant 2 : index
    %c0_37 = arith.constant 0 : index
    %23 = vector.load %arg7[%c2_35, %c2_36, %c0_37] : memref<18x18x4xf32, #tpu.memory_space<vmem>>, vector<16x16x4xf32>
    %24 = vector.shape_cast %23 : vector<16x16x4xf32> to vector<256x4xf32>
    %25 = tpu.concatenate %8, %10, %12, %14, %16, %18, %20, %22, %24 in 1 : vector<256x4xf32>, vector<256x4xf32>, vector<256x4xf32>, vector<256x4xf32>, vector<256x4xf32>, vector<256x4xf32>, vector<256x4xf32>, vector<256x4xf32>, vector<256x4xf32> -> vector<256x36xf32>
    %26 = arith.truncf %25 : vector<256x36xf32> to vector<256x36xbf16>
    %c0_38 = arith.constant 0 : index
    %c0_39 = arith.constant 0 : index
    %27 = vector.load %arg2[%c0_38, %c0_39] : memref<36x16xbf16, #tpu.memory_space<vmem>>, vector<36x16xbf16>
    %cst_40 = arith.constant dense<0.000000e+00> : vector<256x16xf32>
    %28 = tpu.matmul %26, %27, %cst_40 {dimension_numbers = #tpu.dot_dimension_numbers<[1], [0], [0], [1], [0, 0, 1, 1], [], []>} : vector<256x36xbf16>, vector<36x16xbf16>, vector<256x16xf32> -> vector<256x16xf32>
    %c0_41 = arith.constant 0 : index
    %c0_42 = arith.constant 0 : index
    %29 = vector.load %arg3[%c0_41, %c0_42] : memref<1x16xf32, #tpu.memory_space<vmem>>, vector<1x16xf32>
    %30 = vector.broadcast %29 : vector<1x16xf32> to vector<256x16xf32>
    %31 = arith.addf %28, %30 : vector<256x16xf32>
    %cst_43 = arith.constant 0.000000e+00 : f32
    %32 = vector.broadcast %cst_43 : f32 to vector<256x16xf32>
    %33 = arith.cmpf oge, %31, %32 : vector<256x16xf32>
    %cst_44 = arith.constant 2.000000e-01 : f32
    %34 = vector.broadcast %cst_44 : f32 to vector<256x16xf32>
    %35 = arith.mulf %34, %31 : vector<256x16xf32>
    %36 = arith.select %33, %31, %35 : vector<256x16xi1>, vector<256x16xf32>
    %37 = vector.shape_cast %36 : vector<256x16xf32> to vector<16x16x16xf32>
    %c1_45 = arith.constant 1 : index
    %c1_46 = arith.constant 1 : index
    %c0_47 = arith.constant 0 : index
    %38 = vector.load %arg8[%c1_45, %c1_46, %c0_47] : memref<18x18x16xf32, #tpu.memory_space<vmem>>, vector<16x16x16xf32>
    tpu.vector_store %arg8[%c1_45, %c1_46, %c0_47], %37 {strides = array<i32>} : memref<18x18x16xf32, #tpu.memory_space<vmem>>, vector<16x16x16xf32>,
    %c0_48 = arith.constant 0 : index
    %c0_49 = arith.constant 0 : index
    %c0_50 = arith.constant 0 : index
    %39 = vector.load %arg8[%c0_48, %c0_49, %c0_50] : memref<18x18x16xf32, #tpu.memory_space<vmem>>, vector<16x16x16xf32>
    %40 = vector.shape_cast %39 : vector<16x16x16xf32> to vector<256x16xf32>
    %c0_51 = arith.constant 0 : index
    %c1_52 = arith.constant 1 : index
    %c0_53 = arith.constant 0 : index
    %41 = vector.load %arg8[%c0_51, %c1_52, %c0_53] : memref<18x18x16xf32, #tpu.memory_space<vmem>>, vector<16x16x16xf32>
    %42 = vector.shape_cast %41 : vector<16x16x16xf32> to vector<256x16xf32>
    %c0_54 = arith.constant 0 : index
    %c2_55 = arith.constant 2 : index
    %c0_56 = arith.constant 0 : index
    %43 = vector.load %arg8[%c0_54, %c2_55, %c0_56] : memref<18x18x16xf32, #tpu.memory_space<vmem>>, vector<16x16x16xf32>
    %44 = vector.shape_cast %43 : vector<16x16x16xf32> to vector<256x16xf32>
    %c1_57 = arith.constant 1 : index
    %c0_58 = arith.constant 0 : index
    %c0_59 = arith.constant 0 : index
    %45 = vector.load %arg8[%c1_57, %c0_58, %c0_59] : memref<18x18x16xf32, #tpu.memory_space<vmem>>, vector<16x16x16xf32>
    %46 = vector.shape_cast %45 : vector<16x16x16xf32> to vector<256x16xf32>
    %c1_60 = arith.constant 1 : index
    %c1_61 = arith.constant 1 : index
    %c0_62 = arith.constant 0 : index
    %47 = vector.load %arg8[%c1_60, %c1_61, %c0_62] : memref<18x18x16xf32, #tpu.memory_space<vmem>>, vector<16x16x16xf32>
    %48 = vector.shape_cast %47 : vector<16x16x16xf32> to vector<256x16xf32>
    %c1_63 = arith.constant 1 : index
    %c2_64 = arith.constant 2 : index
    %c0_65 = arith.constant 0 : index
    %49 = vector.load %arg8[%c1_63, %c2_64, %c0_65] : memref<18x18x16xf32, #tpu.memory_space<vmem>>, vector<16x16x16xf32>
    %50 = vector.shape_cast %49 : vector<16x16x16xf32> to vector<256x16xf32>
    %c2_66 = arith.constant 2 : index
    %c0_67 = arith.constant 0 : index
    %c0_68 = arith.constant 0 : index
    %51 = vector.load %arg8[%c2_66, %c0_67, %c0_68] : memref<18x18x16xf32, #tpu.memory_space<vmem>>, vector<16x16x16xf32>
    %52 = vector.shape_cast %51 : vector<16x16x16xf32> to vector<256x16xf32>
    %c2_69 = arith.constant 2 : index
    %c1_70 = arith.constant 1 : index
    %c0_71 = arith.constant 0 : index
    %53 = vector.load %arg8[%c2_69, %c1_70, %c0_71] : memref<18x18x16xf32, #tpu.memory_space<vmem>>, vector<16x16x16xf32>
    %54 = vector.shape_cast %53 : vector<16x16x16xf32> to vector<256x16xf32>
    %c2_72 = arith.constant 2 : index
    %c2_73 = arith.constant 2 : index
    %c0_74 = arith.constant 0 : index
    %55 = vector.load %arg8[%c2_72, %c2_73, %c0_74] : memref<18x18x16xf32, #tpu.memory_space<vmem>>, vector<16x16x16xf32>
    %56 = vector.shape_cast %55 : vector<16x16x16xf32> to vector<256x16xf32>
    %57 = tpu.concatenate %40, %42, %44, %46, %48, %50, %52, %54, %56 in 1 : vector<256x16xf32>, vector<256x16xf32>, vector<256x16xf32>, vector<256x16xf32>, vector<256x16xf32>, vector<256x16xf32>, vector<256x16xf32>, vector<256x16xf32>, vector<256x16xf32> -> vector<256x144xf32>
    %58 = arith.truncf %57 : vector<256x144xf32> to vector<256x144xbf16>
    %c0_75 = arith.constant 0 : index
    %c0_76 = arith.constant 0 : index
    %59 = vector.load %arg4[%c0_75, %c0_76] : memref<144x128xbf16, #tpu.memory_space<vmem>>, vector<144x128xbf16>
    %cst_77 = arith.constant dense<0.000000e+00> : vector<256x128xf32>
    %60 = tpu.matmul %58, %59, %cst_77 {dimension_numbers = #tpu.dot_dimension_numbers<[1], [0], [0], [1], [0, 0, 1, 1], [], []>} : vector<256x144xbf16>, vector<144x128xbf16>, vector<256x128xf32> -> vector<256x128xf32>
    %c0_78 = arith.constant 0 : index
    %c0_79 = arith.constant 0 : index
    %61 = vector.load %arg5[%c0_78, %c0_79] : memref<1x128xf32, #tpu.memory_space<vmem>>, vector<1x128xf32>
    %62 = vector.broadcast %61 : vector<1x128xf32> to vector<256x128xf32>
    %63 = arith.addf %60, %62 : vector<256x128xf32>
    %c0_80 = arith.constant 0 : index
    %c0_81 = arith.constant 0 : index
    %c0_82 = arith.constant 0 : index
    %64 = vector.load %arg6[%c0_80, %c0_81, %c0_82] : memref<1x256x128xf32, #tpu.memory_space<vmem>>, vector<1x256x128xf32>
    %65 = vector.shape_cast %64 : vector<1x256x128xf32> to vector<256x128xf32>
    %66 = vector.shape_cast %63 : vector<256x128xf32> to vector<1x256x128xf32>
    tpu.vector_store %arg6[%c0_80, %c0_81, %c0_82], %66 {strides = array<i32>} : memref<1x256x128xf32, #tpu.memory_space<vmem>>, vector<1x256x128xf32>,
    return
  }
  func.func @transform_0(%arg0: i32) -> (i32, i32, i32, i32) {
    %c0_i32 = arith.constant 0 : i32
    %c0_i32_0 = arith.constant 0 : i32
    %c0_i32_1 = arith.constant 0 : i32
    %c0_i32_2 = arith.constant 0 : i32
    return %arg0, %c0_i32, %c0_i32_0, %c0_i32_1 : i32, i32, i32, i32
  }
  func.func @transform_1(%arg0: i32) -> (i32, i32) {
    %c0_i32 = arith.constant 0 : i32
    %c0_i32_0 = arith.constant 0 : i32
    %c0_i32_1 = arith.constant 0 : i32
    return %c0_i32, %c0_i32_0 : i32, i32
  }
  func.func @transform_2(%arg0: i32) -> (i32, i32) {
    %c0_i32 = arith.constant 0 : i32
    %c0_i32_0 = arith.constant 0 : i32
    %c0_i32_1 = arith.constant 0 : i32
    return %c0_i32, %c0_i32_0 : i32, i32
  }
  func.func @transform_3(%arg0: i32) -> (i32, i32) {
    %c0_i32 = arith.constant 0 : i32
    %c0_i32_0 = arith.constant 0 : i32
    %c0_i32_1 = arith.constant 0 : i32
    return %c0_i32, %c0_i32_0 : i32, i32
  }
  func.func @transform_4(%arg0: i32) -> (i32, i32) {
    %c0_i32 = arith.constant 0 : i32
    %c0_i32_0 = arith.constant 0 : i32
    %c0_i32_1 = arith.constant 0 : i32
    return %c0_i32, %c0_i32_0 : i32, i32
  }
  func.func @transform_5(%arg0: i32) -> (i32, i32, i32) {
    %c0_i32 = arith.constant 0 : i32
    %c0_i32_0 = arith.constant 0 : i32
    %c0_i32_1 = arith.constant 0 : i32
    return %arg0, %c0_i32, %c0_i32_0 : i32, i32, i32
  }
}

</mosaic_0001>

<llo_original>
// kernel: tpu_custom_call.1
$region0: #{tpu_custom_call.1}
  #allocation0 [shape = 'u32[]', space=smem, size = 0x4, offset = 0x4, fixed_abs, tag = 'smem constant byte address 0x4 - core index']
  #allocation1 [shape = 'u32[144,128]{1,0:T(1,128)}', space=vmem, size = 0x12000, scoped, tag = 'internal scratch']
  #allocation2 [shape = 'f32[18,18,4]{2,1,0:T(8,128)}', space=vmem, size = 0x36000, scoped, tag = 'scratch operand']
  #allocation3 [shape = 'f32[18,18,16]{2,1,0:T(8,128)}', space=vmem, size = 0x36000, scoped, tag = 'scratch operand']
  %s0 = inlined_call_operand.vmem [shape: f32[8,16,16,4], index: 0, kind: input, shape index: {}]
  %s1 = inlined_call_operand.vmem [shape: bf16[36,16], index: 1, kind: input, shape index: {}]
  %s2 = inlined_call_operand.vmem [shape: f32[1,16], index: 2, kind: input, shape index: {}]
  %s3 = inlined_call_operand.vmem [shape: bf16[144,128], index: 3, kind: input, shape index: {}]
  %s4 = inlined_call_operand.vmem [shape: f32[1,128], index: 4, kind: input, shape index: {}]
  %s5 = inlined_call_operand.hbm [shape: f32[8,256,128], index: 5, kind: output, shape index: {}]
  %s6 = sld [smem:[#allocation0]]
  $region53: #{tpu_custom_call.1} parent=0
    _
  %s8 = ssub.s32 1, %s6
  %s9 = scalar_select 0, %s8, %s6
  $region1: #{tpu_custom_call.1} parent=0
    #allocation4 [shape = 'u8[262144]{0}', space=vmem, size = 0x40000, scoped, tag = 'output window, operand 0']
    #allocation5 [shape = 's32[2]{0}', space=sflag, size = 0x8, scoped, tag = 'scoped memory for tpu_custom_call.1']
    %10 = vsyncpa [#allocation5], 0
    %s11 = scalar_lea.sflag [#allocation5], 1
    %12 = vsyncpa %s11, 0
    loop: start=0, step=1, limit=10
    $region2: #{tpu_custom_call.1} parent=1 // loop_pre_header
      _
    $region3: #{tpu_custom_call.1} parent=1 // loop_header
      %s14 = sphi 0, %s18
      %p15 = scmp.ge.s32.totalorder %s14, 10
      %s24 = sphi 0, %s26
      %s27 = sphi 0, %s24
      %s28 = sphi 0, %s27
      %s44 = sphi 0, %s28
      %s48 = sphi 0, %s48
      %s50 = sphi 0, %s48
      %s51 = sphi 0, %s50
      %s65 = sphi 0, %s51
      %s69 = sphi 0, %s69
      %s71 = sphi 0, %s69
      %s72 = sphi 0, %s71
      %s86 = sphi 0, %s72
      %s90 = sphi 0, %s90
      %s92 = sphi 0, %s90
      %s93 = sphi 0, %s92
      %s107 = sphi 0, %s93
      %s111 = sphi 0, %s111
      %s113 = sphi 0, %s111
      %s114 = sphi 0, %s113
      %s128 = sphi 0, %s114
      %s134 = sphi 0, %s136
      %s137 = sphi 0, %s134
      %s138 = sphi 0, %s137
      %s154 = sphi 0, %s138
    $region4: #{tpu_custom_call.1} parent=1 // loop_header_branch
      %17 = sbr.rel (%p15) target = $region8
    $region5: #{tpu_custom_call.1} parent=1 // loop_body
      %s19 = ssub.s32 %s14, 1
      %s20 = ssub.s32 %s14, 2
      %s21 = sadd.s32 %s14, 1
      %s22 = ssub.s32 %s14, %s21
      %p23 = scmp.eq.s32.totalorder %s22, 0
      %s25 = sadd.s32 %s24, 1
      %s26 = scalar_select %p23, %s24, %s25
      %p29 = pneg %p23
      %p30 = scmp.eq.s32.totalorder %s14, 7
      %p31 = por %p29, %p30
      %p32 = scmp.ne.s32.totalorder %s24, %s27
      %p33 = scmp.eq.s32.totalorder %s14, 0
      %p34 = por %p32, %p33
      %p35 = scmp.ne.s32.totalorder %s24, %s27
      %p36 = scmp.eq.s32.totalorder %s19, 7
      %p37 = por %p35, %p36
      %p38 = scmp.ne.s32.totalorder %s27, %s28
      %p39 = scmp.eq.s32.totalorder %s19, 0
      %p40 = por %p38, %p39
      %p41 = scmp.ne.s32.totalorder %s27, %s28
      %p42 = scmp.eq.s32.totalorder %s20, 7
      %p43 = por %p41, %p42
      %p45 = scmp.ne.s32.totalorder %s28, %s44
      %p46 = scmp.eq.s32.totalorder %s20, 0
      %p47 = por %p45, %p46
      %s49 = sadd.s32 %s48, 1
      %p52 = scmp.eq.s32.totalorder %s14, 7
      %p53 = scmp.ne.s32.totalorder %s48, %s50
      %p54 = scmp.eq.s32.totalorder %s14, 0
      %p55 = por %p53, %p54
      %p56 = scmp.ne.s32.totalorder %s48, %s50
      %p57 = scmp.eq.s32.totalorder %s19, 7
      %p58 = por %p56, %p57
      %p59 = scmp.ne.s32.totalorder %s50, %s51
      %p60 = scmp.eq.s32.totalorder %s19, 0
      %p61 = por %p59, %p60
      %p62 = scmp.ne.s32.totalorder %s50, %s51
      %p63 = scmp.eq.s32.totalorder %s20, 7
      %p64 = por %p62, %p63
      %p66 = scmp.ne.s32.totalorder %s51, %s65
      %p67 = scmp.eq.s32.totalorder %s20, 0
      %p68 = por %p66, %p67
      %s70 = sadd.s32 %s69, 1
      %p73 = scmp.eq.s32.totalorder %s14, 7
      %p74 = scmp.ne.s32.totalorder %s69, %s71
      %p75 = scmp.eq.s32.totalorder %s14, 0
      %p76 = por %p74, %p75
      %p77 = scmp.ne.s32.totalorder %s69, %s71
      %p78 = scmp.eq.s32.totalorder %s19, 7
      %p79 = por %p77, %p78
      %p80 = scmp.ne.s32.totalorder %s71, %s72
      %p81 = scmp.eq.s32.totalorder %s19, 0
      %p82 = por %p80, %p81
      %p83 = scmp.ne.s32.totalorder %s71, %s72
      %p84 = scmp.eq.s32.totalorder %s20, 7
      %p85 = por %p83, %p84
      %p87 = scmp.ne.s32.totalorder %s72, %s86
      %p88 = scmp.eq.s32.totalorder %s20, 0
      %p89 = por %p87, %p88
      %s91 = sadd.s32 %s90, 1
      %p94 = scmp.eq.s32.totalorder %s14, 7
      %p95 = scmp.ne.s32.totalorder %s90, %s92
      %p96 = scmp.eq.s32.totalorder %s14, 0
      %p97 = por %p95, %p96
      %p98 = scmp.ne.s32.totalorder %s90, %s92
      %p99 = scmp.eq.s32.totalorder %s19, 7
      %p100 = por %p98, %p99
      %p101 = scmp.ne.s32.totalorder %s92, %s93
      %p102 = scmp.eq.s32.totalorder %s19, 0
      %p103 = por %p101, %p102
      %p104 = scmp.ne.s32.totalorder %s92, %s93
      %p105 = scmp.eq.s32.totalorder %s20, 7
      %p106 = por %p104, %p105
      %p108 = scmp.ne.s32.totalorder %s93, %s107
      %p109 = scmp.eq.s32.totalorder %s20, 0
      %p110 = por %p108, %p109
      %s112 = sadd.s32 %s111, 1
      %p115 = scmp.eq.s32.totalorder %s14, 7
      %p116 = scmp.ne.s32.totalorder %s111, %s113
      %p117 = scmp.eq.s32.totalorder %s14, 0
      %p118 = por %p116, %p117
      %p119 = scmp.ne.s32.totalorder %s111, %s113
      %p120 = scmp.eq.s32.totalorder %s19, 7
      %p121 = por %p119, %p120
      %p122 = scmp.ne.s32.totalorder %s113, %s114
      %p123 = scmp.eq.s32.totalorder %s19, 0
      %p124 = por %p122, %p123
      %p125 = scmp.ne.s32.totalorder %s113, %s114
      %p126 = scmp.eq.s32.totalorder %s20, 7
      %p127 = por %p125, %p126
      %p129 = scmp.ne.s32.totalorder %s114, %s128
      %p130 = scmp.eq.s32.totalorder %s20, 0
      %p131 = por %p129, %p130
      %s132 = ssub.s32 %s14, %s21
      %p133 = scmp.eq.s32.totalorder %s132, 0
      %s135 = sadd.s32 %s134, 1
      %s136 = scalar_select %p133, %s134, %s135
      %p139 = pneg %p133
      %p140 = scmp.eq.s32.totalorder %s14, 7
      %p141 = por %p139, %p140
      %p142 = scmp.ne.s32.totalorder %s134, %s137
      %p143 = scmp.eq.s32.totalorder %s14, 0
      %p144 = por %p142, %p143
      %p145 = scmp.ne.s32.totalorder %s134, %s137
      %p146 = scmp.eq.s32.totalorder %s19, 7
      %p147 = por %p145, %p146
      %p148 = scmp.ne.s32.totalorder %s137, %s138
      %p149 = scmp.eq.s32.totalorder %s19, 0
      %p150 = por %p148, %p149
      %p151 = scmp.ne.s32.totalorder %s137, %s138
      %p152 = scmp.eq.s32.totalorder %s20, 7
      %p153 = por %p151, %p152
      %p155 = scmp.ne.s32.totalorder %s138, %s154
      %p156 = scmp.eq.s32.totalorder %s20, 0
      %p157 = por %p155, %p156
      %p158 = scmp.le.s32.totalorder 1, %s14
      %p159 = scmp.lt.s32.totalorder %s14, 9
      %p160 = pnand %p158, %p159
      %p161 = pneg %p160
      // Predicated region
      $region9: #{tpu_custom_call.1} parent=5 // pred_check
        _
      $region10: #{tpu_custom_call.1} parent=5 // pred_check_branch
        %163 = sbr.rel (%p160) target = $region12
      $region11: #{tpu_custom_call.1} parent=5 // pred_region
        %s164 = ssub.s32 %s14, 1
        // Predicated region
        $region13: #{tpu_custom_call.1} parent=11 // pred_check
          %p165 = pneg %p61
        $region14: #{tpu_custom_call.1} parent=11 // pred_check_branch
          %167 = sbr.rel (%p165) target = $region16
        $region15: #{tpu_custom_call.1} parent=11 // pred_region
          _
        $region16: #{tpu_custom_call.1} parent=11 // pred_fallthru
          _
        // Predicated region
        $region17: #{tpu_custom_call.1} parent=11 // pred_check
          %p168 = pneg %p82
        $region18: #{tpu_custom_call.1} parent=11 // pred_check_branch
          %170 = sbr.rel (%p168) target = $region20
        $region19: #{tpu_custom_call.1} parent=11 // pred_region
          _
        $region20: #{tpu_custom_call.1} parent=11 // pred_fallthru
          _
        // Predicated region
        $region21: #{tpu_custom_call.1} parent=11 // pred_check
          %p171 = pneg %p103
        $region22: #{tpu_custom_call.1} parent=11 // pred_check_branch
          %173 = sbr.rel (%p171) target = $region24
        $region23: #{tpu_custom_call.1} parent=11 // pred_region
          _
        $region24: #{tpu_custom_call.1} parent=11 // pred_fallthru
          _
        // Predicated region
        $region25: #{tpu_custom_call.1} parent=11 // pred_check
          %p174 = pneg %p124
        $region26: #{tpu_custom_call.1} parent=11 // pred_check_branch
          %176 = sbr.rel (%p174) target = $region28
        $region27: #{tpu_custom_call.1} parent=11 // pred_region
          _
        $region28: #{tpu_custom_call.1} parent=11 // pred_fallthru
          _
      $region12: #{tpu_custom_call.1} parent=5 // pred_fallthru
        _
      %p177 = scmp.lt.s32.totalorder %s14, 8
      // Predicated region
      $region29: #{tpu_custom_call.1} parent=5 // pred_check
        %p178 = pneg %p177
      $region30: #{tpu_custom_call.1} parent=5 // pred_check_branch
        %180 = sbr.rel (%p178) target = $region32
      $region31: #{tpu_custom_call.1} parent=5 // pred_region
        // Predicated region
        $region33: #{tpu_custom_call.1} parent=31 // pred_check
          %p181 = pneg %p34
        $region34: #{tpu_custom_call.1} parent=31 // pred_check_branch
          %183 = sbr.rel (%p181) target = $region36
        $region35: #{tpu_custom_call.1} parent=31 // pred_region
          %p184 = scmp.lt.s32.totalorder %s14, 7
          %s185 = scalar_select %p184, %s14, 7
          %s186 = smul.addr %s185, 32
          %s187 = smul.addr %s186, 8
          %s188 = scalar_lea.vmem %s0, %s187
        $region36: #{tpu_custom_call.1} parent=31 // pred_fallthru
          _
      $region32: #{tpu_custom_call.1} parent=5 // pred_fallthru
        _
      %p189 = scmp.le.s32.totalorder 1, %s14
      %p190 = scmp.lt.s32.totalorder %s14, 9
      %p191 = pnand %p189, %p190
      %p192 = pneg %p191
      // Predicated region
      $region37: #{tpu_custom_call.1} parent=5 // pred_check
        _
      $region38: #{tpu_custom_call.1} parent=5 // pred_check_branch
        %194 = sbr.rel (%p191) target = $region40
      $region39: #{tpu_custom_call.1} parent=5 // pred_region
        %s195 = ssub.s32 %s14, 1
        %p196 = scmp.lt.s32.totalorder %s19, 7
        %s197 = scalar_select %p196, %s19, 7
        %s198 = smul.addr %s197, 32
        %s199 = smul.addr %s198, 8
        %s200 = scalar_lea.vmem %s0, %s199
        %p201 = pneg %p40
        %p202 = pneg %p37
        %p203 = pneg %p61
        %p204 = pneg %p58
        %p205 = pneg %p82
        %p206 = pneg %p79
        %p207 = pneg %p103
        %p208 = pneg %p100
        %p209 = pneg %p124
        %p210 = pneg %p121
        %p211 = pneg %p150
        %p212 = pneg %p147
        %s213 = sand.u32 %s137, 1
        %s214 = scalar_lea.sflag [#allocation5], %s213
        %s215 = sand.u32 %s137, 1
        %s216 = smul.addr %s215, 256
        %s217 = scalar_lea.vmem [#allocation4], %s216
        %p218 = scmp.lt.s32.totalorder %s19, 7
        %s219 = scalar_select %p218, %s19, 7
        %s220 = smul.addr %s219, 32
        %s221 = smul.addr %s220, 8
        %s222 = scalar_lea.vmem %s0, %s221
        %vm224 = vcmask 31744
        %225 = vst.msk [vmem:[#allocation2] sm:$0xff] %vm224, 0.0
        %226 = vst.msk [vmem:[#allocation2 + $0x8] sm:$0xff] %vm224, 0.0
        %vm227 = vcmask 25600
        %228 = vst.msk [vmem:[#allocation2 + $0x10] sm:$0x3] %vm227, 0.0
        %229 = vst.msk [vmem:[#allocation2 + $0x18] sm:$0xff] %vm224, 0.0
        %230 = vst.msk [vmem:[#allocation2 + $0x20] sm:$0xff] %vm224, 0.0
        %231 = vst.msk [vmem:[#allocation2 + $0x28] sm:$0x3] %vm227, 0.0
        %232 = vst.msk [vmem:[#allocation2 + $0x30] sm:$0xff] %vm224, 0.0
        %233 = vst.msk [vmem:[#allocation2 + $0x38] sm:$0xff] %vm224, 0.0
        %234 = vst.msk [vmem:[#allocation2 + $0x40] sm:$0x3] %vm227, 0.0
        %235 = vst.msk [vmem:[#allocation2 + $0x48] sm:$0xff] %vm224, 0.0
        %236 = vst.msk [vmem:[#allocation2 + $0x50] sm:$0xff] %vm224, 0.0
        %237 = vst.msk [vmem:[#allocation2 + $0x58] sm:$0x3] %vm227, 0.0
        %238 = vst.msk [vmem:[#allocation2 + $0x60] sm:$0xff] %vm224, 0.0
        %239 = vst.msk [vmem:[#allocation2 + $0x68] sm:$0xff] %vm224, 0.0
        %240 = vst.msk [vmem:[#allocation2 + $0x70] sm:$0x3] %vm227, 0.0
        %241 = vst.msk [vmem:[#allocation2 + $0x78] sm:$0xff] %vm224, 0.0
        %242 = vst.msk [vmem:[#allocation2 + $0x80] sm:$0xff] %vm224, 0.0
        %243 = vst.msk [vmem:[#allocation2 + $0x88] sm:$0x3] %vm227, 0.0
        %244 = vst.msk [vmem:[#allocation2 + $0x90] sm:$0xff] %vm224, 0.0
        %245 = vst.msk [vmem:[#allocation2 + $0x98] sm:$0xff] %vm224, 0.0
        %246 = vst.msk [vmem:[#allocation2 + $0xa0] sm:$0x3] %vm227, 0.0
        %247 = vst.msk [vmem:[#allocation2 + $0xa8] sm:$0xff] %vm224, 0.0
        %248 = vst.msk [vmem:[#allocation2 + $0xb0] sm:$0xff] %vm224, 0.0
        %249 = vst.msk [vmem:[#allocation2 + $0xb8] sm:$0x3] %vm227, 0.0
        %250 = vst.msk [vmem:[#allocation2 + $0xc0] sm:$0xff] %vm224, 0.0
        %251 = vst.msk [vmem:[#allocation2 + $0xc8] sm:$0xff] %vm224, 0.0
        %252 = vst.msk [vmem:[#allocation2 + $0xd0] sm:$0x3] %vm227, 0.0
        %253 = vst.msk [vmem:[#allocation2 + $0xd8] sm:$0xff] %vm224, 0.0
        %254 = vst.msk [vmem:[#allocation2 + $0xe0] sm:$0xff] %vm224, 0.0
        %255 = vst.msk [vmem:[#allocation2 + $0xe8] sm:$0x3] %vm227, 0.0
        %256 = vst.msk [vmem:[#allocation2 + $0xf0] sm:$0xff] %vm224, 0.0
        %257 = vst.msk [vmem:[#allocation2 + $0xf8] sm:$0xff] %vm224, 0.0
        %258 = vst.msk [vmem:[#allocation2 + $0x100] sm:$0x3] %vm227, 0.0
        %259 = vst.msk [vmem:[#allocation2 + $0x108] sm:$0xff] %vm224, 0.0
        %260 = vst.msk [vmem:[#allocation2 + $0x110] sm:$0xff] %vm224, 0.0
        %261 = vst.msk [vmem:[#allocation2 + $0x118] sm:$0x3] %vm227, 0.0
        %262 = vst.msk [vmem:[#allocation2 + $0x120] sm:$0xff] %vm224, 0.0
        %263 = vst.msk [vmem:[#allocation2 + $0x128] sm:$0xff] %vm224, 0.0
        %264 = vst.msk [vmem:[#allocation2 + $0x130] sm:$0x3] %vm227, 0.0
        %265 = vst.msk [vmem:[#allocation2 + $0x138] sm:$0xff] %vm224, 0.0
        %266 = vst.msk [vmem:[#allocation2 + $0x140] sm:$0xff] %vm224, 0.0
        %267 = vst.msk [vmem:[#allocation2 + $0x148] sm:$0x3] %vm227, 0.0
        %268 = vst.msk [vmem:[#allocation2 + $0x150] sm:$0xff] %vm224, 0.0
        %269 = vst.msk [vmem:[#allocation2 + $0x158] sm:$0xff] %vm224, 0.0
        %270 = vst.msk [vmem:[#allocation2 + $0x160] sm:$0x3] %vm227, 0.0
        %271 = vst.msk [vmem:[#allocation2 + $0x168] sm:$0xff] %vm224, 0.0
        %272 = vst.msk [vmem:[#allocation2 + $0x170] sm:$0xff] %vm224, 0.0
        %273 = vst.msk [vmem:[#allocation2 + $0x178] sm:$0x3] %vm227, 0.0
        %274 = vst.msk [vmem:[#allocation2 + $0x180] sm:$0xff] %vm224, 0.0
        %275 = vst.msk [vmem:[#allocation2 + $0x188] sm:$0xff] %vm224, 0.0
        %276 = vst.msk [vmem:[#allocation2 + $0x190] sm:$0x3] %vm227, 0.0
        %277 = vst.msk [vmem:[#allocation2 + $0x198] sm:$0xff] %vm224, 0.0
        %278 = vst.msk [vmem:[#allocation2 + $0x1a0] sm:$0xff] %vm224, 0.0
        %279 = vst.msk [vmem:[#allocation2 + $0x1a8] sm:$0x3] %vm227, 0.0
        %vm280 = vcmask 130048
        %281 = vst.msk [vmem:[#allocation3] sm:$0xff] %vm280, 0.0
        %282 = vst.msk [vmem:[#allocation3 + $0x8] sm:$0xff] %vm280, 0.0
        %vm283 = vcmask 123904
        %284 = vst.msk [vmem:[#allocation3 + $0x10] sm:$0x3] %vm283, 0.0
        %285 = vst.msk [vmem:[#allocation3 + $0x18] sm:$0xff] %vm280, 0.0
        %286 = vst.msk [vmem:[#allocation3 + $0x20] sm:$0xff] %vm280, 0.0
        %287 = vst.msk [vmem:[#allocation3 + $0x28] sm:$0x3] %vm283, 0.0
        %288 = vst.msk [vmem:[#allocation3 + $0x30] sm:$0xff] %vm280, 0.0
        %289 = vst.msk [vmem:[#allocation3 + $0x38] sm:$0xff] %vm280, 0.0
        %290 = vst.msk [vmem:[#allocation3 + $0x40] sm:$0x3] %vm283, 0.0
        %291 = vst.msk [vmem:[#allocation3 + $0x48] sm:$0xff] %vm280, 0.0
        %292 = vst.msk [vmem:[#allocation3 + $0x50] sm:$0xff] %vm280, 0.0
        %293 = vst.msk [vmem:[#allocation3 + $0x58] sm:$0x3] %vm283, 0.0
        %294 = vst.msk [vmem:[#allocation3 + $0x60] sm:$0xff] %vm280, 0.0
        %295 = vst.msk [vmem:[#allocation3 + $0x68] sm:$0xff] %vm280, 0.0
        %296 = vst.msk [vmem:[#allocation3 + $0x70] sm:$0x3] %vm283, 0.0
        %297 = vst.msk [vmem:[#allocation3 + $0x78] sm:$0xff] %vm280, 0.0
        %298 = vst.msk [vmem:[#allocation3 + $0x80] sm:$0xff] %vm280, 0.0
        %299 = vst.msk [vmem:[#allocation3 + $0x88] sm:$0x3] %vm283, 0.0
        %300 = vst.msk [vmem:[#allocation3 + $0x90] sm:$0xff] %vm280, 0.0
        %301 = vst.msk [vmem:[#allocation3 + $0x98] sm:$0xff] %vm280, 0.0
        %302 = vst.msk [vmem:[#allocation3 + $0xa0] sm:$0x3] %vm283, 0.0
        %303 = vst.msk [vmem:[#allocation3 + $0xa8] sm:$0xff] %vm280, 0.0
        %304 = vst.msk [vmem:[#allocation3 + $0xb0] sm:$0xff] %vm280, 0.0
        %305 = vst.msk [vmem:[#allocation3 + $0xb8] sm:$0x3] %vm283, 0.0
        %306 = vst.msk [vmem:[#allocation3 + $0xc0] sm:$0xff] %vm280, 0.0
        %307 = vst.msk [vmem:[#allocation3 + $0xc8] sm:$0xff] %vm280, 0.0
        %308 = vst.msk [vmem:[#allocation3 + $0xd0] sm:$0x3] %vm283, 0.0
        %309 = vst.msk [vmem:[#allocation3 + $0xd8] sm:$0xff] %vm280, 0.0
        %310 = vst.msk [vmem:[#allocation3 + $0xe0] sm:$0xff] %vm280, 0.0
        %311 = vst.msk [vmem:[#allocation3 + $0xe8] sm:$0x3] %vm283, 0.0
        %312 = vst.msk [vmem:[#allocation3 + $0xf0] sm:$0xff] %vm280, 0.0
        %313 = vst.msk [vmem:[#allocation3 + $0xf8] sm:$0xff] %vm280, 0.0
        %314 = vst.msk [vmem:[#allocation3 + $0x100] sm:$0x3] %vm283, 0.0
        %315 = vst.msk [vmem:[#allocation3 + $0x108] sm:$0xff] %vm280, 0.0
        %316 = vst.msk [vmem:[#allocation3 + $0x110] sm:$0xff] %vm280, 0.0
        %317 = vst.msk [vmem:[#allocation3 + $0x118] sm:$0x3] %vm283, 0.0
        %318 = vst.msk [vmem:[#allocation3 + $0x120] sm:$0xff] %vm280, 0.0
        %319 = vst.msk [vmem:[#allocation3 + $0x128] sm:$0xff] %vm280, 0.0
        %320 = vst.msk [vmem:[#allocation3 + $0x130] sm:$0x3] %vm283, 0.0
        %321 = vst.msk [vmem:[#allocation3 + $0x138] sm:$0xff] %vm280, 0.0
        %322 = vst.msk [vmem:[#allocation3 + $0x140] sm:$0xff] %vm280, 0.0
        %323 = vst.msk [vmem:[#allocation3 + $0x148] sm:$0x3] %vm283, 0.0
        %324 = vst.msk [vmem:[#allocation3 + $0x150] sm:$0xff] %vm280, 0.0
        %325 = vst.msk [vmem:[#allocation3 + $0x158] sm:$0xff] %vm280, 0.0
        %326 = vst.msk [vmem:[#allocation3 + $0x160] sm:$0x3] %vm283, 0.0
        %327 = vst.msk [vmem:[#allocation3 + $0x168] sm:$0xff] %vm280, 0.0
        %328 = vst.msk [vmem:[#allocation3 + $0x170] sm:$0xff] %vm280, 0.0
        %329 = vst.msk [vmem:[#allocation3 + $0x178] sm:$0x3] %vm283, 0.0
        %330 = vst.msk [vmem:[#allocation3 + $0x180] sm:$0xff] %vm280, 0.0
        %331 = vst.msk [vmem:[#allocation3 + $0x188] sm:$0xff] %vm280, 0.0
        %332 = vst.msk [vmem:[#allocation3 + $0x190] sm:$0x3] %vm283, 0.0
        %333 = vst.msk [vmem:[#allocation3 + $0x198] sm:$0xff] %vm280, 0.0
        %334 = vst.msk [vmem:[#allocation3 + $0x1a0] sm:$0xff] %vm280, 0.0
        %335 = vst.msk [vmem:[#allocation3 + $0x1a8] sm:$0x3] %vm283, 0.0
        %v336 = vld [vmem:[%s222] sm:$0xff]
        %v337 = vld [vmem:[%s222 + $0x8] sm:$0xff]
        %v338 = vld [vmem:[%s222 + $0x10] sm:$0xff]
        %v339 = vld [vmem:[%s222 + $0x18] sm:$0xff]
        %v340 = vld [vmem:[%s222 + $0x20] sm:$0xff]
        %v341 = vld [vmem:[%s222 + $0x28] sm:$0xff]
        %v342 = vld [vmem:[%s222 + $0x30] sm:$0xff]
        %v343 = vld [vmem:[%s222 + $0x38] sm:$0xff]
        %v344 = vld [vmem:[%s222 + $0x40] sm:$0xff]
        %v345 = vld [vmem:[%s222 + $0x48] sm:$0xff]
        %v346 = vld [vmem:[%s222 + $0x50] sm:$0xff]
        %v347 = vld [vmem:[%s222 + $0x58] sm:$0xff]
        %v348 = vld [vmem:[%s222 + $0x60] sm:$0xff]
        %v349 = vld [vmem:[%s222 + $0x68] sm:$0xff]
        %v350 = vld [vmem:[%s222 + $0x70] sm:$0xff]
        %v351 = vld [vmem:[%s222 + $0x78] sm:$0xff]
        %v352 = vld [vmem:[%s222 + $0x80] sm:$0xff]
        %v353 = vld [vmem:[%s222 + $0x88] sm:$0xff]
        %v354 = vld [vmem:[%s222 + $0x90] sm:$0xff]
        %v355 = vld [vmem:[%s222 + $0x98] sm:$0xff]
        %v356 = vld [vmem:[%s222 + $0xa0] sm:$0xff]
        %v357 = vld [vmem:[%s222 + $0xa8] sm:$0xff]
        %v358 = vld [vmem:[%s222 + $0xb0] sm:$0xff]
        %v359 = vld [vmem:[%s222 + $0xb8] sm:$0xff]
        %v360 = vld [vmem:[%s222 + $0xc0] sm:$0xff]
        %v361 = vld [vmem:[%s222 + $0xc8] sm:$0xff]
        %v362 = vld [vmem:[%s222 + $0xd0] sm:$0xff]
        %v363 = vld [vmem:[%s222 + $0xd8] sm:$0xff]
        %v364 = vld [vmem:[%s222 + $0xe0] sm:$0xff]
        %v365 = vld [vmem:[%s222 + $0xe8] sm:$0xff]
        %v366 = vld [vmem:[%s222 + $0xf0] sm:$0xff]
        %v367 = vld [vmem:[%s222 + $0xf8] sm:$0xff]
        %s368 = scalar_lea.vmem [#allocation2], 24
        %369 = vst.msk [vmem:[%s368 + $0x1] sm:$0xff] %vm224, %v336
        %370 = vst.msk [vmem:[%s368 + $0x9] sm:$0xff] %vm224, %v337
        %371 = vst.msk [vmem:[%s368 + $0x19] sm:$0xff] %vm224, %v338
        %372 = vst.msk [vmem:[%s368 + $0x21] sm:$0xff] %vm224, %v339
        %373 = vst.msk [vmem:[%s368 + $0x31] sm:$0xff] %vm224, %v340
        %374 = vst.msk [vmem:[%s368 + $0x39] sm:$0xff] %vm224, %v341
        %375 = vst.msk [vmem:[%s368 + $0x49] sm:$0xff] %vm224, %v342
        %376 = vst.msk [vmem:[%s368 + $0x51] sm:$0xff] %vm224, %v343
        %377 = vst.msk [vmem:[%s368 + $0x61] sm:$0xff] %vm224, %v344
        %378 = vst.msk [vmem:[%s368 + $0x69] sm:$0xff] %vm224, %v345
        %379 = vst.msk [vmem:[%s368 + $0x79] sm:$0xff] %vm224, %v346
        %380 = vst.msk [vmem:[%s368 + $0x81] sm:$0xff] %vm224, %v347
        %381 = vst.msk [vmem:[%s368 + $0x91] sm:$0xff] %vm224, %v348
        %382 = vst.msk [vmem:[%s368 + $0x99] sm:$0xff] %vm224, %v349
        %383 = vst.msk [vmem:[%s368 + $0xa9] sm:$0xff] %vm224, %v350
        %384 = vst.msk [vmem:[%s368 + $0xb1] sm:$0xff] %vm224, %v351
        %385 = vst.msk [vmem:[%s368 + $0xc1] sm:$0xff] %vm224, %v352
        %386 = vst.msk [vmem:[%s368 + $0xc9] sm:$0xff] %vm224, %v353
        %387 = vst.msk [vmem:[%s368 + $0xd9] sm:$0xff] %vm224, %v354
        %388 = vst.msk [vmem:[%s368 + $0xe1] sm:$0xff] %vm224, %v355
        %389 = vst.msk [vmem:[%s368 + $0xf1] sm:$0xff] %vm224, %v356
        %390 = vst.msk [vmem:[%s368 + $0xf9] sm:$0xff] %vm224, %v357
        %391 = vst.msk [vmem:[%s368 + $0x109] sm:$0xff] %vm224, %v358
        %392 = vst.msk [vmem:[%s368 + $0x111] sm:$0xff] %vm224, %v359
        %393 = vst.msk [vmem:[%s368 + $0x121] sm:$0xff] %vm224, %v360
        %394 = vst.msk [vmem:[%s368 + $0x129] sm:$0xff] %vm224, %v361
        %395 = vst.msk [vmem:[%s368 + $0x139] sm:$0xff] %vm224, %v362
        %396 = vst.msk [vmem:[%s368 + $0x141] sm:$0xff] %vm224, %v363
        %397 = vst.msk [vmem:[%s368 + $0x151] sm:$0xff] %vm224, %v364
        %398 = vst.msk [vmem:[%s368 + $0x159] sm:$0xff] %vm224, %v365
        %399 = vst.msk [vmem:[%s368 + $0x169] sm:$0xff] %vm224, %v366
        %400 = vst.msk [vmem:[%s368 + $0x171] sm:$0xff] %vm224, %v367
        %v401 = vld [vmem:[#allocation2] sm:$0xff]
        %v402 = vld [vmem:[#allocation2 + $0x8] sm:$0xff]
        %v403 = vld [vmem:[#allocation2 + $0x18] sm:$0xff]
        %v404 = vld [vmem:[#allocation2 + $0x20] sm:$0xff]
        %v405 = vld [vmem:[#allocation2 + $0x30] sm:$0xff]
        %v406 = vld [vmem:[#allocation2 + $0x38] sm:$0xff]
        %v407 = vld [vmem:[#allocation2 + $0x48] sm:$0xff]
        %v408 = vld [vmem:[#allocation2 + $0x50] sm:$0xff]
        %v409 = vld [vmem:[#allocation2 + $0x60] sm:$0xff]
        %v410 = vld [vmem:[#allocation2 + $0x68] sm:$0xff]
        %v411 = vld [vmem:[#allocation2 + $0x78] sm:$0xff]
        %v412 = vld [vmem:[#allocation2 + $0x80] sm:$0xff]
        %v413 = vld [vmem:[#allocation2 + $0x90] sm:$0xff]
        %v414 = vld [vmem:[#allocation2 + $0x98] sm:$0xff]
        %v415 = vld [vmem:[#allocation2 + $0xa8] sm:$0xff]
        %v416 = vld [vmem:[#allocation2 + $0xb0] sm:$0xff]
        %v417 = vld [vmem:[#allocation2 + $0xc0] sm:$0xff]
        %v418 = vld [vmem:[#allocation2 + $0xc8] sm:$0xff]
        %v419 = vld [vmem:[#allocation2 + $0xd8] sm:$0xff]
        %v420 = vld [vmem:[#allocation2 + $0xe0] sm:$0xff]
        %v421 = vld [vmem:[#allocation2 + $0xf0] sm:$0xff]
        %v422 = vld [vmem:[#allocation2 + $0xf8] sm:$0xff]
        %v423 = vld [vmem:[#allocation2 + $0x108] sm:$0xff]
        %v424 = vld [vmem:[#allocation2 + $0x110] sm:$0xff]
        %v425 = vld [vmem:[#allocation2 + $0x120] sm:$0xff]
        %v426 = vld [vmem:[#allocation2 + $0x128] sm:$0xff]
        %v427 = vld [vmem:[#allocation2 + $0x138] sm:$0xff]
        %v428 = vld [vmem:[#allocation2 + $0x140] sm:$0xff]
        %v429 = vld [vmem:[#allocation2 + $0x150] sm:$0xff]
        %v430 = vld [vmem:[#allocation2 + $0x158] sm:$0xff]
        %v431 = vld [vmem:[#allocation2 + $0x168] sm:$0xff]
        %v432 = vld [vmem:[#allocation2 + $0x170] sm:$0xff]
        %v433 = vld [vmem:[#allocation2 + $0x1] sm:$0xff]
        %v434 = vld [vmem:[#allocation2 + $0x9] sm:$0xff]
        %v435 = vld [vmem:[#allocation2 + $0x19] sm:$0xff]
        %v436 = vld [vmem:[#allocation2 + $0x21] sm:$0xff]
        %v437 = vld [vmem:[#allocation2 + $0x31] sm:$0xff]
        %v438 = vld [vmem:[#allocation2 + $0x39] sm:$0xff]
        %v439 = vld [vmem:[#allocation2 + $0x49] sm:$0xff]
        %v440 = vld [vmem:[#allocation2 + $0x51] sm:$0xff]
        %v441 = vld [vmem:[#allocation2 + $0x61] sm:$0xff]
        %v442 = vld [vmem:[#allocation2 + $0x69] sm:$0xff]
        %v443 = vld [vmem:[#allocation2 + $0x79] sm:$0xff]
        %v444 = vld [vmem:[#allocation2 + $0x81] sm:$0xff]
        %v445 = vld [vmem:[#allocation2 + $0x91] sm:$0xff]
        %v446 = vld [vmem:[#allocation2 + $0x99] sm:$0xff]
        %v447 = vld [vmem:[#allocation2 + $0xa9] sm:$0xff]
        %v448 = vld [vmem:[#allocation2 + $0xb1] sm:$0xff]
        %v449 = vld [vmem:[#allocation2 + $0xc1] sm:$0xff]
        %v450 = vld [vmem:[#allocation2 + $0xc9] sm:$0xff]
        %v451 = vld [vmem:[#allocation2 + $0xd9] sm:$0xff]
        %v452 = vld [vmem:[#allocation2 + $0xe1] sm:$0xff]
        %v453 = vld [vmem:[#allocation2 + $0xf1] sm:$0xff]
        %v454 = vld [vmem:[#allocation2 + $0xf9] sm:$0xff]
        %v455 = vld [vmem:[#allocation2 + $0x109] sm:$0xff]
        %v456 = vld [vmem:[#allocation2 + $0x111] sm:$0xff]
        %v457 = vld [vmem:[#allocation2 + $0x121] sm:$0xff]
        %v458 = vld [vmem:[#allocation2 + $0x129] sm:$0xff]
        %v459 = vld [vmem:[#allocation2 + $0x139] sm:$0xff]
        %v460 = vld [vmem:[#allocation2 + $0x141] sm:$0xff]
        %v461 = vld [vmem:[#allocation2 + $0x151] sm:$0xff]
        %v462 = vld [vmem:[#allocation2 + $0x159] sm:$0xff]
        %v463 = vld [vmem:[#allocation2 + $0x169] sm:$0xff]
        %v464 = vld [vmem:[#allocation2 + $0x171] sm:$0xff]
        %v465 = vld [vmem:[#allocation2 + $0x2] sm:$0xff]
        %v466 = vld [vmem:[#allocation2 + $0xa] sm:$0xff]
        %v467 = vld [vmem:[#allocation2 + $0x1a] sm:$0xff]
        %v468 = vld [vmem:[#allocation2 + $0x22] sm:$0xff]
        %v469 = vld [vmem:[#allocation2 + $0x32] sm:$0xff]
        %v470 = vld [vmem:[#allocation2 + $0x3a] sm:$0xff]
        %v471 = vld [vmem:[#allocation2 + $0x4a] sm:$0xff]
        %v472 = vld [vmem:[#allocation2 + $0x52] sm:$0xff]
        %v473 = vld [vmem:[#allocation2 + $0x62] sm:$0xff]
        %v474 = vld [vmem:[#allocation2 + $0x6a] sm:$0xff]
        %v475 = vld [vmem:[#allocation2 + $0x7a] sm:$0xff]
        %v476 = vld [vmem:[#allocation2 + $0x82] sm:$0xff]
        %v477 = vld [vmem:[#allocation2 + $0x92] sm:$0xff]
        %v478 = vld [vmem:[#allocation2 + $0x9a] sm:$0xff]
        %v479 = vld [vmem:[#allocation2 + $0xaa] sm:$0xff]
        %v480 = vld [vmem:[#allocation2 + $0xb2] sm:$0xff]
        %v481 = vld [vmem:[#allocation2 + $0xc2] sm:$0xff]
        %v482 = vld [vmem:[#allocation2 + $0xca] sm:$0xff]
        %v483 = vld [vmem:[#allocation2 + $0xda] sm:$0xff]
        %v484 = vld [vmem:[#allocation2 + $0xe2] sm:$0xff]
        %v485 = vld [vmem:[#allocation2 + $0xf2] sm:$0xff]
        %v486 = vld [vmem:[#allocation2 + $0xfa] sm:$0xff]
        %v487 = vld [vmem:[#allocation2 + $0x10a] sm:$0xff]
        %v488 = vld [vmem:[#allocation2 + $0x112] sm:$0xff]
        %v489 = vld [vmem:[#allocation2 + $0x122] sm:$0xff]
        %v490 = vld [vmem:[#allocation2 + $0x12a] sm:$0xff]
        %v491 = vld [vmem:[#allocation2 + $0x13a] sm:$0xff]
        %v492 = vld [vmem:[#allocation2 + $0x142] sm:$0xff]
        %v493 = vld [vmem:[#allocation2 + $0x152] sm:$0xff]
        %v494 = vld [vmem:[#allocation2 + $0x15a] sm:$0xff]
        %v495 = vld [vmem:[#allocation2 + $0x16a] sm:$0xff]
        %v496 = vld [vmem:[#allocation2 + $0x172] sm:$0xff]
        %v497 = vld [vmem:[%s368] sm:$0xff]
        %v498 = vld [vmem:[%s368 + $0x8] sm:$0xff]
        %v499 = vld [vmem:[%s368 + $0x18] sm:$0xff]
        %v500 = vld [vmem:[%s368 + $0x20] sm:$0xff]
        %v501 = vld [vmem:[%s368 + $0x30] sm:$0xff]
        %v502 = vld [vmem:[%s368 + $0x38] sm:$0xff]
        %v503 = vld [vmem:[%s368 + $0x48] sm:$0xff]
        %v504 = vld [vmem:[%s368 + $0x50] sm:$0xff]
        %v505 = vld [vmem:[%s368 + $0x60] sm:$0xff]
        %v506 = vld [vmem:[%s368 + $0x68] sm:$0xff]
        %v507 = vld [vmem:[%s368 + $0x78] sm:$0xff]
        %v508 = vld [vmem:[%s368 + $0x80] sm:$0xff]
        %v509 = vld [vmem:[%s368 + $0x90] sm:$0xff]
        %v510 = vld [vmem:[%s368 + $0x98] sm:$0xff]
        %v511 = vld [vmem:[%s368 + $0xa8] sm:$0xff]
        %v512 = vld [vmem:[%s368 + $0xb0] sm:$0xff]
        %v513 = vld [vmem:[%s368 + $0xc0] sm:$0xff]
        %v514 = vld [vmem:[%s368 + $0xc8] sm:$0xff]
        %v515 = vld [vmem:[%s368 + $0xd8] sm:$0xff]
        %v516 = vld [vmem:[%s368 + $0xe0] sm:$0xff]
        %v517 = vld [vmem:[%s368 + $0xf0] sm:$0xff]
        %v518 = vld [vmem:[%s368 + $0xf8] sm:$0xff]
        %v519 = vld [vmem:[%s368 + $0x108] sm:$0xff]
        %v520 = vld [vmem:[%s368 + $0x110] sm:$0xff]
        %v521 = vld [vmem:[%s368 + $0x120] sm:$0xff]
        %v522 = vld [vmem:[%s368 + $0x128] sm:$0xff]
        %v523 = vld [vmem:[%s368 + $0x138] sm:$0xff]
        %v524 = vld [vmem:[%s368 + $0x140] sm:$0xff]
        %v525 = vld [vmem:[%s368 + $0x150] sm:$0xff]
        %v526 = vld [vmem:[%s368 + $0x158] sm:$0xff]
        %v527 = vld [vmem:[%s368 + $0x168] sm:$0xff]
        %v528 = vld [vmem:[%s368 + $0x170] sm:$0xff]
        %v529 = vld [vmem:[%s368 + $0x1] sm:$0xff]
        %v530 = vld [vmem:[%s368 + $0x9] sm:$0xff]
        %v531 = vld [vmem:[%s368 + $0x19] sm:$0xff]
        %v532 = vld [vmem:[%s368 + $0x21] sm:$0xff]
        %v533 = vld [vmem:[%s368 + $0x31] sm:$0xff]
        %v534 = vld [vmem:[%s368 + $0x39] sm:$0xff]
        %v535 = vld [vmem:[%s368 + $0x49] sm:$0xff]
        %v536 = vld [vmem:[%s368 + $0x51] sm:$0xff]
        %v537 = vld [vmem:[%s368 + $0x61] sm:$0xff]
        %v538 = vld [vmem:[%s368 + $0x69] sm:$0xff]
        %v539 = vld [vmem:[%s368 + $0x79] sm:$0xff]
        %v540 = vld [vmem:[%s368 + $0x81] sm:$0xff]
        %v541 = vld [vmem:[%s368 + $0x91] sm:$0xff]
        %v542 = vld [vmem:[%s368 + $0x99] sm:$0xff]
        %v543 = vld [vmem:[%s368 + $0xa9] sm:$0xff]
        %v544 = vld [vmem:[%s368 + $0xb1] sm:$0xff]
        %v545 = vld [vmem:[%s368 + $0xc1] sm:$0xff]
        %v546 = vld [vmem:[%s368 + $0xc9] sm:$0xff]
        %v547 = vld [vmem:[%s368 + $0xd9] sm:$0xff]
        %v548 = vld [vmem:[%s368 + $0xe1] sm:$0xff]
        %v549 = vld [vmem:[%s368 + $0xf1] sm:$0xff]
        %v550 = vld [vmem:[%s368 + $0xf9] sm:$0xff]
        %v551 = vld [vmem:[%s368 + $0x109] sm:$0xff]
        %v552 = vld [vmem:[%s368 + $0x111] sm:$0xff]
        %v553 = vld [vmem:[%s368 + $0x121] sm:$0xff]
        %v554 = vld [vmem:[%s368 + $0x129] sm:$0xff]
        %v555 = vld [vmem:[%s368 + $0x139] sm:$0xff]
        %v556 = vld [vmem:[%s368 + $0x141] sm:$0xff]
        %v557 = vld [vmem:[%s368 + $0x151] sm:$0xff]
        %v558 = vld [vmem:[%s368 + $0x159] sm:$0xff]
        %v559 = vld [vmem:[%s368 + $0x169] sm:$0xff]
        %v560 = vld [vmem:[%s368 + $0x171] sm:$0xff]
        %v561 = vld [vmem:[%s368 + $0x2] sm:$0xff]
        %v562 = vld [vmem:[%s368 + $0xa] sm:$0xff]
        %v563 = vld [vmem:[%s368 + $0x1a] sm:$0xff]
        %v564 = vld [vmem:[%s368 + $0x22] sm:$0xff]
        %v565 = vld [vmem:[%s368 + $0x32] sm:$0xff]
        %v566 = vld [vmem:[%s368 + $0x3a] sm:$0xff]
        %v567 = vld [vmem:[%s368 + $0x4a] sm:$0xff]
        %v568 = vld [vmem:[%s368 + $0x52] sm:$0xff]
        %v569 = vld [vmem:[%s368 + $0x62] sm:$0xff]
        %v570 = vld [vmem:[%s368 + $0x6a] sm:$0xff]
        %v571 = vld [vmem:[%s368 + $0x7a] sm:$0xff]
        %v572 = vld [vmem:[%s368 + $0x82] sm:$0xff]
        %v573 = vld [vmem:[%s368 + $0x92] sm:$0xff]
        %v574 = vld [vmem:[%s368 + $0x9a] sm:$0xff]
        %v575 = vld [vmem:[%s368 + $0xaa] sm:$0xff]
        %v576 = vld [vmem:[%s368 + $0xb2] sm:$0xff]
        %v577 = vld [vmem:[%s368 + $0xc2] sm:$0xff]
        %v578 = vld [vmem:[%s368 + $0xca] sm:$0xff]
        %v579 = vld [vmem:[%s368 + $0xda] sm:$0xff]
        %v580 = vld [vmem:[%s368 + $0xe2] sm:$0xff]
        %v581 = vld [vmem:[%s368 + $0xf2] sm:$0xff]
        %v582 = vld [vmem:[%s368 + $0xfa] sm:$0xff]
        %v583 = vld [vmem:[%s368 + $0x10a] sm:$0xff]
        %v584 = vld [vmem:[%s368 + $0x112] sm:$0xff]
        %v585 = vld [vmem:[%s368 + $0x122] sm:$0xff]
        %v586 = vld [vmem:[%s368 + $0x12a] sm:$0xff]
        %v587 = vld [vmem:[%s368 + $0x13a] sm:$0xff]
        %v588 = vld [vmem:[%s368 + $0x142] sm:$0xff]
        %v589 = vld [vmem:[%s368 + $0x152] sm:$0xff]
        %v590 = vld [vmem:[%s368 + $0x15a] sm:$0xff]
        %v591 = vld [vmem:[%s368 + $0x16a] sm:$0xff]
        %v592 = vld [vmem:[%s368 + $0x172] sm:$0xff]
        %s593 = scalar_lea.vmem [#allocation2], 48
        %v594 = vld [vmem:[%s593] sm:$0xff]
        %v595 = vld [vmem:[%s593 + $0x8] sm:$0xff]
        %v596 = vld [vmem:[%s593 + $0x18] sm:$0xff]
        %v597 = vld [vmem:[%s593 + $0x20] sm:$0xff]
        %v598 = vld [vmem:[%s593 + $0x30] sm:$0xff]
        %v599 = vld [vmem:[%s593 + $0x38] sm:$0xff]
        %v600 = vld [vmem:[%s593 + $0x48] sm:$0xff]
        %v601 = vld [vmem:[%s593 + $0x50] sm:$0xff]
        %v602 = vld [vmem:[%s593 + $0x60] sm:$0xff]
        %v603 = vld [vmem:[%s593 + $0x68] sm:$0xff]
        %v604 = vld [vmem:[%s593 + $0x78] sm:$0xff]
        %v605 = vld [vmem:[%s593 + $0x80] sm:$0xff]
        %v606 = vld [vmem:[%s593 + $0x90] sm:$0xff]
        %v607 = vld [vmem:[%s593 + $0x98] sm:$0xff]
        %v608 = vld [vmem:[%s593 + $0xa8] sm:$0xff]
        %v609 = vld [vmem:[%s593 + $0xb0] sm:$0xff]
        %v610 = vld [vmem:[%s593 + $0xc0] sm:$0xff]
        %v611 = vld [vmem:[%s593 + $0xc8] sm:$0xff]
        %v612 = vld [vmem:[%s593 + $0xd8] sm:$0xff]
        %v613 = vld [vmem:[%s593 + $0xe0] sm:$0xff]
        %v614 = vld [vmem:[%s593 + $0xf0] sm:$0xff]
        %v615 = vld [vmem:[%s593 + $0xf8] sm:$0xff]
        %v616 = vld [vmem:[%s593 + $0x108] sm:$0xff]
        %v617 = vld [vmem:[%s593 + $0x110] sm:$0xff]
        %v618 = vld [vmem:[%s593 + $0x120] sm:$0xff]
        %v619 = vld [vmem:[%s593 + $0x128] sm:$0xff]
        %v620 = vld [vmem:[%s593 + $0x138] sm:$0xff]
        %v621 = vld [vmem:[%s593 + $0x140] sm:$0xff]
        %v622 = vld [vmem:[%s593 + $0x150] sm:$0xff]
        %v623 = vld [vmem:[%s593 + $0x158] sm:$0xff]
        %v624 = vld [vmem:[%s593 + $0x168] sm:$0xff]
        %v625 = vld [vmem:[%s593 + $0x170] sm:$0xff]
        %v626 = vld [vmem:[%s593 + $0x1] sm:$0xff]
        %v627 = vld [vmem:[%s593 + $0x9] sm:$0xff]
        %v628 = vld [vmem:[%s593 + $0x19] sm:$0xff]
        %v629 = vld [vmem:[%s593 + $0x21] sm:$0xff]
        %v630 = vld [vmem:[%s593 + $0x31] sm:$0xff]
        %v631 = vld [vmem:[%s593 + $0x39] sm:$0xff]
        %v632 = vld [vmem:[%s593 + $0x49] sm:$0xff]
        %v633 = vld [vmem:[%s593 + $0x51] sm:$0xff]
        %v634 = vld [vmem:[%s593 + $0x61] sm:$0xff]
        %v635 = vld [vmem:[%s593 + $0x69] sm:$0xff]
        %v636 = vld [vmem:[%s593 + $0x79] sm:$0xff]
        %v637 = vld [vmem:[%s593 + $0x81] sm:$0xff]
        %v638 = vld [vmem:[%s593 + $0x91] sm:$0xff]
        %v639 = vld [vmem:[%s593 + $0x99] sm:$0xff]
        %v640 = vld [vmem:[%s593 + $0xa9] sm:$0xff]
        %v641 = vld [vmem:[%s593 + $0xb1] sm:$0xff]
        %v642 = vld [vmem:[%s593 + $0xc1] sm:$0xff]
        %v643 = vld [vmem:[%s593 + $0xc9] sm:$0xff]
        %v644 = vld [vmem:[%s593 + $0xd9] sm:$0xff]
        %v645 = vld [vmem:[%s593 + $0xe1] sm:$0xff]
        %v646 = vld [vmem:[%s593 + $0xf1] sm:$0xff]
        %v647 = vld [vmem:[%s593 + $0xf9] sm:$0xff]
        %v648 = vld [vmem:[%s593 + $0x109] sm:$0xff]
        %v649 = vld [vmem:[%s593 + $0x111] sm:$0xff]
        %v650 = vld [vmem:[%s593 + $0x121] sm:$0xff]
        %v651 = vld [vmem:[%s593 + $0x129] sm:$0xff]
        %v652 = vld [vmem:[%s593 + $0x139] sm:$0xff]
        %v653 = vld [vmem:[%s593 + $0x141] sm:$0xff]
        %v654 = vld [vmem:[%s593 + $0x151] sm:$0xff]
        %v655 = vld [vmem:[%s593 + $0x159] sm:$0xff]
        %v656 = vld [vmem:[%s593 + $0x169] sm:$0xff]
        %v657 = vld [vmem:[%s593 + $0x171] sm:$0xff]
        %v658 = vld [vmem:[%s593 + $0x2] sm:$0xff]
        %v659 = vld [vmem:[%s593 + $0xa] sm:$0xff]
        %v660 = vld [vmem:[%s593 + $0x1a] sm:$0xff]
        %v661 = vld [vmem:[%s593 + $0x22] sm:$0xff]
        %v662 = vld [vmem:[%s593 + $0x32] sm:$0xff]
        %v663 = vld [vmem:[%s593 + $0x3a] sm:$0xff]
        %v664 = vld [vmem:[%s593 + $0x4a] sm:$0xff]
        %v665 = vld [vmem:[%s593 + $0x52] sm:$0xff]
        %v666 = vld [vmem:[%s593 + $0x62] sm:$0xff]
        %v667 = vld [vmem:[%s593 + $0x6a] sm:$0xff]
        %v668 = vld [vmem:[%s593 + $0x7a] sm:$0xff]
        %v669 = vld [vmem:[%s593 + $0x82] sm:$0xff]
        %v670 = vld [vmem:[%s593 + $0x92] sm:$0xff]
        %v671 = vld [vmem:[%s593 + $0x9a] sm:$0xff]
        %v672 = vld [vmem:[%s593 + $0xaa] sm:$0xff]
        %v673 = vld [vmem:[%s593 + $0xb2] sm:$0xff]
        %v674 = vld [vmem:[%s593 + $0xc2] sm:$0xff]
        %v675 = vld [vmem:[%s593 + $0xca] sm:$0xff]
        %v676 = vld [vmem:[%s593 + $0xda] sm:$0xff]
        %v677 = vld [vmem:[%s593 + $0xe2] sm:$0xff]
        %v678 = vld [vmem:[%s593 + $0xf2] sm:$0xff]
        %v679 = vld [vmem:[%s593 + $0xfa] sm:$0xff]
        %v680 = vld [vmem:[%s593 + $0x10a] sm:$0xff]
        %v681 = vld [vmem:[%s593 + $0x112] sm:$0xff]
        %v682 = vld [vmem:[%s593 + $0x122] sm:$0xff]
        %v683 = vld [vmem:[%s593 + $0x12a] sm:$0xff]
        %v684 = vld [vmem:[%s593 + $0x13a] sm:$0xff]
        %v685 = vld [vmem:[%s593 + $0x142] sm:$0xff]
        %v686 = vld [vmem:[%s593 + $0x152] sm:$0xff]
        %v687 = vld [vmem:[%s593 + $0x15a] sm:$0xff]
        %v688 = vld [vmem:[%s593 + $0x16a] sm:$0xff]
        %v689 = vld [vmem:[%s593 + $0x172] sm:$0xff]
        %722 = vrot.lane.b32.xlu0 %v433, 4
        %v723 = vpop.permute.xlu0 %722
        %724 = vrot.lane.b32.xlu0 %v434, 4
        %v725 = vpop.permute.xlu0 %724
        %726 = vrot.lane.b32.xlu0 %v435, 4
        %v727 = vpop.permute.xlu0 %726
        %728 = vrot.lane.b32.xlu0 %v436, 4
        %v729 = vpop.permute.xlu0 %728
        %730 = vrot.lane.b32.xlu0 %v437, 4
        %v731 = vpop.permute.xlu0 %730
        %732 = vrot.lane.b32.xlu0 %v438, 4
        %v733 = vpop.permute.xlu0 %732
        %734 = vrot.lane.b32.xlu0 %v439, 4
        %v735 = vpop.permute.xlu0 %734
        %736 = vrot.lane.b32.xlu0 %v440, 4
        %v737 = vpop.permute.xlu0 %736
        %738 = vrot.lane.b32.xlu0 %v441, 4
        %v739 = vpop.permute.xlu0 %738
        %740 = vrot.lane.b32.xlu0 %v442, 4
        %v741 = vpop.permute.xlu0 %740
        %742 = vrot.lane.b32.xlu0 %v443, 4
        %v743 = vpop.permute.xlu0 %742
        %744 = vrot.lane.b32.xlu0 %v444, 4
        %v745 = vpop.permute.xlu0 %744
        %746 = vrot.lane.b32.xlu0 %v445, 4
        %v747 = vpop.permute.xlu0 %746
        %748 = vrot.lane.b32.xlu0 %v446, 4
        %v749 = vpop.permute.xlu0 %748
        %750 = vrot.lane.b32.xlu0 %v447, 4
        %v751 = vpop.permute.xlu0 %750
        %752 = vrot.lane.b32.xlu0 %v448, 4
        %v753 = vpop.permute.xlu0 %752
        %754 = vrot.lane.b32.xlu0 %v449, 4
        %v755 = vpop.permute.xlu0 %754
        %756 = vrot.lane.b32.xlu0 %v450, 4
        %v757 = vpop.permute.xlu0 %756
        %758 = vrot.lane.b32.xlu0 %v451, 4
        %v759 = vpop.permute.xlu0 %758
        %760 = vrot.lane.b32.xlu0 %v452, 4
        %v761 = vpop.permute.xlu0 %760
        %762 = vrot.lane.b32.xlu0 %v453, 4
        %v763 = vpop.permute.xlu0 %762
        %764 = vrot.lane.b32.xlu0 %v454, 4
        %v765 = vpop.permute.xlu0 %764
        %766 = vrot.lane.b32.xlu0 %v455, 4
        %v767 = vpop.permute.xlu0 %766
        %768 = vrot.lane.b32.xlu0 %v456, 4
        %v769 = vpop.permute.xlu0 %768
        %770 = vrot.lane.b32.xlu0 %v457, 4
        %v771 = vpop.permute.xlu0 %770
        %772 = vrot.lane.b32.xlu0 %v458, 4
        %v773 = vpop.permute.xlu0 %772
        %774 = vrot.lane.b32.xlu0 %v459, 4
        %v775 = vpop.permute.xlu0 %774
        %776 = vrot.lane.b32.xlu0 %v460, 4
        %v777 = vpop.permute.xlu0 %776
        %778 = vrot.lane.b32.xlu0 %v461, 4
        %v779 = vpop.permute.xlu0 %778
        %780 = vrot.lane.b32.xlu0 %v462, 4
        %v781 = vpop.permute.xlu0 %780
        %782 = vrot.lane.b32.xlu0 %v463, 4
        %v783 = vpop.permute.xlu0 %782
        %784 = vrot.lane.b32.xlu0 %v464, 4
        %v785 = vpop.permute.xlu0 %784
        %850 = vrot.lane.b32.xlu0 %v465, 8
        %v851 = vpop.permute.xlu0 %850
        %852 = vrot.lane.b32.xlu0 %v466, 8
        %v853 = vpop.permute.xlu0 %852
        %854 = vrot.lane.b32.xlu0 %v467, 8
        %v855 = vpop.permute.xlu0 %854
        %856 = vrot.lane.b32.xlu0 %v468, 8
        %v857 = vpop.permute.xlu0 %856
        %858 = vrot.lane.b32.xlu0 %v469, 8
        %v859 = vpop.permute.xlu0 %858
        %860 = vrot.lane.b32.xlu0 %v470, 8
        %v861 = vpop.permute.xlu0 %860
        %862 = vrot.lane.b32.xlu0 %v471, 8
        %v863 = vpop.permute.xlu0 %862
        %864 = vrot.lane.b32.xlu0 %v472, 8
        %v865 = vpop.permute.xlu0 %864
        %866 = vrot.lane.b32.xlu0 %v473, 8
        %v867 = vpop.permute.xlu0 %866
        %868 = vrot.lane.b32.xlu0 %v474, 8
        %v869 = vpop.permute.xlu0 %868
        %870 = vrot.lane.b32.xlu0 %v475, 8
        %v871 = vpop.permute.xlu0 %870
        %872 = vrot.lane.b32.xlu0 %v476, 8
        %v873 = vpop.permute.xlu0 %872
        %874 = vrot.lane.b32.xlu0 %v477, 8
        %v875 = vpop.permute.xlu0 %874
        %876 = vrot.lane.b32.xlu0 %v478, 8
        %v877 = vpop.permute.xlu0 %876
        %878 = vrot.lane.b32.xlu0 %v479, 8
        %v879 = vpop.permute.xlu0 %878
        %880 = vrot.lane.b32.xlu0 %v480, 8
        %v881 = vpop.permute.xlu0 %880
        %882 = vrot.lane.b32.xlu0 %v481, 8
        %v883 = vpop.permute.xlu0 %882
        %884 = vrot.lane.b32.xlu0 %v482, 8
        %v885 = vpop.permute.xlu0 %884
        %886 = vrot.lane.b32.xlu0 %v483, 8
        %v887 = vpop.permute.xlu0 %886
        %888 = vrot.lane.b32.xlu0 %v484, 8
        %v889 = vpop.permute.xlu0 %888
        %890 = vrot.lane.b32.xlu0 %v485, 8
        %v891 = vpop.permute.xlu0 %890
        %892 = vrot.lane.b32.xlu0 %v486, 8
        %v893 = vpop.permute.xlu0 %892
        %894 = vrot.lane.b32.xlu0 %v487, 8
        %v895 = vpop.permute.xlu0 %894
        %896 = vrot.lane.b32.xlu0 %v488, 8
        %v897 = vpop.permute.xlu0 %896
        %898 = vrot.lane.b32.xlu0 %v489, 8
        %v899 = vpop.permute.xlu0 %898
        %900 = vrot.lane.b32.xlu0 %v490, 8
        %v901 = vpop.permute.xlu0 %900
        %902 = vrot.lane.b32.xlu0 %v491, 8
        %v903 = vpop.permute.xlu0 %902
        %904 = vrot.lane.b32.xlu0 %v492, 8
        %v905 = vpop.permute.xlu0 %904
        %906 = vrot.lane.b32.xlu0 %v493, 8
        %v907 = vpop.permute.xlu0 %906
        %908 = vrot.lane.b32.xlu0 %v494, 8
        %v909 = vpop.permute.xlu0 %908
        %910 = vrot.lane.b32.xlu0 %v495, 8
        %v911 = vpop.permute.xlu0 %910
        %912 = vrot.lane.b32.xlu0 %v496, 8
        %v913 = vpop.permute.xlu0 %912
        %978 = vrot.lane.b32.xlu0 %v497, 12
        %v979 = vpop.permute.xlu0 %978
        %980 = vrot.lane.b32.xlu0 %v498, 12
        %v981 = vpop.permute.xlu0 %980
        %982 = vrot.lane.b32.xlu0 %v499, 12
        %v983 = vpop.permute.xlu0 %982
        %984 = vrot.lane.b32.xlu0 %v500, 12
        %v985 = vpop.permute.xlu0 %984
        %986 = vrot.lane.b32.xlu0 %v501, 12
        %v987 = vpop.permute.xlu0 %986
        %988 = vrot.lane.b32.xlu0 %v502, 12
        %v989 = vpop.permute.xlu0 %988
        %990 = vrot.lane.b32.xlu0 %v503, 12
        %v991 = vpop.permute.xlu0 %990
        %992 = vrot.lane.b32.xlu0 %v504, 12
        %v993 = vpop.permute.xlu0 %992
        %994 = vrot.lane.b32.xlu0 %v505, 12
        %v995 = vpop.permute.xlu0 %994
        %996 = vrot.lane.b32.xlu0 %v506, 12
        %v997 = vpop.permute.xlu0 %996
        %998 = vrot.lane.b32.xlu0 %v507, 12
        %v999 = vpop.permute.xlu0 %998
        %1000 = vrot.lane.b32.xlu0 %v508, 12
        %v1001 = vpop.permute.xlu0 %1000
        %1002 = vrot.lane.b32.xlu0 %v509, 12
        %v1003 = vpop.permute.xlu0 %1002
        %1004 = vrot.lane.b32.xlu0 %v510, 12
        %v1005 = vpop.permute.xlu0 %1004
        %1006 = vrot.lane.b32.xlu0 %v511, 12
        %v1007 = vpop.permute.xlu0 %1006
        %1008 = vrot.lane.b32.xlu0 %v512, 12
        %v1009 = vpop.permute.xlu0 %1008
        %1010 = vrot.lane.b32.xlu0 %v513, 12
        %v1011 = vpop.permute.xlu0 %1010
        %1012 = vrot.lane.b32.xlu0 %v514, 12
        %v1013 = vpop.permute.xlu0 %1012
        %1014 = vrot.lane.b32.xlu0 %v515, 12
        %v1015 = vpop.permute.xlu0 %1014
        %1016 = vrot.lane.b32.xlu0 %v516, 12
        %v1017 = vpop.permute.xlu0 %1016
        %1018 = vrot.lane.b32.xlu0 %v517, 12
        %v1019 = vpop.permute.xlu0 %1018
        %1020 = vrot.lane.b32.xlu0 %v518, 12
        %v1021 = vpop.permute.xlu0 %1020
        %1022 = vrot.lane.b32.xlu0 %v519, 12
        %v1023 = vpop.permute.xlu0 %1022
        %1024 = vrot.lane.b32.xlu0 %v520, 12
        %v1025 = vpop.permute.xlu0 %1024
        %1026 = vrot.lane.b32.xlu0 %v521, 12
        %v1027 = vpop.permute.xlu0 %1026
        %1028 = vrot.lane.b32.xlu0 %v522, 12
        %v1029 = vpop.permute.xlu0 %1028
        %1030 = vrot.lane.b32.xlu0 %v523, 12
        %v1031 = vpop.permute.xlu0 %1030
        %1032 = vrot.lane.b32.xlu0 %v524, 12
        %v1033 = vpop.permute.xlu0 %1032
        %1034 = vrot.lane.b32.xlu0 %v525, 12
        %v1035 = vpop.permute.xlu0 %1034
        %1036 = vrot.lane.b32.xlu0 %v526, 12
        %v1037 = vpop.permute.xlu0 %1036
        %1038 = vrot.lane.b32.xlu0 %v527, 12
        %v1039 = vpop.permute.xlu0 %1038
        %1040 = vrot.lane.b32.xlu0 %v528, 12
        %v1041 = vpop.permute.xlu0 %1040
        %1106 = vrot.lane.b32.xlu0 %v529, 16
        %v1107 = vpop.permute.xlu0 %1106
        %1108 = vrot.lane.b32.xlu0 %v530, 16
        %v1109 = vpop.permute.xlu0 %1108
        %1110 = vrot.lane.b32.xlu0 %v531, 16
        %v1111 = vpop.permute.xlu0 %1110
        %1112 = vrot.lane.b32.xlu0 %v532, 16
        %v1113 = vpop.permute.xlu0 %1112
        %1114 = vrot.lane.b32.xlu0 %v533, 16
        %v1115 = vpop.permute.xlu0 %1114
        %1116 = vrot.lane.b32.xlu0 %v534, 16
        %v1117 = vpop.permute.xlu0 %1116
        %1118 = vrot.lane.b32.xlu0 %v535, 16
        %v1119 = vpop.permute.xlu0 %1118
        %1120 = vrot.lane.b32.xlu0 %v536, 16
        %v1121 = vpop.permute.xlu0 %1120
        %1122 = vrot.lane.b32.xlu0 %v537, 16
        %v1123 = vpop.permute.xlu0 %1122
        %1124 = vrot.lane.b32.xlu0 %v538, 16
        %v1125 = vpop.permute.xlu0 %1124
        %1126 = vrot.lane.b32.xlu0 %v539, 16
        %v1127 = vpop.permute.xlu0 %1126
        %1128 = vrot.lane.b32.xlu0 %v540, 16
        %v1129 = vpop.permute.xlu0 %1128
        %1130 = vrot.lane.b32.xlu0 %v541, 16
        %v1131 = vpop.permute.xlu0 %1130
        %1132 = vrot.lane.b32.xlu0 %v542, 16
        %v1133 = vpop.permute.xlu0 %1132
        %1134 = vrot.lane.b32.xlu0 %v543, 16
        %v1135 = vpop.permute.xlu0 %1134
        %1136 = vrot.lane.b32.xlu0 %v544, 16
        %v1137 = vpop.permute.xlu0 %1136
        %1138 = vrot.lane.b32.xlu0 %v545, 16
        %v1139 = vpop.permute.xlu0 %1138
        %1140 = vrot.lane.b32.xlu0 %v546, 16
        %v1141 = vpop.permute.xlu0 %1140
        %1142 = vrot.lane.b32.xlu0 %v547, 16
        %v1143 = vpop.permute.xlu0 %1142
        %1144 = vrot.lane.b32.xlu0 %v548, 16
        %v1145 = vpop.permute.xlu0 %1144
        %1146 = vrot.lane.b32.xlu0 %v549, 16
        %v1147 = vpop.permute.xlu0 %1146
        %1148 = vrot.lane.b32.xlu0 %v550, 16
        %v1149 = vpop.permute.xlu0 %1148
        %1150 = vrot.lane.b32.xlu0 %v551, 16
        %v1151 = vpop.permute.xlu0 %1150
        %1152 = vrot.lane.b32.xlu0 %v552, 16
        %v1153 = vpop.permute.xlu0 %1152
        %1154 = vrot.lane.b32.xlu0 %v553, 16
        %v1155 = vpop.permute.xlu0 %1154
        %1156 = vrot.lane.b32.xlu0 %v554, 16
        %v1157 = vpop.permute.xlu0 %1156
        %1158 = vrot.lane.b32.xlu0 %v555, 16
        %v1159 = vpop.permute.xlu0 %1158
        %1160 = vrot.lane.b32.xlu0 %v556, 16
        %v1161 = vpop.permute.xlu0 %1160
        %1162 = vrot.lane.b32.xlu0 %v557, 16
        %v1163 = vpop.permute.xlu0 %1162
        %1164 = vrot.lane.b32.xlu0 %v558, 16
        %v1165 = vpop.permute.xlu0 %1164
        %1166 = vrot.lane.b32.xlu0 %v559, 16
        %v1167 = vpop.permute.xlu0 %1166
        %1168 = vrot.lane.b32.xlu0 %v560, 16
        %v1169 = vpop.permute.xlu0 %1168
        %1234 = vrot.lane.b32.xlu0 %v561, 20
        %v1235 = vpop.permute.xlu0 %1234
        %1236 = vrot.lane.b32.xlu0 %v562, 20
        %v1237 = vpop.permute.xlu0 %1236
        %1238 = vrot.lane.b32.xlu0 %v563, 20
        %v1239 = vpop.permute.xlu0 %1238
        %1240 = vrot.lane.b32.xlu0 %v564, 20
        %v1241 = vpop.permute.xlu0 %1240
        %1242 = vrot.lane.b32.xlu0 %v565, 20
        %v1243 = vpop.permute.xlu0 %1242
        %1244 = vrot.lane.b32.xlu0 %v566, 20
        %v1245 = vpop.permute.xlu0 %1244
        %1246 = vrot.lane.b32.xlu0 %v567, 20
        %v1247 = vpop.permute.xlu0 %1246
        %1248 = vrot.lane.b32.xlu0 %v568, 20
        %v1249 = vpop.permute.xlu0 %1248
        %1250 = vrot.lane.b32.xlu0 %v569, 20
        %v1251 = vpop.permute.xlu0 %1250
        %1252 = vrot.lane.b32.xlu0 %v570, 20
        %v1253 = vpop.permute.xlu0 %1252
        %1254 = vrot.lane.b32.xlu0 %v571, 20
        %v1255 = vpop.permute.xlu0 %1254
        %1256 = vrot.lane.b32.xlu0 %v572, 20
        %v1257 = vpop.permute.xlu0 %1256
        %1258 = vrot.lane.b32.xlu0 %v573, 20
        %v1259 = vpop.permute.xlu0 %1258
        %1260 = vrot.lane.b32.xlu0 %v574, 20
        %v1261 = vpop.permute.xlu0 %1260
        %1262 = vrot.lane.b32.xlu0 %v575, 20
        %v1263 = vpop.permute.xlu0 %1262
        %1264 = vrot.lane.b32.xlu0 %v576, 20
        %v1265 = vpop.permute.xlu0 %1264
        %1266 = vrot.lane.b32.xlu0 %v577, 20
        %v1267 = vpop.permute.xlu0 %1266
        %1268 = vrot.lane.b32.xlu0 %v578, 20
        %v1269 = vpop.permute.xlu0 %1268
        %1270 = vrot.lane.b32.xlu0 %v579, 20
        %v1271 = vpop.permute.xlu0 %1270
        %1272 = vrot.lane.b32.xlu0 %v580, 20
        %v1273 = vpop.permute.xlu0 %1272
        %1274 = vrot.lane.b32.xlu0 %v581, 20
        %v1275 = vpop.permute.xlu0 %1274
        %1276 = vrot.lane.b32.xlu0 %v582, 20
        %v1277 = vpop.permute.xlu0 %1276
        %1278 = vrot.lane.b32.xlu0 %v583, 20
        %v1279 = vpop.permute.xlu0 %1278
        %1280 = vrot.lane.b32.xlu0 %v584, 20
        %v1281 = vpop.permute.xlu0 %1280
        %1282 = vrot.lane.b32.xlu0 %v585, 20
        %v1283 = vpop.permute.xlu0 %1282
        %1284 = vrot.lane.b32.xlu0 %v586, 20
        %v1285 = vpop.permute.xlu0 %1284
        %1286 = vrot.lane.b32.xlu0 %v587, 20
        %v1287 = vpop.permute.xlu0 %1286
        %1288 = vrot.lane.b32.xlu0 %v588, 20
        %v1289 = vpop.permute.xlu0 %1288
        %1290 = vrot.lane.b32.xlu0 %v589, 20
        %v1291 = vpop.permute.xlu0 %1290
        %1292 = vrot.lane.b32.xlu0 %v590, 20
        %v1293 = vpop.permute.xlu0 %1292
        %1294 = vrot.lane.b32.xlu0 %v591, 20
        %v1295 = vpop.permute.xlu0 %1294
        %1296 = vrot.lane.b32.xlu0 %v592, 20
        %v1297 = vpop.permute.xlu0 %1296
        %1362 = vrot.lane.b32.xlu0 %v594, 24
        %v1363 = vpop.permute.xlu0 %1362
        %1364 = vrot.lane.b32.xlu0 %v595, 24
        %v1365 = vpop.permute.xlu0 %1364
        %1366 = vrot.lane.b32.xlu0 %v596, 24
        %v1367 = vpop.permute.xlu0 %1366
        %1368 = vrot.lane.b32.xlu0 %v597, 24
        %v1369 = vpop.permute.xlu0 %1368
        %1370 = vrot.lane.b32.xlu0 %v598, 24
        %v1371 = vpop.permute.xlu0 %1370
        %1372 = vrot.lane.b32.xlu0 %v599, 24
        %v1373 = vpop.permute.xlu0 %1372
        %1374 = vrot.lane.b32.xlu0 %v600, 24
        %v1375 = vpop.permute.xlu0 %1374
        %1376 = vrot.lane.b32.xlu0 %v601, 24
        %v1377 = vpop.permute.xlu0 %1376
        %1378 = vrot.lane.b32.xlu0 %v602, 24
        %v1379 = vpop.permute.xlu0 %1378
        %1380 = vrot.lane.b32.xlu0 %v603, 24
        %v1381 = vpop.permute.xlu0 %1380
        %1382 = vrot.lane.b32.xlu0 %v604, 24
        %v1383 = vpop.permute.xlu0 %1382
        %1384 = vrot.lane.b32.xlu0 %v605, 24
        %v1385 = vpop.permute.xlu0 %1384
        %1386 = vrot.lane.b32.xlu0 %v606, 24
        %v1387 = vpop.permute.xlu0 %1386
        %1388 = vrot.lane.b32.xlu0 %v607, 24
        %v1389 = vpop.permute.xlu0 %1388
        %1390 = vrot.lane.b32.xlu0 %v608, 24
        %v1391 = vpop.permute.xlu0 %1390
        %1392 = vrot.lane.b32.xlu0 %v609, 24
        %v1393 = vpop.permute.xlu0 %1392
        %1394 = vrot.lane.b32.xlu0 %v610, 24
        %v1395 = vpop.permute.xlu0 %1394
        %1396 = vrot.lane.b32.xlu0 %v611, 24
        %v1397 = vpop.permute.xlu0 %1396
        %1398 = vrot.lane.b32.xlu0 %v612, 24
        %v1399 = vpop.permute.xlu0 %1398
        %1400 = vrot.lane.b32.xlu0 %v613, 24
        %v1401 = vpop.permute.xlu0 %1400
        %1402 = vrot.lane.b32.xlu0 %v614, 24
        %v1403 = vpop.permute.xlu0 %1402
        %1404 = vrot.lane.b32.xlu0 %v615, 24
        %v1405 = vpop.permute.xlu0 %1404
        %1406 = vrot.lane.b32.xlu0 %v616, 24
        %v1407 = vpop.permute.xlu0 %1406
        %1408 = vrot.lane.b32.xlu0 %v617, 24
        %v1409 = vpop.permute.xlu0 %1408
        %1410 = vrot.lane.b32.xlu0 %v618, 24
        %v1411 = vpop.permute.xlu0 %1410
        %1412 = vrot.lane.b32.xlu0 %v619, 24
        %v1413 = vpop.permute.xlu0 %1412
        %1414 = vrot.lane.b32.xlu0 %v620, 24
        %v1415 = vpop.permute.xlu0 %1414
        %1416 = vrot.lane.b32.xlu0 %v621, 24
        %v1417 = vpop.permute.xlu0 %1416
        %1418 = vrot.lane.b32.xlu0 %v622, 24
        %v1419 = vpop.permute.xlu0 %1418
        %1420 = vrot.lane.b32.xlu0 %v623, 24
        %v1421 = vpop.permute.xlu0 %1420
        %1422 = vrot.lane.b32.xlu0 %v624, 24
        %v1423 = vpop.permute.xlu0 %1422
        %1424 = vrot.lane.b32.xlu0 %v625, 24
        %v1425 = vpop.permute.xlu0 %1424
        %1490 = vrot.lane.b32.xlu0 %v626, 28
        %v1491 = vpop.permute.xlu0 %1490
        %1492 = vrot.lane.b32.xlu0 %v627, 28
        %v1493 = vpop.permute.xlu0 %1492
        %1494 = vrot.lane.b32.xlu0 %v628, 28
        %v1495 = vpop.permute.xlu0 %1494
        %1496 = vrot.lane.b32.xlu0 %v629, 28
        %v1497 = vpop.permute.xlu0 %1496
        %1498 = vrot.lane.b32.xlu0 %v630, 28
        %v1499 = vpop.permute.xlu0 %1498
        %1500 = vrot.lane.b32.xlu0 %v631, 28
        %v1501 = vpop.permute.xlu0 %1500
        %1502 = vrot.lane.b32.xlu0 %v632, 28
        %v1503 = vpop.permute.xlu0 %1502
        %1504 = vrot.lane.b32.xlu0 %v633, 28
        %v1505 = vpop.permute.xlu0 %1504
        %1506 = vrot.lane.b32.xlu0 %v634, 28
        %v1507 = vpop.permute.xlu0 %1506
        %1508 = vrot.lane.b32.xlu0 %v635, 28
        %v1509 = vpop.permute.xlu0 %1508
        %1510 = vrot.lane.b32.xlu0 %v636, 28
        %v1511 = vpop.permute.xlu0 %1510
        %1512 = vrot.lane.b32.xlu0 %v637, 28
        %v1513 = vpop.permute.xlu0 %1512
        %1514 = vrot.lane.b32.xlu0 %v638, 28
        %v1515 = vpop.permute.xlu0 %1514
        %1516 = vrot.lane.b32.xlu0 %v639, 28
        %v1517 = vpop.permute.xlu0 %1516
        %1518 = vrot.lane.b32.xlu0 %v640, 28
        %v1519 = vpop.permute.xlu0 %1518
        %1520 = vrot.lane.b32.xlu0 %v641, 28
        %v1521 = vpop.permute.xlu0 %1520
        %1522 = vrot.lane.b32.xlu0 %v642, 28
        %v1523 = vpop.permute.xlu0 %1522
        %1524 = vrot.lane.b32.xlu0 %v643, 28
        %v1525 = vpop.permute.xlu0 %1524
        %1526 = vrot.lane.b32.xlu0 %v644, 28
        %v1527 = vpop.permute.xlu0 %1526
        %1528 = vrot.lane.b32.xlu0 %v645, 28
        %v1529 = vpop.permute.xlu0 %1528
        %1530 = vrot.lane.b32.xlu0 %v646, 28
        %v1531 = vpop.permute.xlu0 %1530
        %1532 = vrot.lane.b32.xlu0 %v647, 28
        %v1533 = vpop.permute.xlu0 %1532
        %1534 = vrot.lane.b32.xlu0 %v648, 28
        %v1535 = vpop.permute.xlu0 %1534
        %1536 = vrot.lane.b32.xlu0 %v649, 28
        %v1537 = vpop.permute.xlu0 %1536
        %1538 = vrot.lane.b32.xlu0 %v650, 28
        %v1539 = vpop.permute.xlu0 %1538
        %1540 = vrot.lane.b32.xlu0 %v651, 28
        %v1541 = vpop.permute.xlu0 %1540
        %1542 = vrot.lane.b32.xlu0 %v652, 28
        %v1543 = vpop.permute.xlu0 %1542
        %1544 = vrot.lane.b32.xlu0 %v653, 28
        %v1545 = vpop.permute.xlu0 %1544
        %1546 = vrot.lane.b32.xlu0 %v654, 28
        %v1547 = vpop.permute.xlu0 %1546
        %1548 = vrot.lane.b32.xlu0 %v655, 28
        %v1549 = vpop.permute.xlu0 %1548
        %1550 = vrot.lane.b32.xlu0 %v656, 28
        %v1551 = vpop.permute.xlu0 %1550
        %1552 = vrot.lane.b32.xlu0 %v657, 28
        %v1553 = vpop.permute.xlu0 %1552
        %1618 = vrot.lane.b32.xlu0 %v658, 32
        %v1619 = vpop.permute.xlu0 %1618
        %1620 = vrot.lane.b32.xlu0 %v659, 32
        %v1621 = vpop.permute.xlu0 %1620
        %1622 = vrot.lane.b32.xlu0 %v660, 32
        %v1623 = vpop.permute.xlu0 %1622
        %1624 = vrot.lane.b32.xlu0 %v661, 32
        %v1625 = vpop.permute.xlu0 %1624
        %1626 = vrot.lane.b32.xlu0 %v662, 32
        %v1627 = vpop.permute.xlu0 %1626
        %1628 = vrot.lane.b32.xlu0 %v663, 32
        %v1629 = vpop.permute.xlu0 %1628
        %1630 = vrot.lane.b32.xlu0 %v664, 32
        %v1631 = vpop.permute.xlu0 %1630
        %1632 = vrot.lane.b32.xlu0 %v665, 32
        %v1633 = vpop.permute.xlu0 %1632
        %1634 = vrot.lane.b32.xlu0 %v666, 32
        %v1635 = vpop.permute.xlu0 %1634
        %1636 = vrot.lane.b32.xlu0 %v667, 32
        %v1637 = vpop.permute.xlu0 %1636
        %1638 = vrot.lane.b32.xlu0 %v668, 32
        %v1639 = vpop.permute.xlu0 %1638
        %1640 = vrot.lane.b32.xlu0 %v669, 32
        %v1641 = vpop.permute.xlu0 %1640
        %1642 = vrot.lane.b32.xlu0 %v670, 32
        %v1643 = vpop.permute.xlu0 %1642
        %1644 = vrot.lane.b32.xlu0 %v671, 32
        %v1645 = vpop.permute.xlu0 %1644
        %1646 = vrot.lane.b32.xlu0 %v672, 32
        %v1647 = vpop.permute.xlu0 %1646
        %1648 = vrot.lane.b32.xlu0 %v673, 32
        %v1649 = vpop.permute.xlu0 %1648
        %1650 = vrot.lane.b32.xlu0 %v674, 32
        %v1651 = vpop.permute.xlu0 %1650
        %1652 = vrot.lane.b32.xlu0 %v675, 32
        %v1653 = vpop.permute.xlu0 %1652
        %1654 = vrot.lane.b32.xlu0 %v676, 32
        %v1655 = vpop.permute.xlu0 %1654
        %1656 = vrot.lane.b32.xlu0 %v677, 32
        %v1657 = vpop.permute.xlu0 %1656
        %1658 = vrot.lane.b32.xlu0 %v678, 32
        %v1659 = vpop.permute.xlu0 %1658
        %1660 = vrot.lane.b32.xlu0 %v679, 32
        %v1661 = vpop.permute.xlu0 %1660
        %1662 = vrot.lane.b32.xlu0 %v680, 32
        %v1663 = vpop.permute.xlu0 %1662
        %1664 = vrot.lane.b32.xlu0 %v681, 32
        %v1665 = vpop.permute.xlu0 %1664
        %1666 = vrot.lane.b32.xlu0 %v682, 32
        %v1667 = vpop.permute.xlu0 %1666
        %1668 = vrot.lane.b32.xlu0 %v683, 32
        %v1669 = vpop.permute.xlu0 %1668
        %1670 = vrot.lane.b32.xlu0 %v684, 32
        %v1671 = vpop.permute.xlu0 %1670
        %1672 = vrot.lane.b32.xlu0 %v685, 32
        %v1673 = vpop.permute.xlu0 %1672
        %1674 = vrot.lane.b32.xlu0 %v686, 32
        %v1675 = vpop.permute.xlu0 %1674
        %1676 = vrot.lane.b32.xlu0 %v687, 32
        %v1677 = vpop.permute.xlu0 %1676
        %1678 = vrot.lane.b32.xlu0 %v688, 32
        %v1679 = vpop.permute.xlu0 %1678
        %1680 = vrot.lane.b32.xlu0 %v689, 32
        %v1681 = vpop.permute.xlu0 %1680
        %v1714 = vsel %vm224, %v401, %v723
        %v1715 = vsel %vm224, %v402, %v725
        %v1716 = vsel %vm224, %v403, %v727
        %v1717 = vsel %vm224, %v404, %v729
        %v1718 = vsel %vm224, %v405, %v731
        %v1719 = vsel %vm224, %v406, %v733
        %v1720 = vsel %vm224, %v407, %v735
        %v1721 = vsel %vm224, %v408, %v737
        %v1722 = vsel %vm224, %v409, %v739
        %v1723 = vsel %vm224, %v410, %v741
        %v1724 = vsel %vm224, %v411, %v743
        %v1725 = vsel %vm224, %v412, %v745
        %v1726 = vsel %vm224, %v413, %v747
        %v1727 = vsel %vm224, %v414, %v749
        %v1728 = vsel %vm224, %v415, %v751
        %v1729 = vsel %vm224, %v416, %v753
        %v1730 = vsel %vm224, %v417, %v755
        %v1731 = vsel %vm224, %v418, %v757
        %v1732 = vsel %vm224, %v419, %v759
        %v1733 = vsel %vm224, %v420, %v761
        %v1734 = vsel %vm224, %v421, %v763
        %v1735 = vsel %vm224, %v422, %v765
        %v1736 = vsel %vm224, %v423, %v767
        %v1737 = vsel %vm224, %v424, %v769
        %v1738 = vsel %vm224, %v425, %v771
        %v1739 = vsel %vm224, %v426, %v773
        %v1740 = vsel %vm224, %v427, %v775
        %v1741 = vsel %vm224, %v428, %v777
        %v1742 = vsel %vm224, %v429, %v779
        %v1743 = vsel %vm224, %v430, %v781
        %v1744 = vsel %vm224, %v431, %v783
        %v1745 = vsel %vm224, %v432, %v785
        %vm1746 = vcmask 64512
        %v1747 = vsel %vm1746, %v1714, %v851
        %v1748 = vsel %vm1746, %v1715, %v853
        %v1749 = vsel %vm1746, %v1716, %v855
        %v1750 = vsel %vm1746, %v1717, %v857
        %v1751 = vsel %vm1746, %v1718, %v859
        %v1752 = vsel %vm1746, %v1719, %v861
        %v1753 = vsel %vm1746, %v1720, %v863
        %v1754 = vsel %vm1746, %v1721, %v865
        %v1755 = vsel %vm1746, %v1722, %v867
        %v1756 = vsel %vm1746, %v1723, %v869
        %v1757 = vsel %vm1746, %v1724, %v871
        %v1758 = vsel %vm1746, %v1725, %v873
        %v1759 = vsel %vm1746, %v1726, %v875
        %v1760 = vsel %vm1746, %v1727, %v877
        %v1761 = vsel %vm1746, %v1728, %v879
        %v1762 = vsel %vm1746, %v1729, %v881
        %v1763 = vsel %vm1746, %v1730, %v883
        %v1764 = vsel %vm1746, %v1731, %v885
        %v1765 = vsel %vm1746, %v1732, %v887
        %v1766 = vsel %vm1746, %v1733, %v889
        %v1767 = vsel %vm1746, %v1734, %v891
        %v1768 = vsel %vm1746, %v1735, %v893
        %v1769 = vsel %vm1746, %v1736, %v895
        %v1770 = vsel %vm1746, %v1737, %v897
        %v1771 = vsel %vm1746, %v1738, %v899
        %v1772 = vsel %vm1746, %v1739, %v901
        %v1773 = vsel %vm1746, %v1740, %v903
        %v1774 = vsel %vm1746, %v1741, %v905
        %v1775 = vsel %vm1746, %v1742, %v907
        %v1776 = vsel %vm1746, %v1743, %v909
        %v1777 = vsel %vm1746, %v1744, %v911
        %v1778 = vsel %vm1746, %v1745, %v913
        %vm1779 = vcmask 97280
        %v1780 = vsel %vm1779, %v1747, %v979
        %v1781 = vsel %vm1779, %v1748, %v981
        %v1782 = vsel %vm1779, %v1749, %v983
        %v1783 = vsel %vm1779, %v1750, %v985
        %v1784 = vsel %vm1779, %v1751, %v987
        %v1785 = vsel %vm1779, %v1752, %v989
        %v1786 = vsel %vm1779, %v1753, %v991
        %v1787 = vsel %vm1779, %v1754, %v993
        %v1788 = vsel %vm1779, %v1755, %v995
        %v1789 = vsel %vm1779, %v1756, %v997
        %v1790 = vsel %vm1779, %v1757, %v999
        %v1791 = vsel %vm1779, %v1758, %v1001
        %v1792 = vsel %vm1779, %v1759, %v1003
        %v1793 = vsel %vm1779, %v1760, %v1005
        %v1794 = vsel %vm1779, %v1761, %v1007
        %v1795 = vsel %vm1779, %v1762, %v1009
        %v1796 = vsel %vm1779, %v1763, %v1011
        %v1797 = vsel %vm1779, %v1764, %v1013
        %v1798 = vsel %vm1779, %v1765, %v1015
        %v1799 = vsel %vm1779, %v1766, %v1017
        %v1800 = vsel %vm1779, %v1767, %v1019
        %v1801 = vsel %vm1779, %v1768, %v1021
        %v1802 = vsel %vm1779, %v1769, %v1023
        %v1803 = vsel %vm1779, %v1770, %v1025
        %v1804 = vsel %vm1779, %v1771, %v1027
        %v1805 = vsel %vm1779, %v1772, %v1029
        %v1806 = vsel %vm1779, %v1773, %v1031
        %v1807 = vsel %vm1779, %v1774, %v1033
        %v1808 = vsel %vm1779, %v1775, %v1035
        %v1809 = vsel %vm1779, %v1776, %v1037
        %v1810 = vsel %vm1779, %v1777, %v1039
        %v1811 = vsel %vm1779, %v1778, %v1041
        %v1812 = vsel %vm280, %v1780, %v1107
        %v1813 = vsel %vm280, %v1781, %v1109
        %v1814 = vsel %vm280, %v1782, %v1111
        %v1815 = vsel %vm280, %v1783, %v1113
        %v1816 = vsel %vm280, %v1784, %v1115
        %v1817 = vsel %vm280, %v1785, %v1117
        %v1818 = vsel %vm280, %v1786, %v1119
        %v1819 = vsel %vm280, %v1787, %v1121
        %v1820 = vsel %vm280, %v1788, %v1123
        %v1821 = vsel %vm280, %v1789, %v1125
        %v1822 = vsel %vm280, %v1790, %v1127
        %v1823 = vsel %vm280, %v1791, %v1129
        %v1824 = vsel %vm280, %v1792, %v1131
        %v1825 = vsel %vm280, %v1793, %v1133
        %v1826 = vsel %vm280, %v1794, %v1135
        %v1827 = vsel %vm280, %v1795, %v1137
        %v1828 = vsel %vm280, %v1796, %v1139
        %v1829 = vsel %vm280, %v1797, %v1141
        %v1830 = vsel %vm280, %v1798, %v1143
        %v1831 = vsel %vm280, %v1799, %v1145
        %v1832 = vsel %vm280, %v1800, %v1147
        %v1833 = vsel %vm280, %v1801, %v1149
        %v1834 = vsel %vm280, %v1802, %v1151
        %v1835 = vsel %vm280, %v1803, %v1153
        %v1836 = vsel %vm280, %v1804, %v1155
        %v1837 = vsel %vm280, %v1805, %v1157
        %v1838 = vsel %vm280, %v1806, %v1159
        %v1839 = vsel %vm280, %v1807, %v1161
        %v1840 = vsel %vm280, %v1808, %v1163
        %v1841 = vsel %vm280, %v1809, %v1165
        %v1842 = vsel %vm280, %v1810, %v1167
        %v1843 = vsel %vm280, %v1811, %v1169
        %vm1844 = vcmask 162816
        %v1845 = vsel %vm1844, %v1812, %v1235
        %v1846 = vsel %vm1844, %v1813, %v1237
        %v1847 = vsel %vm1844, %v1814, %v1239
        %v1848 = vsel %vm1844, %v1815, %v1241
        %v1849 = vsel %vm1844, %v1816, %v1243
        %v1850 = vsel %vm1844, %v1817, %v1245
        %v1851 = vsel %vm1844, %v1818, %v1247
        %v1852 = vsel %vm1844, %v1819, %v1249
        %v1853 = vsel %vm1844, %v1820, %v1251
        %v1854 = vsel %vm1844, %v1821, %v1253
        %v1855 = vsel %vm1844, %v1822, %v1255
        %v1856 = vsel %vm1844, %v1823, %v1257
        %v1857 = vsel %vm1844, %v1824, %v1259
        %v1858 = vsel %vm1844, %v1825, %v1261
        %v1859 = vsel %vm1844, %v1826, %v1263
        %v1860 = vsel %vm1844, %v1827, %v1265
        %v1861 = vsel %vm1844, %v1828, %v1267
        %v1862 = vsel %vm1844, %v1829, %v1269
        %v1863 = vsel %vm1844, %v1830, %v1271
        %v1864 = vsel %vm1844, %v1831, %v1273
        %v1865 = vsel %vm1844, %v1832, %v1275
        %v1866 = vsel %vm1844, %v1833, %v1277
        %v1867 = vsel %vm1844, %v1834, %v1279
        %v1868 = vsel %vm1844, %v1835, %v1281
        %v1869 = vsel %vm1844, %v1836, %v1283
        %v1870 = vsel %vm1844, %v1837, %v1285
        %v1871 = vsel %vm1844, %v1838, %v1287
        %v1872 = vsel %vm1844, %v1839, %v1289
        %v1873 = vsel %vm1844, %v1840, %v1291
        %v1874 = vsel %vm1844, %v1841, %v1293
        %v1875 = vsel %vm1844, %v1842, %v1295
        %v1876 = vsel %vm1844, %v1843, %v1297
        %vm1877 = vcmask 195584
        %v1878 = vsel %vm1877, %v1845, %v1363
        %v1879 = vsel %vm1877, %v1846, %v1365
        %v1880 = vsel %vm1877, %v1847, %v1367
        %v1881 = vsel %vm1877, %v1848, %v1369
        %v1882 = vsel %vm1877, %v1849, %v1371
        %v1883 = vsel %vm1877, %v1850, %v1373
        %v1884 = vsel %vm1877, %v1851, %v1375
        %v1885 = vsel %vm1877, %v1852, %v1377
        %v1886 = vsel %vm1877, %v1853, %v1379
        %v1887 = vsel %vm1877, %v1854, %v1381
        %v1888 = vsel %vm1877, %v1855, %v1383
        %v1889 = vsel %vm1877, %v1856, %v1385
        %v1890 = vsel %vm1877, %v1857, %v1387
        %v1891 = vsel %vm1877, %v1858, %v1389
        %v1892 = vsel %vm1877, %v1859, %v1391
        %v1893 = vsel %vm1877, %v1860, %v1393
        %v1894 = vsel %vm1877, %v1861, %v1395
        %v1895 = vsel %vm1877, %v1862, %v1397
        %v1896 = vsel %vm1877, %v1863, %v1399
        %v1897 = vsel %vm1877, %v1864, %v1401
        %v1898 = vsel %vm1877, %v1865, %v1403
        %v1899 = vsel %vm1877, %v1866, %v1405
        %v1900 = vsel %vm1877, %v1867, %v1407
        %v1901 = vsel %vm1877, %v1868, %v1409
        %v1902 = vsel %vm1877, %v1869, %v1411
        %v1903 = vsel %vm1877, %v1870, %v1413
        %v1904 = vsel %vm1877, %v1871, %v1415
        %v1905 = vsel %vm1877, %v1872, %v1417
        %v1906 = vsel %vm1877, %v1873, %v1419
        %v1907 = vsel %vm1877, %v1874, %v1421
        %v1908 = vsel %vm1877, %v1875, %v1423
        %v1909 = vsel %vm1877, %v1876, %v1425
        %vm1910 = vcmask 228352
        %v1911 = vsel %vm1910, %v1878, %v1491
        %v1912 = vsel %vm1910, %v1879, %v1493
        %v1913 = vsel %vm1910, %v1880, %v1495
        %v1914 = vsel %vm1910, %v1881, %v1497
        %v1915 = vsel %vm1910, %v1882, %v1499
        %v1916 = vsel %vm1910, %v1883, %v1501
        %v1917 = vsel %vm1910, %v1884, %v1503
        %v1918 = vsel %vm1910, %v1885, %v1505
        %v1919 = vsel %vm1910, %v1886, %v1507
        %v1920 = vsel %vm1910, %v1887, %v1509
        %v1921 = vsel %vm1910, %v1888, %v1511
        %v1922 = vsel %vm1910, %v1889, %v1513
        %v1923 = vsel %vm1910, %v1890, %v1515
        %v1924 = vsel %vm1910, %v1891, %v1517
        %v1925 = vsel %vm1910, %v1892, %v1519
        %v1926 = vsel %vm1910, %v1893, %v1521
        %v1927 = vsel %vm1910, %v1894, %v1523
        %v1928 = vsel %vm1910, %v1895, %v1525
        %v1929 = vsel %vm1910, %v1896, %v1527
        %v1930 = vsel %vm1910, %v1897, %v1529
        %v1931 = vsel %vm1910, %v1898, %v1531
        %v1932 = vsel %vm1910, %v1899, %v1533
        %v1933 = vsel %vm1910, %v1900, %v1535
        %v1934 = vsel %vm1910, %v1901, %v1537
        %v1935 = vsel %vm1910, %v1902, %v1539
        %v1936 = vsel %vm1910, %v1903, %v1541
        %v1937 = vsel %vm1910, %v1904, %v1543
        %v1938 = vsel %vm1910, %v1905, %v1545
        %v1939 = vsel %vm1910, %v1906, %v1547
        %v1940 = vsel %vm1910, %v1907, %v1549
        %v1941 = vsel %vm1910, %v1908, %v1551
        %v1942 = vsel %vm1910, %v1909, %v1553
        %vm1943 = vcmask 261120
        %v1944 = vsel %vm1943, %v1911, %v1619
        %v1945 = vsel %vm1943, %v1912, %v1621
        %v1946 = vsel %vm1943, %v1913, %v1623
        %v1947 = vsel %vm1943, %v1914, %v1625
        %v1948 = vsel %vm1943, %v1915, %v1627
        %v1949 = vsel %vm1943, %v1916, %v1629
        %v1950 = vsel %vm1943, %v1917, %v1631
        %v1951 = vsel %vm1943, %v1918, %v1633
        %v1952 = vsel %vm1943, %v1919, %v1635
        %v1953 = vsel %vm1943, %v1920, %v1637
        %v1954 = vsel %vm1943, %v1921, %v1639
        %v1955 = vsel %vm1943, %v1922, %v1641
        %v1956 = vsel %vm1943, %v1923, %v1643
        %v1957 = vsel %vm1943, %v1924, %v1645
        %v1958 = vsel %vm1943, %v1925, %v1647
        %v1959 = vsel %vm1943, %v1926, %v1649
        %v1960 = vsel %vm1943, %v1927, %v1651
        %v1961 = vsel %vm1943, %v1928, %v1653
        %v1962 = vsel %vm1943, %v1929, %v1655
        %v1963 = vsel %vm1943, %v1930, %v1657
        %v1964 = vsel %vm1943, %v1931, %v1659
        %v1965 = vsel %vm1943, %v1932, %v1661
        %v1966 = vsel %vm1943, %v1933, %v1663
        %v1967 = vsel %vm1943, %v1934, %v1665
        %v1968 = vsel %vm1943, %v1935, %v1667
        %v1969 = vsel %vm1943, %v1936, %v1669
        %v1970 = vsel %vm1943, %v1937, %v1671
        %v1971 = vsel %vm1943, %v1938, %v1673
        %v1972 = vsel %vm1943, %v1939, %v1675
        %v1973 = vsel %vm1943, %v1940, %v1677
        %v1974 = vsel %vm1943, %v1941, %v1679
        %v1975 = vsel %vm1943, %v1942, %v1681
        %v1976 = vpack.c.bf16 %v1945, %v1944
        %v1977 = vpack.c.bf16 %v1947, %v1946
        %v1978 = vpack.c.bf16 %v1949, %v1948
        %v1979 = vpack.c.bf16 %v1951, %v1950
        %v1980 = vpack.c.bf16 %v1953, %v1952
        %v1981 = vpack.c.bf16 %v1955, %v1954
        %v1982 = vpack.c.bf16 %v1957, %v1956
        %v1983 = vpack.c.bf16 %v1959, %v1958
        %v1984 = vpack.c.bf16 %v1961, %v1960
        %v1985 = vpack.c.bf16 %v1963, %v1962
        %v1986 = vpack.c.bf16 %v1965, %v1964
        %v1987 = vpack.c.bf16 %v1967, %v1966
        %v1988 = vpack.c.bf16 %v1969, %v1968
        %v1989 = vpack.c.bf16 %v1971, %v1970
        %v1990 = vpack.c.bf16 %v1973, %v1972
        %v1991 = vpack.c.bf16 %v1975, %v1974
        %v1992 = vld [vmem:[%s1] sm:$0xf]
        %v1993 = vld [vmem:[%s1 + $0x4] sm:$0xf]
        %v1994 = vld [vmem:[%s1 + $0x8] sm:$0xf]
        %v1995 = vld [vmem:[%s1 + $0xc] sm:$0xf]
        %v1996 = vld [vmem:[%s1 + $0x10] sm:$0x3]
        %v1997 = vld [vmem:[%s2] sm:$0x1]
        %v1999 = vlaneseq
        %v2000 = vshrl.u32 %v1999, 7
        %v2001 = vsub.s32 0, %v2000
        %v2002 = vrot.slane %v1997, %v2001
        %v2009 = vunpack.c.l.b16 %v1992
        %v2010 = vunpack.c.l.b16 %v1993
        %v2011 = vunpack.c.l.b16 %v1994
        %v2012 = vunpack.c.l.b16 %v1995
        %v2013 = vunpack.c.l.b16 %v1996
        %v2014 = vpack.c.b16 %v2010, %v2009
        %v2015 = vpack.c.b16 %v2012, %v2011
        %v2016 = vpack.c.b16 %v2013, %v2013
        %vm2019 = vcmask 293888
        %v2021 = vsel %vm2019, %v1976, 0
        %v2024 = vsel %vm2019, %v1977, 0
        %v2027 = vsel %vm2019, %v1978, 0
        %v2030 = vsel %vm2019, %v1979, 0
        %v2033 = vsel %vm2019, %v1980, 0
        %v2036 = vsel %vm2019, %v1981, 0
        %v2039 = vsel %vm2019, %v1982, 0
        %v2042 = vsel %vm2019, %v1983, 0
        %v2045 = vsel %vm2019, %v1984, 0
        %v2048 = vsel %vm2019, %v1985, 0
        %v2051 = vsel %vm2019, %v1986, 0
        %v2054 = vsel %vm2019, %v1987, 0
        %v2057 = vsel %vm2019, %v1988, 0
        %v2060 = vsel %vm2019, %v1989, 0
        %v2063 = vsel %vm2019, %v1990, 0
        %v2066 = vsel %vm2019, %v1991, 0
        %vm2068 = vcmask 1041408
        %v2070 = vsel %vm2068, %v2016, 0
        %2072 = vmatprep.subr.bf16.mxu0 0
        %2073 = vmatpush1.bf16.msra.mxu0 %v2014
        %2074 = vmatprep.subr.bf16.mxu0 0
        %2075 = vmatpush1.bf16.msra.mxu0 %v2015
        %2076 = vmatprep.subr.bf16.mxu0 0
        %2077 = vmatpush1.bf16.msra.mxu0 %v2070
        %2078 = vmatprep.subr.bf16.mxu0 0
        %2079 = vmatpush1.bf16.msra.mxu0 0
        %2080 = vmatprep.subr.bf16.mxu0 0
        %2081 = vmatpush1.bf16.msra.mxu0 0
        %2082 = vmatprep.subr.bf16.mxu0 0
        %2083 = vmatpush1.bf16.msra.mxu0 0
        %2084 = vmatprep.subr.bf16.mxu0 0
        %2085 = vmatpush1.bf16.msra.mxu0 0
        %2086 = vmatprep.subr.bf16.mxu0 0
        %2087 = vmatpush1.bf16.msra.mxu0 0
        %2088 = vmatprep.subr.bf16.mxu0 0
        %2089 = vmatpush1.bf16.msra.mxu0 0
        %2090 = vmatprep.subr.bf16.mxu0 0
        %2091 = vmatpush1.bf16.msra.mxu0 0
        %2092 = vmatprep.subr.bf16.mxu0 0
        %2093 = vmatpush1.bf16.msra.mxu0 0
        %2094 = vmatprep.subr.bf16.mxu0 0
        %2095 = vmatpush1.bf16.msra.mxu0 0
        %2096 = vmatprep.subr.bf16.mxu0 0
        %2097 = vmatpush1.bf16.msra.mxu0 0
        %2098 = vmatprep.subr.bf16.mxu0 0
        %2099 = vmatpush1.bf16.msra.mxu0 0
        %2100 = vmatprep.subr.bf16.mxu0 0
        %2101 = vmatpush1.bf16.msra.mxu0 0
        %2102 = vmatprep.subr.bf16.mxu0 0
        %2103 = vmatpush1.bf16.msra.mxu0 0
        %2104 = vmatprep.mubr.bf16.mxu0 0
        %2105 = vmatmul.mubr.bf16.gmra.mrb[0].mxu0 %v2021
        %v2106 = vpop.f32.mrb[0].mxu0
        %v2107 = vadd.f32 %v2002, %v2106
        %v2108 = vpop.f32.mrb[0].mxu0
        %v2109 = vpop.f32.mrb[0].mxu0
        %v2110 = vadd.f32 %v2002, %v2109
        %v2111 = vpop.f32.mrb[0].mxu0
        %2112 = vmatprep.mubr.bf16.mxu0 0
        %2113 = vmatmul.mubr.bf16.gmra.mrb[0].mxu0 %v2024
        %v2114 = vpop.f32.mrb[0].mxu0
        %v2115 = vadd.f32 %v2002, %v2114
        %v2116 = vpop.f32.mrb[0].mxu0
        %v2117 = vpop.f32.mrb[0].mxu0
        %v2118 = vadd.f32 %v2002, %v2117
        %v2119 = vpop.f32.mrb[0].mxu0
        %2120 = vmatprep.mubr.bf16.mxu0 0
        %2121 = vmatmul.mubr.bf16.gmra.mrb[0].mxu0 %v2027
        %v2122 = vpop.f32.mrb[0].mxu0
        %v2123 = vadd.f32 %v2002, %v2122
        %v2124 = vpop.f32.mrb[0].mxu0
        %v2125 = vpop.f32.mrb[0].mxu0
        %v2126 = vadd.f32 %v2002, %v2125
        %v2127 = vpop.f32.mrb[0].mxu0
        %2128 = vmatprep.mubr.bf16.mxu0 0
        %2129 = vmatmul.mubr.bf16.gmra.mrb[0].mxu0 %v2030
        %v2130 = vpop.f32.mrb[0].mxu0
        %v2131 = vadd.f32 %v2002, %v2130
        %v2132 = vpop.f32.mrb[0].mxu0
        %v2133 = vpop.f32.mrb[0].mxu0
        %v2134 = vadd.f32 %v2002, %v2133
        %v2135 = vpop.f32.mrb[0].mxu0
        %2136 = vmatprep.mubr.bf16.mxu0 0
        %2137 = vmatmul.mubr.bf16.gmra.mrb[0].mxu0 %v2033
        %v2138 = vpop.f32.mrb[0].mxu0
        %v2139 = vadd.f32 %v2002, %v2138
        %v2140 = vpop.f32.mrb[0].mxu0
        %v2141 = vpop.f32.mrb[0].mxu0
        %v2142 = vadd.f32 %v2002, %v2141
        %v2143 = vpop.f32.mrb[0].mxu0
        %2144 = vmatprep.mubr.bf16.mxu0 0
        %2145 = vmatmul.mubr.bf16.gmra.mrb[0].mxu0 %v2036
        %v2146 = vpop.f32.mrb[0].mxu0
        %v2147 = vadd.f32 %v2002, %v2146
        %v2148 = vpop.f32.mrb[0].mxu0
        %v2149 = vpop.f32.mrb[0].mxu0
        %v2150 = vadd.f32 %v2002, %v2149
        %v2151 = vpop.f32.mrb[0].mxu0
        %2152 = vmatprep.mubr.bf16.mxu0 0
        %2153 = vmatmul.mubr.bf16.gmra.mrb[0].mxu0 %v2039
        %v2154 = vpop.f32.mrb[0].mxu0
        %v2155 = vadd.f32 %v2002, %v2154
        %v2156 = vpop.f32.mrb[0].mxu0
        %v2157 = vpop.f32.mrb[0].mxu0
        %v2158 = vadd.f32 %v2002, %v2157
        %v2159 = vpop.f32.mrb[0].mxu0
        %2160 = vmatprep.mubr.bf16.mxu0 0
        %2161 = vmatmul.mubr.bf16.gmra.mrb[0].mxu0 %v2042
        %v2162 = vpop.f32.mrb[0].mxu0
        %v2163 = vadd.f32 %v2002, %v2162
        %v2164 = vpop.f32.mrb[0].mxu0
        %v2165 = vpop.f32.mrb[0].mxu0
        %v2166 = vadd.f32 %v2002, %v2165
        %v2167 = vpop.f32.mrb[0].mxu0
        %2168 = vmatprep.mubr.bf16.mxu0 0
        %2169 = vmatmul.mubr.bf16.gmra.mrb[0].mxu0 %v2045
        %v2170 = vpop.f32.mrb[0].mxu0
        %v2171 = vadd.f32 %v2002, %v2170
        %v2172 = vpop.f32.mrb[0].mxu0
        %v2173 = vpop.f32.mrb[0].mxu0
        %v2174 = vadd.f32 %v2002, %v2173
        %v2175 = vpop.f32.mrb[0].mxu0
        %2176 = vmatprep.mubr.bf16.mxu0 0
        %2177 = vmatmul.mubr.bf16.gmra.mrb[0].mxu0 %v2048
        %v2178 = vpop.f32.mrb[0].mxu0
        %v2179 = vadd.f32 %v2002, %v2178
        %v2180 = vpop.f32.mrb[0].mxu0
        %v2181 = vpop.f32.mrb[0].mxu0
        %v2182 = vadd.f32 %v2002, %v2181
        %v2183 = vpop.f32.mrb[0].mxu0
        %2184 = vmatprep.mubr.bf16.mxu0 0
        %2185 = vmatmul.mubr.bf16.gmra.mrb[0].mxu0 %v2051
        %v2186 = vpop.f32.mrb[0].mxu0
        %v2187 = vadd.f32 %v2002, %v2186
        %v2188 = vpop.f32.mrb[0].mxu0
        %v2189 = vpop.f32.mrb[0].mxu0
        %v2190 = vadd.f32 %v2002, %v2189
        %v2191 = vpop.f32.mrb[0].mxu0
        %2192 = vmatprep.mubr.bf16.mxu0 0
        %2193 = vmatmul.mubr.bf16.gmra.mrb[0].mxu0 %v2054
        %v2194 = vpop.f32.mrb[0].mxu0
        %v2195 = vadd.f32 %v2002, %v2194
        %v2196 = vpop.f32.mrb[0].mxu0
        %v2197 = vpop.f32.mrb[0].mxu0
        %v2198 = vadd.f32 %v2002, %v2197
        %v2199 = vpop.f32.mrb[0].mxu0
        %2200 = vmatprep.mubr.bf16.mxu0 0
        %2201 = vmatmul.mubr.bf16.gmra.mrb[0].mxu0 %v2057
        %v2202 = vpop.f32.mrb[0].mxu0
        %v2203 = vadd.f32 %v2002, %v2202
        %v2204 = vpop.f32.mrb[0].mxu0
        %v2205 = vpop.f32.mrb[0].mxu0
        %v2206 = vadd.f32 %v2002, %v2205
        %v2207 = vpop.f32.mrb[0].mxu0
        %2208 = vmatprep.mubr.bf16.mxu0 0
        %2209 = vmatmul.mubr.bf16.gmra.mrb[0].mxu0 %v2060
        %v2210 = vpop.f32.mrb[0].mxu0
        %v2211 = vadd.f32 %v2002, %v2210
        %v2212 = vpop.f32.mrb[0].mxu0
        %v2213 = vpop.f32.mrb[0].mxu0
        %v2214 = vadd.f32 %v2002, %v2213
        %v2215 = vpop.f32.mrb[0].mxu0
        %2216 = vmatprep.mubr.bf16.mxu0 0
        %2217 = vmatmul.mubr.bf16.gmra.mrb[0].mxu0 %v2063
        %v2218 = vpop.f32.mrb[0].mxu0
        %v2219 = vadd.f32 %v2002, %v2218
        %v2220 = vpop.f32.mrb[0].mxu0
        %v2221 = vpop.f32.mrb[0].mxu0
        %v2222 = vadd.f32 %v2002, %v2221
        %v2223 = vpop.f32.mrb[0].mxu0
        %2224 = vmatprep.mubr.bf16.mxu0 0
        %2225 = vmatmul.mubr.bf16.gmra.mrb[0].mxu0 %v2066
        %v2226 = vpop.f32.mrb[0].mxu0
        %v2227 = vadd.f32 %v2002, %v2226
        %v2228 = vpop.f32.mrb[0].mxu0
        %v2229 = vpop.f32.mrb[0].mxu0
        %v2230 = vadd.f32 %v2002, %v2229
        %v2231 = vpop.f32.mrb[0].mxu0
        %2232 = vdwg.mxu0
        %vm2233 = vcmp.ge.f32.partialorder %v2107, 0.0
        %vm2234 = vcmp.ge.f32.partialorder %v2110, 0.0
        %vm2235 = vcmp.ge.f32.partialorder %v2115, 0.0
        %vm2236 = vcmp.ge.f32.partialorder %v2118, 0.0
        %vm2237 = vcmp.ge.f32.partialorder %v2123, 0.0
        %vm2238 = vcmp.ge.f32.partialorder %v2126, 0.0
        %vm2239 = vcmp.ge.f32.partialorder %v2131, 0.0
        %vm2240 = vcmp.ge.f32.partialorder %v2134, 0.0
        %vm2241 = vcmp.ge.f32.partialorder %v2139, 0.0
        %vm2242 = vcmp.ge.f32.partialorder %v2142, 0.0
        %vm2243 = vcmp.ge.f32.partialorder %v2147, 0.0
        %vm2244 = vcmp.ge.f32.partialorder %v2150, 0.0
        %vm2245 = vcmp.ge.f32.partialorder %v2155, 0.0
        %vm2246 = vcmp.ge.f32.partialorder %v2158, 0.0
        %vm2247 = vcmp.ge.f32.partialorder %v2163, 0.0
        %vm2248 = vcmp.ge.f32.partialorder %v2166, 0.0
        %vm2249 = vcmp.ge.f32.partialorder %v2171, 0.0
        %vm2250 = vcmp.ge.f32.partialorder %v2174, 0.0
        %vm2251 = vcmp.ge.f32.partialorder %v2179, 0.0
        %vm2252 = vcmp.ge.f32.partialorder %v2182, 0.0
        %vm2253 = vcmp.ge.f32.partialorder %v2187, 0.0
        %vm2254 = vcmp.ge.f32.partialorder %v2190, 0.0
        %vm2255 = vcmp.ge.f32.partialorder %v2195, 0.0
        %vm2256 = vcmp.ge.f32.partialorder %v2198, 0.0
        %vm2257 = vcmp.ge.f32.partialorder %v2203, 0.0
        %vm2258 = vcmp.ge.f32.partialorder %v2206, 0.0
        %vm2259 = vcmp.ge.f32.partialorder %v2211, 0.0
        %vm2260 = vcmp.ge.f32.partialorder %v2214, 0.0
        %vm2261 = vcmp.ge.f32.partialorder %v2219, 0.0
        %vm2262 = vcmp.ge.f32.partialorder %v2222, 0.0
        %vm2263 = vcmp.ge.f32.partialorder %v2227, 0.0
        %vm2264 = vcmp.ge.f32.partialorder %v2230, 0.0
        %v2265 = vmul.f32 %v2107, 0.2
        %v2266 = vmul.f32 %v2110, 0.2
        %v2267 = vmul.f32 %v2115, 0.2
        %v2268 = vmul.f32 %v2118, 0.2
        %v2269 = vmul.f32 %v2123, 0.2
        %v2270 = vmul.f32 %v2126, 0.2
        %v2271 = vmul.f32 %v2131, 0.2
        %v2272 = vmul.f32 %v2134, 0.2
        %v2273 = vmul.f32 %v2139, 0.2
        %v2274 = vmul.f32 %v2142, 0.2
        %v2275 = vmul.f32 %v2147, 0.2
        %v2276 = vmul.f32 %v2150, 0.2
        %v2277 = vmul.f32 %v2155, 0.2
        %v2278 = vmul.f32 %v2158, 0.2
        %v2279 = vmul.f32 %v2163, 0.2
        %v2280 = vmul.f32 %v2166, 0.2
        %v2281 = vmul.f32 %v2171, 0.2
        %v2282 = vmul.f32 %v2174, 0.2
        %v2283 = vmul.f32 %v2179, 0.2
        %v2284 = vmul.f32 %v2182, 0.2
        %v2285 = vmul.f32 %v2187, 0.2
        %v2286 = vmul.f32 %v2190, 0.2
        %v2287 = vmul.f32 %v2195, 0.2
        %v2288 = vmul.f32 %v2198, 0.2
        %v2289 = vmul.f32 %v2203, 0.2
        %v2290 = vmul.f32 %v2206, 0.2
        %v2291 = vmul.f32 %v2211, 0.2
        %v2292 = vmul.f32 %v2214, 0.2
        %v2293 = vmul.f32 %v2219, 0.2
        %v2294 = vmul.f32 %v2222, 0.2
        %v2295 = vmul.f32 %v2227, 0.2
        %v2296 = vmul.f32 %v2230, 0.2
        %v2297 = vsel %vm2233, %v2107, %v2265
        %v2298 = vsel %vm2234, %v2110, %v2266
        %v2299 = vsel %vm2235, %v2115, %v2267
        %v2300 = vsel %vm2236, %v2118, %v2268
        %v2301 = vsel %vm2237, %v2123, %v2269
        %v2302 = vsel %vm2238, %v2126, %v2270
        %v2303 = vsel %vm2239, %v2131, %v2271
        %v2304 = vsel %vm2240, %v2134, %v2272
        %v2305 = vsel %vm2241, %v2139, %v2273
        %v2306 = vsel %vm2242, %v2142, %v2274
        %v2307 = vsel %vm2243, %v2147, %v2275
        %v2308 = vsel %vm2244, %v2150, %v2276
        %v2309 = vsel %vm2245, %v2155, %v2277
        %v2310 = vsel %vm2246, %v2158, %v2278
        %v2311 = vsel %vm2247, %v2163, %v2279
        %v2312 = vsel %vm2248, %v2166, %v2280
        %v2313 = vsel %vm2249, %v2171, %v2281
        %v2314 = vsel %vm2250, %v2174, %v2282
        %v2315 = vsel %vm2251, %v2179, %v2283
        %v2316 = vsel %vm2252, %v2182, %v2284
        %v2317 = vsel %vm2253, %v2187, %v2285
        %v2318 = vsel %vm2254, %v2190, %v2286
        %v2319 = vsel %vm2255, %v2195, %v2287
        %v2320 = vsel %vm2256, %v2198, %v2288
        %v2321 = vsel %vm2257, %v2203, %v2289
        %v2322 = vsel %vm2258, %v2206, %v2290
        %v2323 = vsel %vm2259, %v2211, %v2291
        %v2324 = vsel %vm2260, %v2214, %v2292
        %v2325 = vsel %vm2261, %v2219, %v2293
        %v2326 = vsel %vm2262, %v2222, %v2294
        %v2327 = vsel %vm2263, %v2227, %v2295
        %v2328 = vsel %vm2264, %v2230, %v2296
        %s2329 = scalar_lea.vmem [#allocation3], 24
        %2330 = vst.msk [vmem:[%s2329 + $0x1] sm:$0xff] %vm280, %v2297
        %2331 = vst.msk [vmem:[%s2329 + $0x9] sm:$0xff] %vm280, %v2298
        %2332 = vst.msk [vmem:[%s2329 + $0x19] sm:$0xff] %vm280, %v2299
        %2333 = vst.msk [vmem:[%s2329 + $0x21] sm:$0xff] %vm280, %v2300
        %2334 = vst.msk [vmem:[%s2329 + $0x31] sm:$0xff] %vm280, %v2301
        %2335 = vst.msk [vmem:[%s2329 + $0x39] sm:$0xff] %vm280, %v2302
        %2336 = vst.msk [vmem:[%s2329 + $0x49] sm:$0xff] %vm280, %v2303
        %2337 = vst.msk [vmem:[%s2329 + $0x51] sm:$0xff] %vm280, %v2304
        %2338 = vst.msk [vmem:[%s2329 + $0x61] sm:$0xff] %vm280, %v2305
        %2339 = vst.msk [vmem:[%s2329 + $0x69] sm:$0xff] %vm280, %v2306
        %2340 = vst.msk [vmem:[%s2329 + $0x79] sm:$0xff] %vm280, %v2307
        %2341 = vst.msk [vmem:[%s2329 + $0x81] sm:$0xff] %vm280, %v2308
        %2342 = vst.msk [vmem:[%s2329 + $0x91] sm:$0xff] %vm280, %v2309
        %2343 = vst.msk [vmem:[%s2329 + $0x99] sm:$0xff] %vm280, %v2310
        %2344 = vst.msk [vmem:[%s2329 + $0xa9] sm:$0xff] %vm280, %v2311
        %2345 = vst.msk [vmem:[%s2329 + $0xb1] sm:$0xff] %vm280, %v2312
        %2346 = vst.msk [vmem:[%s2329 + $0xc1] sm:$0xff] %vm280, %v2313
        %2347 = vst.msk [vmem:[%s2329 + $0xc9] sm:$0xff] %vm280, %v2314
        %2348 = vst.msk [vmem:[%s2329 + $0xd9] sm:$0xff] %vm280, %v2315
        %2349 = vst.msk [vmem:[%s2329 + $0xe1] sm:$0xff] %vm280, %v2316
        %2350 = vst.msk [vmem:[%s2329 + $0xf1] sm:$0xff] %vm280, %v2317
        %2351 = vst.msk [vmem:[%s2329 + $0xf9] sm:$0xff] %vm280, %v2318
        %2352 = vst.msk [vmem:[%s2329 + $0x109] sm:$0xff] %vm280, %v2319
        %2353 = vst.msk [vmem:[%s2329 + $0x111] sm:$0xff] %vm280, %v2320
        %2354 = vst.msk [vmem:[%s2329 + $0x121] sm:$0xff] %vm280, %v2321
        %2355 = vst.msk [vmem:[%s2329 + $0x129] sm:$0xff] %vm280, %v2322
        %2356 = vst.msk [vmem:[%s2329 + $0x139] sm:$0xff] %vm280, %v2323
        %2357 = vst.msk [vmem:[%s2329 + $0x141] sm:$0xff] %vm280, %v2324
        %2358 = vst.msk [vmem:[%s2329 + $0x151] sm:$0xff] %vm280, %v2325
        %2359 = vst.msk [vmem:[%s2329 + $0x159] sm:$0xff] %vm280, %v2326
        %2360 = vst.msk [vmem:[%s2329 + $0x169] sm:$0xff] %vm280, %v2327
        %2361 = vst.msk [vmem:[%s2329 + $0x171] sm:$0xff] %vm280, %v2328
        %v2362 = vld [vmem:[#allocation3] sm:$0xff]
        %v2363 = vld [vmem:[#allocation3 + $0x8] sm:$0xff]
        %v2364 = vld [vmem:[#allocation3 + $0x18] sm:$0xff]
        %v2365 = vld [vmem:[#allocation3 + $0x20] sm:$0xff]
        %v2366 = vld [vmem:[#allocation3 + $0x30] sm:$0xff]
        %v2367 = vld [vmem:[#allocation3 + $0x38] sm:$0xff]
        %v2368 = vld [vmem:[#allocation3 + $0x48] sm:$0xff]
        %v2369 = vld [vmem:[#allocation3 + $0x50] sm:$0xff]
        %v2370 = vld [vmem:[#allocation3 + $0x60] sm:$0xff]
        %v2371 = vld [vmem:[#allocation3 + $0x68] sm:$0xff]
        %v2372 = vld [vmem:[#allocation3 + $0x78] sm:$0xff]
        %v2373 = vld [vmem:[#allocation3 + $0x80] sm:$0xff]
        %v2374 = vld [vmem:[#allocation3 + $0x90] sm:$0xff]
        %v2375 = vld [vmem:[#allocation3 + $0x98] sm:$0xff]
        %v2376 = vld [vmem:[#allocation3 + $0xa8] sm:$0xff]
        %v2377 = vld [vmem:[#allocation3 + $0xb0] sm:$0xff]
        %v2378 = vld [vmem:[#allocation3 + $0xc0] sm:$0xff]
        %v2379 = vld [vmem:[#allocation3 + $0xc8] sm:$0xff]
        %v2380 = vld [vmem:[#allocation3 + $0xd8] sm:$0xff]
        %v2381 = vld [vmem:[#allocation3 + $0xe0] sm:$0xff]
        %v2382 = vld [vmem:[#allocation3 + $0xf0] sm:$0xff]
        %v2383 = vld [vmem:[#allocation3 + $0xf8] sm:$0xff]
        %v2384 = vld [vmem:[#allocation3 + $0x108] sm:$0xff]
        %v2385 = vld [vmem:[#allocation3 + $0x110] sm:$0xff]
        %v2386 = vld [vmem:[#allocation3 + $0x120] sm:$0xff]
        %v2387 = vld [vmem:[#allocation3 + $0x128] sm:$0xff]
        %v2388 = vld [vmem:[#allocation3 + $0x138] sm:$0xff]
        %v2389 = vld [vmem:[#allocation3 + $0x140] sm:$0xff]
        %v2390 = vld [vmem:[#allocation3 + $0x150] sm:$0xff]
        %v2391 = vld [vmem:[#allocation3 + $0x158] sm:$0xff]
        %v2392 = vld [vmem:[#allocation3 + $0x168] sm:$0xff]
        %v2393 = vld [vmem:[#allocation3 + $0x170] sm:$0xff]
        %v2394 = vld [vmem:[#allocation3 + $0x1] sm:$0xff]
        %v2395 = vld [vmem:[#allocation3 + $0x9] sm:$0xff]
        %v2396 = vld [vmem:[#allocation3 + $0x19] sm:$0xff]
        %v2397 = vld [vmem:[#allocation3 + $0x21] sm:$0xff]
        %v2398 = vld [vmem:[#allocation3 + $0x31] sm:$0xff]
        %v2399 = vld [vmem:[#allocation3 + $0x39] sm:$0xff]
        %v2400 = vld [vmem:[#allocation3 + $0x49] sm:$0xff]
        %v2401 = vld [vmem:[#allocation3 + $0x51] sm:$0xff]
        %v2402 = vld [vmem:[#allocation3 + $0x61] sm:$0xff]
        %v2403 = vld [vmem:[#allocation3 + $0x69] sm:$0xff]
        %v2404 = vld [vmem:[#allocation3 + $0x79] sm:$0xff]
        %v2405 = vld [vmem:[#allocation3 + $0x81] sm:$0xff]
        %v2406 = vld [vmem:[#allocation3 + $0x91] sm:$0xff]
        %v2407 = vld [vmem:[#allocation3 + $0x99] sm:$0xff]
        %v2408 = vld [vmem:[#allocation3 + $0xa9] sm:$0xff]
        %v2409 = vld [vmem:[#allocation3 + $0xb1] sm:$0xff]
        %v2410 = vld [vmem:[#allocation3 + $0xc1] sm:$0xff]
        %v2411 = vld [vmem:[#allocation3 + $0xc9] sm:$0xff]
        %v2412 = vld [vmem:[#allocation3 + $0xd9] sm:$0xff]
        %v2413 = vld [vmem:[#allocation3 + $0xe1] sm:$0xff]
        %v2414 = vld [vmem:[#allocation3 + $0xf1] sm:$0xff]
        %v2415 = vld [vmem:[#allocation3 + $0xf9] sm:$0xff]
        %v2416 = vld [vmem:[#allocation3 + $0x109] sm:$0xff]
        %v2417 = vld [vmem:[#allocation3 + $0x111] sm:$0xff]
        %v2418 = vld [vmem:[#allocation3 + $0x121] sm:$0xff]
        %v2419 = vld [vmem:[#allocation3 + $0x129] sm:$0xff]
        %v2420 = vld [vmem:[#allocation3 + $0x139] sm:$0xff]
        %v2421 = vld [vmem:[#allocation3 + $0x141] sm:$0xff]
        %v2422 = vld [vmem:[#allocation3 + $0x151] sm:$0xff]
        %v2423 = vld [vmem:[#allocation3 + $0x159] sm:$0xff]
        %v2424 = vld [vmem:[#allocation3 + $0x169] sm:$0xff]
        %v2425 = vld [vmem:[#allocation3 + $0x171] sm:$0xff]
        %v2426 = vld [vmem:[#allocation3 + $0x2] sm:$0xff]
        %v2427 = vld [vmem:[#allocation3 + $0xa] sm:$0xff]
        %v2428 = vld [vmem:[#allocation3 + $0x1a] sm:$0xff]
        %v2429 = vld [vmem:[#allocation3 + $0x22] sm:$0xff]
        %v2430 = vld [vmem:[#allocation3 + $0x32] sm:$0xff]
        %v2431 = vld [vmem:[#allocation3 + $0x3a] sm:$0xff]
        %v2432 = vld [vmem:[#allocation3 + $0x4a] sm:$0xff]
        %v2433 = vld [vmem:[#allocation3 + $0x52] sm:$0xff]
        %v2434 = vld [vmem:[#allocation3 + $0x62] sm:$0xff]
        %v2435 = vld [vmem:[#allocation3 + $0x6a] sm:$0xff]
        %v2436 = vld [vmem:[#allocation3 + $0x7a] sm:$0xff]
        %v2437 = vld [vmem:[#allocation3 + $0x82] sm:$0xff]
        %v2438 = vld [vmem:[#allocation3 + $0x92] sm:$0xff]
        %v2439 = vld [vmem:[#allocation3 + $0x9a] sm:$0xff]
        %v2440 = vld [vmem:[#allocation3 + $0xaa] sm:$0xff]
        %v2441 = vld [vmem:[#allocation3 + $0xb2] sm:$0xff]
        %v2442 = vld [vmem:[#allocation3 + $0xc2] sm:$0xff]
        %v2443 = vld [vmem:[#allocation3 + $0xca] sm:$0xff]
        %v2444 = vld [vmem:[#allocation3 + $0xda] sm:$0xff]
        %v2445 = vld [vmem:[#allocation3 + $0xe2] sm:$0xff]
        %v2446 = vld [vmem:[#allocation3 + $0xf2] sm:$0xff]
        %v2447 = vld [vmem:[#allocation3 + $0xfa] sm:$0xff]
        %v2448 = vld [vmem:[#allocation3 + $0x10a] sm:$0xff]
        %v2449 = vld [vmem:[#allocation3 + $0x112] sm:$0xff]
        %v2450 = vld [vmem:[#allocation3 + $0x122] sm:$0xff]
        %v2451 = vld [vmem:[#allocation3 + $0x12a] sm:$0xff]
        %v2452 = vld [vmem:[#allocation3 + $0x13a] sm:$0xff]
        %v2453 = vld [vmem:[#allocation3 + $0x142] sm:$0xff]
        %v2454 = vld [vmem:[#allocation3 + $0x152] sm:$0xff]
        %v2455 = vld [vmem:[#allocation3 + $0x15a] sm:$0xff]
        %v2456 = vld [vmem:[#allocation3 + $0x16a] sm:$0xff]
        %v2457 = vld [vmem:[#allocation3 + $0x172] sm:$0xff]
        %v2458 = vld [vmem:[%s2329] sm:$0xff]
        %v2459 = vld [vmem:[%s2329 + $0x8] sm:$0xff]
        %v2460 = vld [vmem:[%s2329 + $0x18] sm:$0xff]
        %v2461 = vld [vmem:[%s2329 + $0x20] sm:$0xff]
        %v2462 = vld [vmem:[%s2329 + $0x30] sm:$0xff]
        %v2463 = vld [vmem:[%s2329 + $0x38] sm:$0xff]
        %v2464 = vld [vmem:[%s2329 + $0x48] sm:$0xff]
        %v2465 = vld [vmem:[%s2329 + $0x50] sm:$0xff]
        %v2466 = vld [vmem:[%s2329 + $0x60] sm:$0xff]
        %v2467 = vld [vmem:[%s2329 + $0x68] sm:$0xff]
        %v2468 = vld [vmem:[%s2329 + $0x78] sm:$0xff]
        %v2469 = vld [vmem:[%s2329 + $0x80] sm:$0xff]
        %v2470 = vld [vmem:[%s2329 + $0x90] sm:$0xff]
        %v2471 = vld [vmem:[%s2329 + $0x98] sm:$0xff]
        %v2472 = vld [vmem:[%s2329 + $0xa8] sm:$0xff]
        %v2473 = vld [vmem:[%s2329 + $0xb0] sm:$0xff]
        %v2474 = vld [vmem:[%s2329 + $0xc0] sm:$0xff]
        %v2475 = vld [vmem:[%s2329 + $0xc8] sm:$0xff]
        %v2476 = vld [vmem:[%s2329 + $0xd8] sm:$0xff]
        %v2477 = vld [vmem:[%s2329 + $0xe0] sm:$0xff]
        %v2478 = vld [vmem:[%s2329 + $0xf0] sm:$0xff]
        %v2479 = vld [vmem:[%s2329 + $0xf8] sm:$0xff]
        %v2480 = vld [vmem:[%s2329 + $0x108] sm:$0xff]
        %v2481 = vld [vmem:[%s2329 + $0x110] sm:$0xff]
        %v2482 = vld [vmem:[%s2329 + $0x120] sm:$0xff]
        %v2483 = vld [vmem:[%s2329 + $0x128] sm:$0xff]
        %v2484 = vld [vmem:[%s2329 + $0x138] sm:$0xff]
        %v2485 = vld [vmem:[%s2329 + $0x140] sm:$0xff]
        %v2486 = vld [vmem:[%s2329 + $0x150] sm:$0xff]
        %v2487 = vld [vmem:[%s2329 + $0x158] sm:$0xff]
        %v2488 = vld [vmem:[%s2329 + $0x168] sm:$0xff]
        %v2489 = vld [vmem:[%s2329 + $0x170] sm:$0xff]
        %v2490 = vld [vmem:[%s2329 + $0x1] sm:$0xff]
        %v2491 = vld [vmem:[%s2329 + $0x9] sm:$0xff]
        %v2492 = vld [vmem:[%s2329 + $0x19] sm:$0xff]
        %v2493 = vld [vmem:[%s2329 + $0x21] sm:$0xff]
        %v2494 = vld [vmem:[%s2329 + $0x31] sm:$0xff]
        %v2495 = vld [vmem:[%s2329 + $0x39] sm:$0xff]
        %v2496 = vld [vmem:[%s2329 + $0x49] sm:$0xff]
        %v2497 = vld [vmem:[%s2329 + $0x51] sm:$0xff]
        %v2498 = vld [vmem:[%s2329 + $0x61] sm:$0xff]
        %v2499 = vld [vmem:[%s2329 + $0x69] sm:$0xff]
        %v2500 = vld [vmem:[%s2329 + $0x79] sm:$0xff]
        %v2501 = vld [vmem:[%s2329 + $0x81] sm:$0xff]
        %v2502 = vld [vmem:[%s2329 + $0x91] sm:$0xff]
        %v2503 = vld [vmem:[%s2329 + $0x99] sm:$0xff]
        %v2504 = vld [vmem:[%s2329 + $0xa9] sm:$0xff]
        %v2505 = vld [vmem:[%s2329 + $0xb1] sm:$0xff]
        %v2506 = vld [vmem:[%s2329 + $0xc1] sm:$0xff]
        %v2507 = vld [vmem:[%s2329 + $0xc9] sm:$0xff]
        %v2508 = vld [vmem:[%s2329 + $0xd9] sm:$0xff]
        %v2509 = vld [vmem:[%s2329 + $0xe1] sm:$0xff]
        %v2510 = vld [vmem:[%s2329 + $0xf1] sm:$0xff]
        %v2511 = vld [vmem:[%s2329 + $0xf9] sm:$0xff]
        %v2512 = vld [vmem:[%s2329 + $0x109] sm:$0xff]
        %v2513 = vld [vmem:[%s2329 + $0x111] sm:$0xff]
        %v2514 = vld [vmem:[%s2329 + $0x121] sm:$0xff]
        %v2515 = vld [vmem:[%s2329 + $0x129] sm:$0xff]
        %v2516 = vld [vmem:[%s2329 + $0x139] sm:$0xff]
        %v2517 = vld [vmem:[%s2329 + $0x141] sm:$0xff]
        %v2518 = vld [vmem:[%s2329 + $0x151] sm:$0xff]
        %v2519 = vld [vmem:[%s2329 + $0x159] sm:$0xff]
        %v2520 = vld [vmem:[%s2329 + $0x169] sm:$0xff]
        %v2521 = vld [vmem:[%s2329 + $0x171] sm:$0xff]
        %v2522 = vld [vmem:[%s2329 + $0x2] sm:$0xff]
        %v2523 = vld [vmem:[%s2329 + $0xa] sm:$0xff]
        %v2524 = vld [vmem:[%s2329 + $0x1a] sm:$0xff]
        %v2525 = vld [vmem:[%s2329 + $0x22] sm:$0xff]
        %v2526 = vld [vmem:[%s2329 + $0x32] sm:$0xff]
        %v2527 = vld [vmem:[%s2329 + $0x3a] sm:$0xff]
        %v2528 = vld [vmem:[%s2329 + $0x4a] sm:$0xff]
        %v2529 = vld [vmem:[%s2329 + $0x52] sm:$0xff]
        %v2530 = vld [vmem:[%s2329 + $0x62] sm:$0xff]
        %v2531 = vld [vmem:[%s2329 + $0x6a] sm:$0xff]
        %v2532 = vld [vmem:[%s2329 + $0x7a] sm:$0xff]
        %v2533 = vld [vmem:[%s2329 + $0x82] sm:$0xff]
        %v2534 = vld [vmem:[%s2329 + $0x92] sm:$0xff]
        %v2535 = vld [vmem:[%s2329 + $0x9a] sm:$0xff]
        %v2536 = vld [vmem:[%s2329 + $0xaa] sm:$0xff]
        %v2537 = vld [vmem:[%s2329 + $0xb2] sm:$0xff]
        %v2538 = vld [vmem:[%s2329 + $0xc2] sm:$0xff]
        %v2539 = vld [vmem:[%s2329 + $0xca] sm:$0xff]
        %v2540 = vld [vmem:[%s2329 + $0xda] sm:$0xff]
        %v2541 = vld [vmem:[%s2329 + $0xe2] sm:$0xff]
        %v2542 = vld [vmem:[%s2329 + $0xf2] sm:$0xff]
        %v2543 = vld [vmem:[%s2329 + $0xfa] sm:$0xff]
        %v2544 = vld [vmem:[%s2329 + $0x10a] sm:$0xff]
        %v2545 = vld [vmem:[%s2329 + $0x112] sm:$0xff]
        %v2546 = vld [vmem:[%s2329 + $0x122] sm:$0xff]
        %v2547 = vld [vmem:[%s2329 + $0x12a] sm:$0xff]
        %v2548 = vld [vmem:[%s2329 + $0x13a] sm:$0xff]
        %v2549 = vld [vmem:[%s2329 + $0x142] sm:$0xff]
        %v2550 = vld [vmem:[%s2329 + $0x152] sm:$0xff]
        %v2551 = vld [vmem:[%s2329 + $0x15a] sm:$0xff]
        %v2552 = vld [vmem:[%s2329 + $0x16a] sm:$0xff]
        %v2553 = vld [vmem:[%s2329 + $0x172] sm:$0xff]
        %s2554 = scalar_lea.vmem [#allocation3], 48
        %v2555 = vld [vmem:[%s2554] sm:$0xff]
        %v2556 = vld [vmem:[%s2554 + $0x8] sm:$0xff]
        %v2557 = vld [vmem:[%s2554 + $0x18] sm:$0xff]
        %v2558 = vld [vmem:[%s2554 + $0x20] sm:$0xff]
        %v2559 = vld [vmem:[%s2554 + $0x30] sm:$0xff]
        %v2560 = vld [vmem:[%s2554 + $0x38] sm:$0xff]
        %v2561 = vld [vmem:[%s2554 + $0x48] sm:$0xff]
        %v2562 = vld [vmem:[%s2554 + $0x50] sm:$0xff]
        %v2563 = vld [vmem:[%s2554 + $0x60] sm:$0xff]
        %v2564 = vld [vmem:[%s2554 + $0x68] sm:$0xff]
        %v2565 = vld [vmem:[%s2554 + $0x78] sm:$0xff]
        %v2566 = vld [vmem:[%s2554 + $0x80] sm:$0xff]
        %v2567 = vld [vmem:[%s2554 + $0x90] sm:$0xff]
        %v2568 = vld [vmem:[%s2554 + $0x98] sm:$0xff]
        %v2569 = vld [vmem:[%s2554 + $0xa8] sm:$0xff]
        %v2570 = vld [vmem:[%s2554 + $0xb0] sm:$0xff]
        %v2571 = vld [vmem:[%s2554 + $0xc0] sm:$0xff]
        %v2572 = vld [vmem:[%s2554 + $0xc8] sm:$0xff]
        %v2573 = vld [vmem:[%s2554 + $0xd8] sm:$0xff]
        %v2574 = vld [vmem:[%s2554 + $0xe0] sm:$0xff]
        %v2575 = vld [vmem:[%s2554 + $0xf0] sm:$0xff]
        %v2576 = vld [vmem:[%s2554 + $0xf8] sm:$0xff]
        %v2577 = vld [vmem:[%s2554 + $0x108] sm:$0xff]
        %v2578 = vld [vmem:[%s2554 + $0x110] sm:$0xff]
        %v2579 = vld [vmem:[%s2554 + $0x120] sm:$0xff]
        %v2580 = vld [vmem:[%s2554 + $0x128] sm:$0xff]
        %v2581 = vld [vmem:[%s2554 + $0x138] sm:$0xff]
        %v2582 = vld [vmem:[%s2554 + $0x140] sm:$0xff]
        %v2583 = vld [vmem:[%s2554 + $0x150] sm:$0xff]
        %v2584 = vld [vmem:[%s2554 + $0x158] sm:$0xff]
        %v2585 = vld [vmem:[%s2554 + $0x168] sm:$0xff]
        %v2586 = vld [vmem:[%s2554 + $0x170] sm:$0xff]
        %v2587 = vld [vmem:[%s2554 + $0x1] sm:$0xff]
        %v2588 = vld [vmem:[%s2554 + $0x9] sm:$0xff]
        %v2589 = vld [vmem:[%s2554 + $0x19] sm:$0xff]
        %v2590 = vld [vmem:[%s2554 + $0x21] sm:$0xff]
        %v2591 = vld [vmem:[%s2554 + $0x31] sm:$0xff]
        %v2592 = vld [vmem:[%s2554 + $0x39] sm:$0xff]
        %v2593 = vld [vmem:[%s2554 + $0x49] sm:$0xff]
        %v2594 = vld [vmem:[%s2554 + $0x51] sm:$0xff]
        %v2595 = vld [vmem:[%s2554 + $0x61] sm:$0xff]
        %v2596 = vld [vmem:[%s2554 + $0x69] sm:$0xff]
        %v2597 = vld [vmem:[%s2554 + $0x79] sm:$0xff]
        %v2598 = vld [vmem:[%s2554 + $0x81] sm:$0xff]
        %v2599 = vld [vmem:[%s2554 + $0x91] sm:$0xff]
        %v2600 = vld [vmem:[%s2554 + $0x99] sm:$0xff]
        %v2601 = vld [vmem:[%s2554 + $0xa9] sm:$0xff]
        %v2602 = vld [vmem:[%s2554 + $0xb1] sm:$0xff]
        %v2603 = vld [vmem:[%s2554 + $0xc1] sm:$0xff]
        %v2604 = vld [vmem:[%s2554 + $0xc9] sm:$0xff]
        %v2605 = vld [vmem:[%s2554 + $0xd9] sm:$0xff]
        %v2606 = vld [vmem:[%s2554 + $0xe1] sm:$0xff]
        %v2607 = vld [vmem:[%s2554 + $0xf1] sm:$0xff]
        %v2608 = vld [vmem:[%s2554 + $0xf9] sm:$0xff]
        %v2609 = vld [vmem:[%s2554 + $0x109] sm:$0xff]
        %v2610 = vld [vmem:[%s2554 + $0x111] sm:$0xff]
        %v2611 = vld [vmem:[%s2554 + $0x121] sm:$0xff]
        %v2612 = vld [vmem:[%s2554 + $0x129] sm:$0xff]
        %v2613 = vld [vmem:[%s2554 + $0x139] sm:$0xff]
        %v2614 = vld [vmem:[%s2554 + $0x141] sm:$0xff]
        %v2615 = vld [vmem:[%s2554 + $0x151] sm:$0xff]
        %v2616 = vld [vmem:[%s2554 + $0x159] sm:$0xff]
        %v2617 = vld [vmem:[%s2554 + $0x169] sm:$0xff]
        %v2618 = vld [vmem:[%s2554 + $0x171] sm:$0xff]
        %v2619 = vld [vmem:[%s2554 + $0x2] sm:$0xff]
        %v2620 = vld [vmem:[%s2554 + $0xa] sm:$0xff]
        %v2621 = vld [vmem:[%s2554 + $0x1a] sm:$0xff]
        %v2622 = vld [vmem:[%s2554 + $0x22] sm:$0xff]
        %v2623 = vld [vmem:[%s2554 + $0x32] sm:$0xff]
        %v2624 = vld [vmem:[%s2554 + $0x3a] sm:$0xff]
        %v2625 = vld [vmem:[%s2554 + $0x4a] sm:$0xff]
        %v2626 = vld [vmem:[%s2554 + $0x52] sm:$0xff]
        %v2627 = vld [vmem:[%s2554 + $0x62] sm:$0xff]
        %v2628 = vld [vmem:[%s2554 + $0x6a] sm:$0xff]
        %v2629 = vld [vmem:[%s2554 + $0x7a] sm:$0xff]
        %v2630 = vld [vmem:[%s2554 + $0x82] sm:$0xff]
        %v2631 = vld [vmem:[%s2554 + $0x92] sm:$0xff]
        %v2632 = vld [vmem:[%s2554 + $0x9a] sm:$0xff]
        %v2633 = vld [vmem:[%s2554 + $0xaa] sm:$0xff]
        %v2634 = vld [vmem:[%s2554 + $0xb2] sm:$0xff]
        %v2635 = vld [vmem:[%s2554 + $0xc2] sm:$0xff]
        %v2636 = vld [vmem:[%s2554 + $0xca] sm:$0xff]
        %v2637 = vld [vmem:[%s2554 + $0xda] sm:$0xff]
        %v2638 = vld [vmem:[%s2554 + $0xe2] sm:$0xff]
        %v2639 = vld [vmem:[%s2554 + $0xf2] sm:$0xff]
        %v2640 = vld [vmem:[%s2554 + $0xfa] sm:$0xff]
        %v2641 = vld [vmem:[%s2554 + $0x10a] sm:$0xff]
        %v2642 = vld [vmem:[%s2554 + $0x112] sm:$0xff]
        %v2643 = vld [vmem:[%s2554 + $0x122] sm:$0xff]
        %v2644 = vld [vmem:[%s2554 + $0x12a] sm:$0xff]
        %v2645 = vld [vmem:[%s2554 + $0x13a] sm:$0xff]
        %v2646 = vld [vmem:[%s2554 + $0x142] sm:$0xff]
        %v2647 = vld [vmem:[%s2554 + $0x152] sm:$0xff]
        %v2648 = vld [vmem:[%s2554 + $0x15a] sm:$0xff]
        %v2649 = vld [vmem:[%s2554 + $0x16a] sm:$0xff]
        %v2650 = vld [vmem:[%s2554 + $0x172] sm:$0xff]
        %2683 = vrot.lane.b32.xlu0 %v2394, 16
        %v2684 = vpop.permute.xlu0 %2683
        %2685 = vrot.lane.b32.xlu0 %v2395, 16
        %v2686 = vpop.permute.xlu0 %2685
        %2687 = vrot.lane.b32.xlu0 %v2396, 16
        %v2688 = vpop.permute.xlu0 %2687
        %2689 = vrot.lane.b32.xlu0 %v2397, 16
        %v2690 = vpop.permute.xlu0 %2689
        %2691 = vrot.lane.b32.xlu0 %v2398, 16
        %v2692 = vpop.permute.xlu0 %2691
        %2693 = vrot.lane.b32.xlu0 %v2399, 16
        %v2694 = vpop.permute.xlu0 %2693
        %2695 = vrot.lane.b32.xlu0 %v2400, 16
        %v2696 = vpop.permute.xlu0 %2695
        %2697 = vrot.lane.b32.xlu0 %v2401, 16
        %v2698 = vpop.permute.xlu0 %2697
        %2699 = vrot.lane.b32.xlu0 %v2402, 16
        %v2700 = vpop.permute.xlu0 %2699
        %2701 = vrot.lane.b32.xlu0 %v2403, 16
        %v2702 = vpop.permute.xlu0 %2701
        %2703 = vrot.lane.b32.xlu0 %v2404, 16
        %v2704 = vpop.permute.xlu0 %2703
        %2705 = vrot.lane.b32.xlu0 %v2405, 16
        %v2706 = vpop.permute.xlu0 %2705
        %2707 = vrot.lane.b32.xlu0 %v2406, 16
        %v2708 = vpop.permute.xlu0 %2707
        %2709 = vrot.lane.b32.xlu0 %v2407, 16
        %v2710 = vpop.permute.xlu0 %2709
        %2711 = vrot.lane.b32.xlu0 %v2408, 16
        %v2712 = vpop.permute.xlu0 %2711
        %2713 = vrot.lane.b32.xlu0 %v2409, 16
        %v2714 = vpop.permute.xlu0 %2713
        %2715 = vrot.lane.b32.xlu0 %v2410, 16
        %v2716 = vpop.permute.xlu0 %2715
        %2717 = vrot.lane.b32.xlu0 %v2411, 16
        %v2718 = vpop.permute.xlu0 %2717
        %2719 = vrot.lane.b32.xlu0 %v2412, 16
        %v2720 = vpop.permute.xlu0 %2719
        %2721 = vrot.lane.b32.xlu0 %v2413, 16
        %v2722 = vpop.permute.xlu0 %2721
        %2723 = vrot.lane.b32.xlu0 %v2414, 16
        %v2724 = vpop.permute.xlu0 %2723
        %2725 = vrot.lane.b32.xlu0 %v2415, 16
        %v2726 = vpop.permute.xlu0 %2725
        %2727 = vrot.lane.b32.xlu0 %v2416, 16
        %v2728 = vpop.permute.xlu0 %2727
        %2729 = vrot.lane.b32.xlu0 %v2417, 16
        %v2730 = vpop.permute.xlu0 %2729
        %2731 = vrot.lane.b32.xlu0 %v2418, 16
        %v2732 = vpop.permute.xlu0 %2731
        %2733 = vrot.lane.b32.xlu0 %v2419, 16
        %v2734 = vpop.permute.xlu0 %2733
        %2735 = vrot.lane.b32.xlu0 %v2420, 16
        %v2736 = vpop.permute.xlu0 %2735
        %2737 = vrot.lane.b32.xlu0 %v2421, 16
        %v2738 = vpop.permute.xlu0 %2737
        %2739 = vrot.lane.b32.xlu0 %v2422, 16
        %v2740 = vpop.permute.xlu0 %2739
        %2741 = vrot.lane.b32.xlu0 %v2423, 16
        %v2742 = vpop.permute.xlu0 %2741
        %2743 = vrot.lane.b32.xlu0 %v2424, 16
        %v2744 = vpop.permute.xlu0 %2743
        %2745 = vrot.lane.b32.xlu0 %v2425, 16
        %v2746 = vpop.permute.xlu0 %2745
        %2811 = vrot.lane.b32.xlu0 %v2426, 32
        %v2812 = vpop.permute.xlu0 %2811
        %2813 = vrot.lane.b32.xlu0 %v2427, 32
        %v2814 = vpop.permute.xlu0 %2813
        %2815 = vrot.lane.b32.xlu0 %v2428, 32
        %v2816 = vpop.permute.xlu0 %2815
        %2817 = vrot.lane.b32.xlu0 %v2429, 32
        %v2818 = vpop.permute.xlu0 %2817
        %2819 = vrot.lane.b32.xlu0 %v2430, 32
        %v2820 = vpop.permute.xlu0 %2819
        %2821 = vrot.lane.b32.xlu0 %v2431, 32
        %v2822 = vpop.permute.xlu0 %2821
        %2823 = vrot.lane.b32.xlu0 %v2432, 32
        %v2824 = vpop.permute.xlu0 %2823
        %2825 = vrot.lane.b32.xlu0 %v2433, 32
        %v2826 = vpop.permute.xlu0 %2825
        %2827 = vrot.lane.b32.xlu0 %v2434, 32
        %v2828 = vpop.permute.xlu0 %2827
        %2829 = vrot.lane.b32.xlu0 %v2435, 32
        %v2830 = vpop.permute.xlu0 %2829
        %2831 = vrot.lane.b32.xlu0 %v2436, 32
        %v2832 = vpop.permute.xlu0 %2831
        %2833 = vrot.lane.b32.xlu0 %v2437, 32
        %v2834 = vpop.permute.xlu0 %2833
        %2835 = vrot.lane.b32.xlu0 %v2438, 32
        %v2836 = vpop.permute.xlu0 %2835
        %2837 = vrot.lane.b32.xlu0 %v2439, 32
        %v2838 = vpop.permute.xlu0 %2837
        %2839 = vrot.lane.b32.xlu0 %v2440, 32
        %v2840 = vpop.permute.xlu0 %2839
        %2841 = vrot.lane.b32.xlu0 %v2441, 32
        %v2842 = vpop.permute.xlu0 %2841
        %2843 = vrot.lane.b32.xlu0 %v2442, 32
        %v2844 = vpop.permute.xlu0 %2843
        %2845 = vrot.lane.b32.xlu0 %v2443, 32
        %v2846 = vpop.permute.xlu0 %2845
        %2847 = vrot.lane.b32.xlu0 %v2444, 32
        %v2848 = vpop.permute.xlu0 %2847
        %2849 = vrot.lane.b32.xlu0 %v2445, 32
        %v2850 = vpop.permute.xlu0 %2849
        %2851 = vrot.lane.b32.xlu0 %v2446, 32
        %v2852 = vpop.permute.xlu0 %2851
        %2853 = vrot.lane.b32.xlu0 %v2447, 32
        %v2854 = vpop.permute.xlu0 %2853
        %2855 = vrot.lane.b32.xlu0 %v2448, 32
        %v2856 = vpop.permute.xlu0 %2855
        %2857 = vrot.lane.b32.xlu0 %v2449, 32
        %v2858 = vpop.permute.xlu0 %2857
        %2859 = vrot.lane.b32.xlu0 %v2450, 32
        %v2860 = vpop.permute.xlu0 %2859
        %2861 = vrot.lane.b32.xlu0 %v2451, 32
        %v2862 = vpop.permute.xlu0 %2861
        %2863 = vrot.lane.b32.xlu0 %v2452, 32
        %v2864 = vpop.permute.xlu0 %2863
        %2865 = vrot.lane.b32.xlu0 %v2453, 32
        %v2866 = vpop.permute.xlu0 %2865
        %2867 = vrot.lane.b32.xlu0 %v2454, 32
        %v2868 = vpop.permute.xlu0 %2867
        %2869 = vrot.lane.b32.xlu0 %v2455, 32
        %v2870 = vpop.permute.xlu0 %2869
        %2871 = vrot.lane.b32.xlu0 %v2456, 32
        %v2872 = vpop.permute.xlu0 %2871
        %2873 = vrot.lane.b32.xlu0 %v2457, 32
        %v2874 = vpop.permute.xlu0 %2873
        %2939 = vrot.lane.b32.xlu0 %v2458, 48
        %v2940 = vpop.permute.xlu0 %2939
        %2941 = vrot.lane.b32.xlu0 %v2459, 48
        %v2942 = vpop.permute.xlu0 %2941
        %2943 = vrot.lane.b32.xlu0 %v2460, 48
        %v2944 = vpop.permute.xlu0 %2943
        %2945 = vrot.lane.b32.xlu0 %v2461, 48
        %v2946 = vpop.permute.xlu0 %2945
        %2947 = vrot.lane.b32.xlu0 %v2462, 48
        %v2948 = vpop.permute.xlu0 %2947
        %2949 = vrot.lane.b32.xlu0 %v2463, 48
        %v2950 = vpop.permute.xlu0 %2949
        %2951 = vrot.lane.b32.xlu0 %v2464, 48
        %v2952 = vpop.permute.xlu0 %2951
        %2953 = vrot.lane.b32.xlu0 %v2465, 48
        %v2954 = vpop.permute.xlu0 %2953
        %2955 = vrot.lane.b32.xlu0 %v2466, 48
        %v2956 = vpop.permute.xlu0 %2955
        %2957 = vrot.lane.b32.xlu0 %v2467, 48
        %v2958 = vpop.permute.xlu0 %2957
        %2959 = vrot.lane.b32.xlu0 %v2468, 48
        %v2960 = vpop.permute.xlu0 %2959
        %2961 = vrot.lane.b32.xlu0 %v2469, 48
        %v2962 = vpop.permute.xlu0 %2961
        %2963 = vrot.lane.b32.xlu0 %v2470, 48
        %v2964 = vpop.permute.xlu0 %2963
        %2965 = vrot.lane.b32.xlu0 %v2471, 48
        %v2966 = vpop.permute.xlu0 %2965
        %2967 = vrot.lane.b32.xlu0 %v2472, 48
        %v2968 = vpop.permute.xlu0 %2967
        %2969 = vrot.lane.b32.xlu0 %v2473, 48
        %v2970 = vpop.permute.xlu0 %2969
        %2971 = vrot.lane.b32.xlu0 %v2474, 48
        %v2972 = vpop.permute.xlu0 %2971
        %2973 = vrot.lane.b32.xlu0 %v2475, 48
        %v2974 = vpop.permute.xlu0 %2973
        %2975 = vrot.lane.b32.xlu0 %v2476, 48
        %v2976 = vpop.permute.xlu0 %2975
        %2977 = vrot.lane.b32.xlu0 %v2477, 48
        %v2978 = vpop.permute.xlu0 %2977
        %2979 = vrot.lane.b32.xlu0 %v2478, 48
        %v2980 = vpop.permute.xlu0 %2979
        %2981 = vrot.lane.b32.xlu0 %v2479, 48
        %v2982 = vpop.permute.xlu0 %2981
        %2983 = vrot.lane.b32.xlu0 %v2480, 48
        %v2984 = vpop.permute.xlu0 %2983
        %2985 = vrot.lane.b32.xlu0 %v2481, 48
        %v2986 = vpop.permute.xlu0 %2985
        %2987 = vrot.lane.b32.xlu0 %v2482, 48
        %v2988 = vpop.permute.xlu0 %2987
        %2989 = vrot.lane.b32.xlu0 %v2483, 48
        %v2990 = vpop.permute.xlu0 %2989
        %2991 = vrot.lane.b32.xlu0 %v2484, 48
        %v2992 = vpop.permute.xlu0 %2991
        %2993 = vrot.lane.b32.xlu0 %v2485, 48
        %v2994 = vpop.permute.xlu0 %2993
        %2995 = vrot.lane.b32.xlu0 %v2486, 48
        %v2996 = vpop.permute.xlu0 %2995
        %2997 = vrot.lane.b32.xlu0 %v2487, 48
        %v2998 = vpop.permute.xlu0 %2997
        %2999 = vrot.lane.b32.xlu0 %v2488, 48
        %v3000 = vpop.permute.xlu0 %2999
        %3001 = vrot.lane.b32.xlu0 %v2489, 48
        %v3002 = vpop.permute.xlu0 %3001
        %3067 = vrot.lane.b32.xlu0 %v2490, 64
        %v3068 = vpop.permute.xlu0 %3067
        %3069 = vrot.lane.b32.xlu0 %v2491, 64
        %v3070 = vpop.permute.xlu0 %3069
        %3071 = vrot.lane.b32.xlu0 %v2492, 64
        %v3072 = vpop.permute.xlu0 %3071
        %3073 = vrot.lane.b32.xlu0 %v2493, 64
        %v3074 = vpop.permute.xlu0 %3073
        %3075 = vrot.lane.b32.xlu0 %v2494, 64
        %v3076 = vpop.permute.xlu0 %3075
        %3077 = vrot.lane.b32.xlu0 %v2495, 64
        %v3078 = vpop.permute.xlu0 %3077
        %3079 = vrot.lane.b32.xlu0 %v2496, 64
        %v3080 = vpop.permute.xlu0 %3079
        %3081 = vrot.lane.b32.xlu0 %v2497, 64
        %v3082 = vpop.permute.xlu0 %3081
        %3083 = vrot.lane.b32.xlu0 %v2498, 64
        %v3084 = vpop.permute.xlu0 %3083
        %3085 = vrot.lane.b32.xlu0 %v2499, 64
        %v3086 = vpop.permute.xlu0 %3085
        %3087 = vrot.lane.b32.xlu0 %v2500, 64
        %v3088 = vpop.permute.xlu0 %3087
        %3089 = vrot.lane.b32.xlu0 %v2501, 64
        %v3090 = vpop.permute.xlu0 %3089
        %3091 = vrot.lane.b32.xlu0 %v2502, 64
        %v3092 = vpop.permute.xlu0 %3091
        %3093 = vrot.lane.b32.xlu0 %v2503, 64
        %v3094 = vpop.permute.xlu0 %3093
        %3095 = vrot.lane.b32.xlu0 %v2504, 64
        %v3096 = vpop.permute.xlu0 %3095
        %3097 = vrot.lane.b32.xlu0 %v2505, 64
        %v3098 = vpop.permute.xlu0 %3097
        %3099 = vrot.lane.b32.xlu0 %v2506, 64
        %v3100 = vpop.permute.xlu0 %3099
        %3101 = vrot.lane.b32.xlu0 %v2507, 64
        %v3102 = vpop.permute.xlu0 %3101
        %3103 = vrot.lane.b32.xlu0 %v2508, 64
        %v3104 = vpop.permute.xlu0 %3103
        %3105 = vrot.lane.b32.xlu0 %v2509, 64
        %v3106 = vpop.permute.xlu0 %3105
        %3107 = vrot.lane.b32.xlu0 %v2510, 64
        %v3108 = vpop.permute.xlu0 %3107
        %3109 = vrot.lane.b32.xlu0 %v2511, 64
        %v3110 = vpop.permute.xlu0 %3109
        %3111 = vrot.lane.b32.xlu0 %v2512, 64
        %v3112 = vpop.permute.xlu0 %3111
        %3113 = vrot.lane.b32.xlu0 %v2513, 64
        %v3114 = vpop.permute.xlu0 %3113
        %3115 = vrot.lane.b32.xlu0 %v2514, 64
        %v3116 = vpop.permute.xlu0 %3115
        %3117 = vrot.lane.b32.xlu0 %v2515, 64
        %v3118 = vpop.permute.xlu0 %3117
        %3119 = vrot.lane.b32.xlu0 %v2516, 64
        %v3120 = vpop.permute.xlu0 %3119
        %3121 = vrot.lane.b32.xlu0 %v2517, 64
        %v3122 = vpop.permute.xlu0 %3121
        %3123 = vrot.lane.b32.xlu0 %v2518, 64
        %v3124 = vpop.permute.xlu0 %3123
        %3125 = vrot.lane.b32.xlu0 %v2519, 64
        %v3126 = vpop.permute.xlu0 %3125
        %3127 = vrot.lane.b32.xlu0 %v2520, 64
        %v3128 = vpop.permute.xlu0 %3127
        %3129 = vrot.lane.b32.xlu0 %v2521, 64
        %v3130 = vpop.permute.xlu0 %3129
        %3195 = vrot.lane.b32.xlu0 %v2522, 80
        %v3196 = vpop.permute.xlu0 %3195
        %3197 = vrot.lane.b32.xlu0 %v2523, 80
        %v3198 = vpop.permute.xlu0 %3197
        %3199 = vrot.lane.b32.xlu0 %v2524, 80
        %v3200 = vpop.permute.xlu0 %3199
        %3201 = vrot.lane.b32.xlu0 %v2525, 80
        %v3202 = vpop.permute.xlu0 %3201
        %3203 = vrot.lane.b32.xlu0 %v2526, 80
        %v3204 = vpop.permute.xlu0 %3203
        %3205 = vrot.lane.b32.xlu0 %v2527, 80
        %v3206 = vpop.permute.xlu0 %3205
        %3207 = vrot.lane.b32.xlu0 %v2528, 80
        %v3208 = vpop.permute.xlu0 %3207
        %3209 = vrot.lane.b32.xlu0 %v2529, 80
        %v3210 = vpop.permute.xlu0 %3209
        %3211 = vrot.lane.b32.xlu0 %v2530, 80
        %v3212 = vpop.permute.xlu0 %3211
        %3213 = vrot.lane.b32.xlu0 %v2531, 80
        %v3214 = vpop.permute.xlu0 %3213
        %3215 = vrot.lane.b32.xlu0 %v2532, 80
        %v3216 = vpop.permute.xlu0 %3215
        %3217 = vrot.lane.b32.xlu0 %v2533, 80
        %v3218 = vpop.permute.xlu0 %3217
        %3219 = vrot.lane.b32.xlu0 %v2534, 80
        %v3220 = vpop.permute.xlu0 %3219
        %3221 = vrot.lane.b32.xlu0 %v2535, 80
        %v3222 = vpop.permute.xlu0 %3221
        %3223 = vrot.lane.b32.xlu0 %v2536, 80
        %v3224 = vpop.permute.xlu0 %3223
        %3225 = vrot.lane.b32.xlu0 %v2537, 80
        %v3226 = vpop.permute.xlu0 %3225
        %3227 = vrot.lane.b32.xlu0 %v2538, 80
        %v3228 = vpop.permute.xlu0 %3227
        %3229 = vrot.lane.b32.xlu0 %v2539, 80
        %v3230 = vpop.permute.xlu0 %3229
        %3231 = vrot.lane.b32.xlu0 %v2540, 80
        %v3232 = vpop.permute.xlu0 %3231
        %3233 = vrot.lane.b32.xlu0 %v2541, 80
        %v3234 = vpop.permute.xlu0 %3233
        %3235 = vrot.lane.b32.xlu0 %v2542, 80
        %v3236 = vpop.permute.xlu0 %3235
        %3237 = vrot.lane.b32.xlu0 %v2543, 80
        %v3238 = vpop.permute.xlu0 %3237
        %3239 = vrot.lane.b32.xlu0 %v2544, 80
        %v3240 = vpop.permute.xlu0 %3239
        %3241 = vrot.lane.b32.xlu0 %v2545, 80
        %v3242 = vpop.permute.xlu0 %3241
        %3243 = vrot.lane.b32.xlu0 %v2546, 80
        %v3244 = vpop.permute.xlu0 %3243
        %3245 = vrot.lane.b32.xlu0 %v2547, 80
        %v3246 = vpop.permute.xlu0 %3245
        %3247 = vrot.lane.b32.xlu0 %v2548, 80
        %v3248 = vpop.permute.xlu0 %3247
        %3249 = vrot.lane.b32.xlu0 %v2549, 80
        %v3250 = vpop.permute.xlu0 %3249
        %3251 = vrot.lane.b32.xlu0 %v2550, 80
        %v3252 = vpop.permute.xlu0 %3251
        %3253 = vrot.lane.b32.xlu0 %v2551, 80
        %v3254 = vpop.permute.xlu0 %3253
        %3255 = vrot.lane.b32.xlu0 %v2552, 80
        %v3256 = vpop.permute.xlu0 %3255
        %3257 = vrot.lane.b32.xlu0 %v2553, 80
        %v3258 = vpop.permute.xlu0 %3257
        %3323 = vrot.lane.b32.xlu0 %v2555, 96
        %v3324 = vpop.permute.xlu0 %3323
        %3325 = vrot.lane.b32.xlu0 %v2556, 96
        %v3326 = vpop.permute.xlu0 %3325
        %3327 = vrot.lane.b32.xlu0 %v2557, 96
        %v3328 = vpop.permute.xlu0 %3327
        %3329 = vrot.lane.b32.xlu0 %v2558, 96
        %v3330 = vpop.permute.xlu0 %3329
        %3331 = vrot.lane.b32.xlu0 %v2559, 96
        %v3332 = vpop.permute.xlu0 %3331
        %3333 = vrot.lane.b32.xlu0 %v2560, 96
        %v3334 = vpop.permute.xlu0 %3333
        %3335 = vrot.lane.b32.xlu0 %v2561, 96
        %v3336 = vpop.permute.xlu0 %3335
        %3337 = vrot.lane.b32.xlu0 %v2562, 96
        %v3338 = vpop.permute.xlu0 %3337
        %3339 = vrot.lane.b32.xlu0 %v2563, 96
        %v3340 = vpop.permute.xlu0 %3339
        %3341 = vrot.lane.b32.xlu0 %v2564, 96
        %v3342 = vpop.permute.xlu0 %3341
        %3343 = vrot.lane.b32.xlu0 %v2565, 96
        %v3344 = vpop.permute.xlu0 %3343
        %3345 = vrot.lane.b32.xlu0 %v2566, 96
        %v3346 = vpop.permute.xlu0 %3345
        %3347 = vrot.lane.b32.xlu0 %v2567, 96
        %v3348 = vpop.permute.xlu0 %3347
        %3349 = vrot.lane.b32.xlu0 %v2568, 96
        %v3350 = vpop.permute.xlu0 %3349
        %3351 = vrot.lane.b32.xlu0 %v2569, 96
        %v3352 = vpop.permute.xlu0 %3351
        %3353 = vrot.lane.b32.xlu0 %v2570, 96
        %v3354 = vpop.permute.xlu0 %3353
        %3355 = vrot.lane.b32.xlu0 %v2571, 96
        %v3356 = vpop.permute.xlu0 %3355
        %3357 = vrot.lane.b32.xlu0 %v2572, 96
        %v3358 = vpop.permute.xlu0 %3357
        %3359 = vrot.lane.b32.xlu0 %v2573, 96
        %v3360 = vpop.permute.xlu0 %3359
        %3361 = vrot.lane.b32.xlu0 %v2574, 96
        %v3362 = vpop.permute.xlu0 %3361
        %3363 = vrot.lane.b32.xlu0 %v2575, 96
        %v3364 = vpop.permute.xlu0 %3363
        %3365 = vrot.lane.b32.xlu0 %v2576, 96
        %v3366 = vpop.permute.xlu0 %3365
        %3367 = vrot.lane.b32.xlu0 %v2577, 96
        %v3368 = vpop.permute.xlu0 %3367
        %3369 = vrot.lane.b32.xlu0 %v2578, 96
        %v3370 = vpop.permute.xlu0 %3369
        %3371 = vrot.lane.b32.xlu0 %v2579, 96
        %v3372 = vpop.permute.xlu0 %3371
        %3373 = vrot.lane.b32.xlu0 %v2580, 96
        %v3374 = vpop.permute.xlu0 %3373
        %3375 = vrot.lane.b32.xlu0 %v2581, 96
        %v3376 = vpop.permute.xlu0 %3375
        %3377 = vrot.lane.b32.xlu0 %v2582, 96
        %v3378 = vpop.permute.xlu0 %3377
        %3379 = vrot.lane.b32.xlu0 %v2583, 96
        %v3380 = vpop.permute.xlu0 %3379
        %3381 = vrot.lane.b32.xlu0 %v2584, 96
        %v3382 = vpop.permute.xlu0 %3381
        %3383 = vrot.lane.b32.xlu0 %v2585, 96
        %v3384 = vpop.permute.xlu0 %3383
        %3385 = vrot.lane.b32.xlu0 %v2586, 96
        %v3386 = vpop.permute.xlu0 %3385
        %3451 = vrot.lane.b32.xlu0 %v2587, 112
        %v3452 = vpop.permute.xlu0 %3451
        %3453 = vrot.lane.b32.xlu0 %v2588, 112
        %v3454 = vpop.permute.xlu0 %3453
        %3455 = vrot.lane.b32.xlu0 %v2589, 112
        %v3456 = vpop.permute.xlu0 %3455
        %3457 = vrot.lane.b32.xlu0 %v2590, 112
        %v3458 = vpop.permute.xlu0 %3457
        %3459 = vrot.lane.b32.xlu0 %v2591, 112
        %v3460 = vpop.permute.xlu0 %3459
        %3461 = vrot.lane.b32.xlu0 %v2592, 112
        %v3462 = vpop.permute.xlu0 %3461
        %3463 = vrot.lane.b32.xlu0 %v2593, 112
        %v3464 = vpop.permute.xlu0 %3463
        %3465 = vrot.lane.b32.xlu0 %v2594, 112
        %v3466 = vpop.permute.xlu0 %3465
        %3467 = vrot.lane.b32.xlu0 %v2595, 112
        %v3468 = vpop.permute.xlu0 %3467
        %3469 = vrot.lane.b32.xlu0 %v2596, 112
        %v3470 = vpop.permute.xlu0 %3469
        %3471 = vrot.lane.b32.xlu0 %v2597, 112
        %v3472 = vpop.permute.xlu0 %3471
        %3473 = vrot.lane.b32.xlu0 %v2598, 112
        %v3474 = vpop.permute.xlu0 %3473
        %3475 = vrot.lane.b32.xlu0 %v2599, 112
        %v3476 = vpop.permute.xlu0 %3475
        %3477 = vrot.lane.b32.xlu0 %v2600, 112
        %v3478 = vpop.permute.xlu0 %3477
        %3479 = vrot.lane.b32.xlu0 %v2601, 112
        %v3480 = vpop.permute.xlu0 %3479
        %3481 = vrot.lane.b32.xlu0 %v2602, 112
        %v3482 = vpop.permute.xlu0 %3481
        %3483 = vrot.lane.b32.xlu0 %v2603, 112
        %v3484 = vpop.permute.xlu0 %3483
        %3485 = vrot.lane.b32.xlu0 %v2604, 112
        %v3486 = vpop.permute.xlu0 %3485
        %3487 = vrot.lane.b32.xlu0 %v2605, 112
        %v3488 = vpop.permute.xlu0 %3487
        %3489 = vrot.lane.b32.xlu0 %v2606, 112
        %v3490 = vpop.permute.xlu0 %3489
        %3491 = vrot.lane.b32.xlu0 %v2607, 112
        %v3492 = vpop.permute.xlu0 %3491
        %3493 = vrot.lane.b32.xlu0 %v2608, 112
        %v3494 = vpop.permute.xlu0 %3493
        %3495 = vrot.lane.b32.xlu0 %v2609, 112
        %v3496 = vpop.permute.xlu0 %3495
        %3497 = vrot.lane.b32.xlu0 %v2610, 112
        %v3498 = vpop.permute.xlu0 %3497
        %3499 = vrot.lane.b32.xlu0 %v2611, 112
        %v3500 = vpop.permute.xlu0 %3499
        %3501 = vrot.lane.b32.xlu0 %v2612, 112
        %v3502 = vpop.permute.xlu0 %3501
        %3503 = vrot.lane.b32.xlu0 %v2613, 112
        %v3504 = vpop.permute.xlu0 %3503
        %3505 = vrot.lane.b32.xlu0 %v2614, 112
        %v3506 = vpop.permute.xlu0 %3505
        %3507 = vrot.lane.b32.xlu0 %v2615, 112
        %v3508 = vpop.permute.xlu0 %3507
        %3509 = vrot.lane.b32.xlu0 %v2616, 112
        %v3510 = vpop.permute.xlu0 %3509
        %3511 = vrot.lane.b32.xlu0 %v2617, 112
        %v3512 = vpop.permute.xlu0 %3511
        %3513 = vrot.lane.b32.xlu0 %v2618, 112
        %v3514 = vpop.permute.xlu0 %3513
        %v3547 = vsel %vm280, %v2362, %v2684
        %v3548 = vsel %vm280, %v2363, %v2686
        %v3549 = vsel %vm280, %v2364, %v2688
        %v3550 = vsel %vm280, %v2365, %v2690
        %v3551 = vsel %vm280, %v2366, %v2692
        %v3552 = vsel %vm280, %v2367, %v2694
        %v3553 = vsel %vm280, %v2368, %v2696
        %v3554 = vsel %vm280, %v2369, %v2698
        %v3555 = vsel %vm280, %v2370, %v2700
        %v3556 = vsel %vm280, %v2371, %v2702
        %v3557 = vsel %vm280, %v2372, %v2704
        %v3558 = vsel %vm280, %v2373, %v2706
        %v3559 = vsel %vm280, %v2374, %v2708
        %v3560 = vsel %vm280, %v2375, %v2710
        %v3561 = vsel %vm280, %v2376, %v2712
        %v3562 = vsel %vm280, %v2377, %v2714
        %v3563 = vsel %vm280, %v2378, %v2716
        %v3564 = vsel %vm280, %v2379, %v2718
        %v3565 = vsel %vm280, %v2380, %v2720
        %v3566 = vsel %vm280, %v2381, %v2722
        %v3567 = vsel %vm280, %v2382, %v2724
        %v3568 = vsel %vm280, %v2383, %v2726
        %v3569 = vsel %vm280, %v2384, %v2728
        %v3570 = vsel %vm280, %v2385, %v2730
        %v3571 = vsel %vm280, %v2386, %v2732
        %v3572 = vsel %vm280, %v2387, %v2734
        %v3573 = vsel %vm280, %v2388, %v2736
        %v3574 = vsel %vm280, %v2389, %v2738
        %v3575 = vsel %vm280, %v2390, %v2740
        %v3576 = vsel %vm280, %v2391, %v2742
        %v3577 = vsel %vm280, %v2392, %v2744
        %v3578 = vsel %vm280, %v2393, %v2746
        %v3579 = vsel %vm1943, %v3547, %v2812
        %v3580 = vsel %vm1943, %v3548, %v2814
        %v3581 = vsel %vm1943, %v3549, %v2816
        %v3582 = vsel %vm1943, %v3550, %v2818
        %v3583 = vsel %vm1943, %v3551, %v2820
        %v3584 = vsel %vm1943, %v3552, %v2822
        %v3585 = vsel %vm1943, %v3553, %v2824
        %v3586 = vsel %vm1943, %v3554, %v2826
        %v3587 = vsel %vm1943, %v3555, %v2828
        %v3588 = vsel %vm1943, %v3556, %v2830
        %v3589 = vsel %vm1943, %v3557, %v2832
        %v3590 = vsel %vm1943, %v3558, %v2834
        %v3591 = vsel %vm1943, %v3559, %v2836
        %v3592 = vsel %vm1943, %v3560, %v2838
        %v3593 = vsel %vm1943, %v3561, %v2840
        %v3594 = vsel %vm1943, %v3562, %v2842
        %v3595 = vsel %vm1943, %v3563, %v2844
        %v3596 = vsel %vm1943, %v3564, %v2846
        %v3597 = vsel %vm1943, %v3565, %v2848
        %v3598 = vsel %vm1943, %v3566, %v2850
        %v3599 = vsel %vm1943, %v3567, %v2852
        %v3600 = vsel %vm1943, %v3568, %v2854
        %v3601 = vsel %vm1943, %v3569, %v2856
        %v3602 = vsel %vm1943, %v3570, %v2858
        %v3603 = vsel %vm1943, %v3571, %v2860
        %v3604 = vsel %vm1943, %v3572, %v2862
        %v3605 = vsel %vm1943, %v3573, %v2864
        %v3606 = vsel %vm1943, %v3574, %v2866
        %v3607 = vsel %vm1943, %v3575, %v2868
        %v3608 = vsel %vm1943, %v3576, %v2870
        %v3609 = vsel %vm1943, %v3577, %v2872
        %v3610 = vsel %vm1943, %v3578, %v2874
        %vm3611 = vcmask 392192
        %v3612 = vsel %vm3611, %v3579, %v2940
        %v3613 = vsel %vm3611, %v3580, %v2942
        %v3614 = vsel %vm3611, %v3581, %v2944
        %v3615 = vsel %vm3611, %v3582, %v2946
        %v3616 = vsel %vm3611, %v3583, %v2948
        %v3617 = vsel %vm3611, %v3584, %v2950
        %v3618 = vsel %vm3611, %v3585, %v2952
        %v3619 = vsel %vm3611, %v3586, %v2954
        %v3620 = vsel %vm3611, %v3587, %v2956
        %v3621 = vsel %vm3611, %v3588, %v2958
        %v3622 = vsel %vm3611, %v3589, %v2960
        %v3623 = vsel %vm3611, %v3590, %v2962
        %v3624 = vsel %vm3611, %v3591, %v2964
        %v3625 = vsel %vm3611, %v3592, %v2966
        %v3626 = vsel %vm3611, %v3593, %v2968
        %v3627 = vsel %vm3611, %v3594, %v2970
        %v3628 = vsel %vm3611, %v3595, %v2972
        %v3629 = vsel %vm3611, %v3596, %v2974
        %v3630 = vsel %vm3611, %v3597, %v2976
        %v3631 = vsel %vm3611, %v3598, %v2978
        %v3632 = vsel %vm3611, %v3599, %v2980
        %v3633 = vsel %vm3611, %v3600, %v2982
        %v3634 = vsel %vm3611, %v3601, %v2984
        %v3635 = vsel %vm3611, %v3602, %v2986
        %v3636 = vsel %vm3611, %v3603, %v2988
        %v3637 = vsel %vm3611, %v3604, %v2990
        %v3638 = vsel %vm3611, %v3605, %v2992
        %v3639 = vsel %vm3611, %v3606, %v2994
        %v3640 = vsel %vm3611, %v3607, %v2996
        %v3641 = vsel %vm3611, %v3608, %v2998
        %v3642 = vsel %vm3611, %v3609, %v3000
        %v3643 = vsel %vm3611, %v3610, %v3002
        %vm3644 = vcmask 523264
        %v3645 = vsel %vm3644, %v3612, %v3068
        %v3646 = vsel %vm3644, %v3613, %v3070
        %v3647 = vsel %vm3644, %v3614, %v3072
        %v3648 = vsel %vm3644, %v3615, %v3074
        %v3649 = vsel %vm3644, %v3616, %v3076
        %v3650 = vsel %vm3644, %v3617, %v3078
        %v3651 = vsel %vm3644, %v3618, %v3080
        %v3652 = vsel %vm3644, %v3619, %v3082
        %v3653 = vsel %vm3644, %v3620, %v3084
        %v3654 = vsel %vm3644, %v3621, %v3086
        %v3655 = vsel %vm3644, %v3622, %v3088
        %v3656 = vsel %vm3644, %v3623, %v3090
        %v3657 = vsel %vm3644, %v3624, %v3092
        %v3658 = vsel %vm3644, %v3625, %v3094
        %v3659 = vsel %vm3644, %v3626, %v3096
        %v3660 = vsel %vm3644, %v3627, %v3098
        %v3661 = vsel %vm3644, %v3628, %v3100
        %v3662 = vsel %vm3644, %v3629, %v3102
        %v3663 = vsel %vm3644, %v3630, %v3104
        %v3664 = vsel %vm3644, %v3631, %v3106
        %v3665 = vsel %vm3644, %v3632, %v3108
        %v3666 = vsel %vm3644, %v3633, %v3110
        %v3667 = vsel %vm3644, %v3634, %v3112
        %v3668 = vsel %vm3644, %v3635, %v3114
        %v3669 = vsel %vm3644, %v3636, %v3116
        %v3670 = vsel %vm3644, %v3637, %v3118
        %v3671 = vsel %vm3644, %v3638, %v3120
        %v3672 = vsel %vm3644, %v3639, %v3122
        %v3673 = vsel %vm3644, %v3640, %v3124
        %v3674 = vsel %vm3644, %v3641, %v3126
        %v3675 = vsel %vm3644, %v3642, %v3128
        %v3676 = vsel %vm3644, %v3643, %v3130
        %vm3677 = vcmask 654336
        %v3678 = vsel %vm3677, %v3645, %v3196
        %v3679 = vsel %vm3677, %v3646, %v3198
        %v3680 = vsel %vm3677, %v3647, %v3200
        %v3681 = vsel %vm3677, %v3648, %v3202
        %v3682 = vsel %vm3677, %v3649, %v3204
        %v3683 = vsel %vm3677, %v3650, %v3206
        %v3684 = vsel %vm3677, %v3651, %v3208
        %v3685 = vsel %vm3677, %v3652, %v3210
        %v3686 = vsel %vm3677, %v3653, %v3212
        %v3687 = vsel %vm3677, %v3654, %v3214
        %v3688 = vsel %vm3677, %v3655, %v3216
        %v3689 = vsel %vm3677, %v3656, %v3218
        %v3690 = vsel %vm3677, %v3657, %v3220
        %v3691 = vsel %vm3677, %v3658, %v3222
        %v3692 = vsel %vm3677, %v3659, %v3224
        %v3693 = vsel %vm3677, %v3660, %v3226
        %v3694 = vsel %vm3677, %v3661, %v3228
        %v3695 = vsel %vm3677, %v3662, %v3230
        %v3696 = vsel %vm3677, %v3663, %v3232
        %v3697 = vsel %vm3677, %v3664, %v3234
        %v3698 = vsel %vm3677, %v3665, %v3236
        %v3699 = vsel %vm3677, %v3666, %v3238
        %v3700 = vsel %vm3677, %v3667, %v3240
        %v3701 = vsel %vm3677, %v3668, %v3242
        %v3702 = vsel %vm3677, %v3669, %v3244
        %v3703 = vsel %vm3677, %v3670, %v3246
        %v3704 = vsel %vm3677, %v3671, %v3248
        %v3705 = vsel %vm3677, %v3672, %v3250
        %v3706 = vsel %vm3677, %v3673, %v3252
        %v3707 = vsel %vm3677, %v3674, %v3254
        %v3708 = vsel %vm3677, %v3675, %v3256
        %v3709 = vsel %vm3677, %v3676, %v3258
        %vm3710 = vcmask 785408
        %v3711 = vsel %vm3710, %v3678, %v3324
        %v3712 = vsel %vm3710, %v3679, %v3326
        %v3713 = vsel %vm3710, %v3680, %v3328
        %v3714 = vsel %vm3710, %v3681, %v3330
        %v3715 = vsel %vm3710, %v3682, %v3332
        %v3716 = vsel %vm3710, %v3683, %v3334
        %v3717 = vsel %vm3710, %v3684, %v3336
        %v3718 = vsel %vm3710, %v3685, %v3338
        %v3719 = vsel %vm3710, %v3686, %v3340
        %v3720 = vsel %vm3710, %v3687, %v3342
        %v3721 = vsel %vm3710, %v3688, %v3344
        %v3722 = vsel %vm3710, %v3689, %v3346
        %v3723 = vsel %vm3710, %v3690, %v3348
        %v3724 = vsel %vm3710, %v3691, %v3350
        %v3725 = vsel %vm3710, %v3692, %v3352
        %v3726 = vsel %vm3710, %v3693, %v3354
        %v3727 = vsel %vm3710, %v3694, %v3356
        %v3728 = vsel %vm3710, %v3695, %v3358
        %v3729 = vsel %vm3710, %v3696, %v3360
        %v3730 = vsel %vm3710, %v3697, %v3362
        %v3731 = vsel %vm3710, %v3698, %v3364
        %v3732 = vsel %vm3710, %v3699, %v3366
        %v3733 = vsel %vm3710, %v3700, %v3368
        %v3734 = vsel %vm3710, %v3701, %v3370
        %v3735 = vsel %vm3710, %v3702, %v3372
        %v3736 = vsel %vm3710, %v3703, %v3374
        %v3737 = vsel %vm3710, %v3704, %v3376
        %v3738 = vsel %vm3710, %v3705, %v3378
        %v3739 = vsel %vm3710, %v3706, %v3380
        %v3740 = vsel %vm3710, %v3707, %v3382
        %v3741 = vsel %vm3710, %v3708, %v3384
        %v3742 = vsel %vm3710, %v3709, %v3386
        %vm3743 = vcmask 916480
        %v3744 = vsel %vm3743, %v3711, %v3452
        %v3745 = vsel %vm3743, %v3712, %v3454
        %v3746 = vsel %vm3743, %v3713, %v3456
        %v3747 = vsel %vm3743, %v3714, %v3458
        %v3748 = vsel %vm3743, %v3715, %v3460
        %v3749 = vsel %vm3743, %v3716, %v3462
        %v3750 = vsel %vm3743, %v3717, %v3464
        %v3751 = vsel %vm3743, %v3718, %v3466
        %v3752 = vsel %vm3743, %v3719, %v3468
        %v3753 = vsel %vm3743, %v3720, %v3470
        %v3754 = vsel %vm3743, %v3721, %v3472
        %v3755 = vsel %vm3743, %v3722, %v3474
        %v3756 = vsel %vm3743, %v3723, %v3476
        %v3757 = vsel %vm3743, %v3724, %v3478
        %v3758 = vsel %vm3743, %v3725, %v3480
        %v3759 = vsel %vm3743, %v3726, %v3482
        %v3760 = vsel %vm3743, %v3727, %v3484
        %v3761 = vsel %vm3743, %v3728, %v3486
        %v3762 = vsel %vm3743, %v3729, %v3488
        %v3763 = vsel %vm3743, %v3730, %v3490
        %v3764 = vsel %vm3743, %v3731, %v3492
        %v3765 = vsel %vm3743, %v3732, %v3494
        %v3766 = vsel %vm3743, %v3733, %v3496
        %v3767 = vsel %vm3743, %v3734, %v3498
        %v3768 = vsel %vm3743, %v3735, %v3500
        %v3769 = vsel %vm3743, %v3736, %v3502
        %v3770 = vsel %vm3743, %v3737, %v3504
        %v3771 = vsel %vm3743, %v3738, %v3506
        %v3772 = vsel %vm3743, %v3739, %v3508
        %v3773 = vsel %vm3743, %v3740, %v3510
        %v3774 = vsel %vm3743, %v3741, %v3512
        %v3775 = vsel %vm3743, %v3742, %v3514
        %v3776 = vpack.c.bf16 %v3745, %v3744
        %v3777 = vpack.c.bf16 %v2620, %v2619
        %v3778 = vpack.c.bf16 %v3747, %v3746
        %v3779 = vpack.c.bf16 %v2622, %v2621
        %v3780 = vpack.c.bf16 %v3749, %v3748
        %v3781 = vpack.c.bf16 %v2624, %v2623
        %v3782 = vpack.c.bf16 %v3751, %v3750
        %v3783 = vpack.c.bf16 %v2626, %v2625
        %v3784 = vpack.c.bf16 %v3753, %v3752
        %v3785 = vpack.c.bf16 %v2628, %v2627
        %v3786 = vpack.c.bf16 %v3755, %v3754
        %v3787 = vpack.c.bf16 %v2630, %v2629
        %v3788 = vpack.c.bf16 %v3757, %v3756
        %v3789 = vpack.c.bf16 %v2632, %v2631
        %v3790 = vpack.c.bf16 %v3759, %v3758
        %v3791 = vpack.c.bf16 %v2634, %v2633
        %v3792 = vpack.c.bf16 %v3761, %v3760
        %v3793 = vpack.c.bf16 %v2636, %v2635
        %v3794 = vpack.c.bf16 %v3763, %v3762
        %v3795 = vpack.c.bf16 %v2638, %v2637
        %v3796 = vpack.c.bf16 %v3765, %v3764
        %v3797 = vpack.c.bf16 %v2640, %v2639
        %v3798 = vpack.c.bf16 %v3767, %v3766
        %v3799 = vpack.c.bf16 %v2642, %v2641
        %v3800 = vpack.c.bf16 %v3769, %v3768
        %v3801 = vpack.c.bf16 %v2644, %v2643
        %v3802 = vpack.c.bf16 %v3771, %v3770
        %v3803 = vpack.c.bf16 %v2646, %v2645
        %v3804 = vpack.c.bf16 %v3773, %v3772
        %v3805 = vpack.c.bf16 %v2648, %v2647
        %v3806 = vpack.c.bf16 %v3775, %v3774
        %v3807 = vpack.c.bf16 %v2650, %v2649
        %v3808 = vld [vmem:[%s3] sm:$0xf]
        %v3809 = vld [vmem:[%s3 + $0x4] sm:$0xf]
        %v3810 = vld [vmem:[%s3 + $0x8] sm:$0xf]
        %v3811 = vld [vmem:[%s3 + $0xc] sm:$0xf]
        %v3812 = vld [vmem:[%s3 + $0x10] sm:$0xf]
        %v3813 = vld [vmem:[%s3 + $0x14] sm:$0xf]
        %v3814 = vld [vmem:[%s3 + $0x18] sm:$0xf]
        %v3815 = vld [vmem:[%s3 + $0x1c] sm:$0xf]
        %v3816 = vld [vmem:[%s3 + $0x20] sm:$0xf]
        %v3817 = vld [vmem:[%s3 + $0x24] sm:$0xf]
        %v3818 = vld [vmem:[%s3 + $0x28] sm:$0xf]
        %v3819 = vld [vmem:[%s3 + $0x2c] sm:$0xf]
        %v3820 = vld [vmem:[%s3 + $0x30] sm:$0xf]
        %v3821 = vld [vmem:[%s3 + $0x34] sm:$0xf]
        %v3822 = vld [vmem:[%s3 + $0x38] sm:$0xf]
        %v3823 = vld [vmem:[%s3 + $0x3c] sm:$0xf]
        %v3824 = vld [vmem:[%s3 + $0x40] sm:$0xf]
        %v3825 = vld [vmem:[%s3 + $0x44] sm:$0xf]
        %v3826 = vld [vmem:[%s4] sm:$0x1]
        %v3828 = vlaneseq
        %v3829 = vshrl.u32 %v3828, 7
        %v3830 = vsub.s32 0, %v3829
        %v3831 = vrot.slane %v3826, %v3830
        %v3851 = vunpack.c.l.b16 %v3808
        %v3852 = vunpack.c.l.b16 %v3809
        %v3853 = vunpack.c.l.b16 %v3810
        %v3854 = vunpack.c.l.b16 %v3811
        %v3855 = vunpack.c.l.b16 %v3812
        %v3856 = vunpack.c.l.b16 %v3813
        %v3857 = vunpack.c.l.b16 %v3814
        %v3858 = vunpack.c.l.b16 %v3815
        %v3859 = vunpack.c.l.b16 %v3816
        %v3860 = vunpack.c.l.b16 %v3817
        %v3861 = vunpack.c.l.b16 %v3818
        %v3862 = vunpack.c.l.b16 %v3819
        %v3863 = vunpack.c.l.b16 %v3820
        %v3864 = vunpack.c.l.b16 %v3821
        %v3865 = vunpack.c.l.b16 %v3822
        %v3866 = vunpack.c.l.b16 %v3823
        %v3867 = vunpack.c.l.b16 %v3824
        %v3868 = vunpack.c.l.b16 %v3825
        %v3869 = vpack.c.b16 %v3852, %v3851
        %v3870 = vpack.c.b16 %v3854, %v3853
        %v3871 = vpack.c.b16 %v3856, %v3855
        %v3872 = vpack.c.b16 %v3858, %v3857
        %v3873 = vpack.c.b16 %v3860, %v3859
        %v3874 = vpack.c.b16 %v3862, %v3861
        %v3875 = vpack.c.b16 %v3864, %v3863
        %v3876 = vpack.c.b16 %v3866, %v3865
        %v3877 = vpack.c.b16 %v3868, %v3867
        %v3888 = vsel %vm280, %v3777, 0
        %v3891 = vsel %vm280, %v3779, 0
        %v3894 = vsel %vm280, %v3781, 0
        %v3897 = vsel %vm280, %v3783, 0
        %v3900 = vsel %vm280, %v3785, 0
        %v3903 = vsel %vm280, %v3787, 0
        %v3906 = vsel %vm280, %v3789, 0
        %v3909 = vsel %vm280, %v3791, 0
        %v3912 = vsel %vm280, %v3793, 0
        %v3915 = vsel %vm280, %v3795, 0
        %v3918 = vsel %vm280, %v3797, 0
        %v3921 = vsel %vm280, %v3799, 0
        %v3924 = vsel %vm280, %v3801, 0
        %v3927 = vsel %vm280, %v3803, 0
        %v3930 = vsel %vm280, %v3805, 0
        %v3933 = vsel %vm280, %v3807, 0
        %3935 = vmatprep.subr.bf16.mxu0 0
        %3936 = vmatpush1.bf16.msra.mxu0 %v3869
        %3937 = vmatprep.subr.bf16.mxu0 0
        %3938 = vmatpush1.bf16.msra.mxu0 %v3870
        %3939 = vmatprep.subr.bf16.mxu0 0
        %3940 = vmatpush1.bf16.msra.mxu0 %v3871
        %3941 = vmatprep.subr.bf16.mxu0 0
        %3942 = vmatpush1.bf16.msra.mxu0 %v3872
        %3943 = vmatprep.subr.bf16.mxu0 0
        %3944 = vmatpush1.bf16.msra.mxu0 %v3873
        %3945 = vmatprep.subr.bf16.mxu0 0
        %3946 = vmatpush1.bf16.msra.mxu0 %v3874
        %3947 = vmatprep.subr.bf16.mxu0 0
        %3948 = vmatpush1.bf16.msra.mxu0 %v3875
        %3949 = vmatprep.subr.bf16.mxu0 0
        %3950 = vmatpush1.bf16.msra.mxu0 %v3876
        %3951 = vmatprep.subr.bf16.mxu0 0
        %3952 = vmatpush1.bf16.msra.mxu0 %v3877
        %3953 = vmatprep.subr.bf16.mxu0 0
        %3954 = vmatpush1.bf16.msra.mxu0 0
        %3955 = vmatprep.subr.bf16.mxu0 0
        %3956 = vmatpush1.bf16.msra.mxu0 0
        %3957 = vmatprep.subr.bf16.mxu0 0
        %3958 = vmatpush1.bf16.msra.mxu0 0
        %3959 = vmatprep.subr.bf16.mxu0 0
        %3960 = vmatpush1.bf16.msra.mxu0 0
        %3961 = vmatprep.subr.bf16.mxu0 0
        %3962 = vmatpush1.bf16.msra.mxu0 0
        %3963 = vmatprep.subr.bf16.mxu0 0
        %3964 = vmatpush1.bf16.msra.mxu0 0
        %3965 = vmatprep.subr.bf16.mxu0 0
        %3966 = vmatpush1.bf16.msra.mxu0 0
        %3967 = vmatprep.mubr.bf16.mxu0 %v3888
        %3968 = vmatmul.mubr.bf16.gmra.mrb[0].mxu0 %v3776
        %v3969 = vpop.f32.mrb[0].mxu0
        %v3970 = vadd.f32 %v3831, %v3969
        %v3971 = vpop.f32.mrb[0].mxu0
        %v3972 = vpop.f32.mrb[0].mxu0
        %v3973 = vadd.f32 %v3831, %v3972
        %v3974 = vpop.f32.mrb[0].mxu0
        %3975 = vmatprep.mubr.bf16.mxu0 %v3891
        %3976 = vmatmul.mubr.bf16.gmra.mrb[0].mxu0 %v3778
        %v3977 = vpop.f32.mrb[0].mxu0
        %v3978 = vadd.f32 %v3831, %v3977
        %v3979 = vpop.f32.mrb[0].mxu0
        %v3980 = vpop.f32.mrb[0].mxu0
        %v3981 = vadd.f32 %v3831, %v3980
        %v3982 = vpop.f32.mrb[0].mxu0
        %3983 = vmatprep.mubr.bf16.mxu0 %v3894
        %3984 = vmatmul.mubr.bf16.gmra.mrb[0].mxu0 %v3780
        %v3985 = vpop.f32.mrb[0].mxu0
        %v3986 = vadd.f32 %v3831, %v3985
        %v3987 = vpop.f32.mrb[0].mxu0
        %v3988 = vpop.f32.mrb[0].mxu0
        %v3989 = vadd.f32 %v3831, %v3988
        %v3990 = vpop.f32.mrb[0].mxu0
        %3991 = vmatprep.mubr.bf16.mxu0 %v3897
        %3992 = vmatmul.mubr.bf16.gmra.mrb[0].mxu0 %v3782
        %v3993 = vpop.f32.mrb[0].mxu0
        %v3994 = vadd.f32 %v3831, %v3993
        %v3995 = vpop.f32.mrb[0].mxu0
        %v3996 = vpop.f32.mrb[0].mxu0
        %v3997 = vadd.f32 %v3831, %v3996
        %v3998 = vpop.f32.mrb[0].mxu0
        %3999 = vmatprep.mubr.bf16.mxu0 %v3900
        %4000 = vmatmul.mubr.bf16.gmra.mrb[0].mxu0 %v3784
        %v4001 = vpop.f32.mrb[0].mxu0
        %v4002 = vadd.f32 %v3831, %v4001
        %v4003 = vpop.f32.mrb[0].mxu0
        %v4004 = vpop.f32.mrb[0].mxu0
        %v4005 = vadd.f32 %v3831, %v4004
        %v4006 = vpop.f32.mrb[0].mxu0
        %4007 = vmatprep.mubr.bf16.mxu0 %v3903
        %4008 = vmatmul.mubr.bf16.gmra.mrb[0].mxu0 %v3786
        %v4009 = vpop.f32.mrb[0].mxu0
        %v4010 = vadd.f32 %v3831, %v4009
        %v4011 = vpop.f32.mrb[0].mxu0
        %v4012 = vpop.f32.mrb[0].mxu0
        %v4013 = vadd.f32 %v3831, %v4012
        %v4014 = vpop.f32.mrb[0].mxu0
        %4015 = vmatprep.mubr.bf16.mxu0 %v3906
        %4016 = vmatmul.mubr.bf16.gmra.mrb[0].mxu0 %v3788
        %v4017 = vpop.f32.mrb[0].mxu0
        %v4018 = vadd.f32 %v3831, %v4017
        %v4019 = vpop.f32.mrb[0].mxu0
        %v4020 = vpop.f32.mrb[0].mxu0
        %v4021 = vadd.f32 %v3831, %v4020
        %v4022 = vpop.f32.mrb[0].mxu0
        %4023 = vmatprep.mubr.bf16.mxu0 %v3909
        %4024 = vmatmul.mubr.bf16.gmra.mrb[0].mxu0 %v3790
        %v4025 = vpop.f32.mrb[0].mxu0
        %v4026 = vadd.f32 %v3831, %v4025
        %v4027 = vpop.f32.mrb[0].mxu0
        %v4028 = vpop.f32.mrb[0].mxu0
        %v4029 = vadd.f32 %v3831, %v4028
        %v4030 = vpop.f32.mrb[0].mxu0
        %4031 = vmatprep.mubr.bf16.mxu0 %v3912
        %4032 = vmatmul.mubr.bf16.gmra.mrb[0].mxu0 %v3792
        %v4033 = vpop.f32.mrb[0].mxu0
        %v4034 = vadd.f32 %v3831, %v4033
        %v4035 = vpop.f32.mrb[0].mxu0
        %v4036 = vpop.f32.mrb[0].mxu0
        %v4037 = vadd.f32 %v3831, %v4036
        %v4038 = vpop.f32.mrb[0].mxu0
        %4039 = vmatprep.mubr.bf16.mxu0 %v3915
        %4040 = vmatmul.mubr.bf16.gmra.mrb[0].mxu0 %v3794
        %v4041 = vpop.f32.mrb[0].mxu0
        %v4042 = vadd.f32 %v3831, %v4041
        %v4043 = vpop.f32.mrb[0].mxu0
        %v4044 = vpop.f32.mrb[0].mxu0
        %v4045 = vadd.f32 %v3831, %v4044
        %v4046 = vpop.f32.mrb[0].mxu0
        %4047 = vmatprep.mubr.bf16.mxu0 %v3918
        %4048 = vmatmul.mubr.bf16.gmra.mrb[0].mxu0 %v3796
        %v4049 = vpop.f32.mrb[0].mxu0
        %v4050 = vadd.f32 %v3831, %v4049
        %v4051 = vpop.f32.mrb[0].mxu0
        %v4052 = vpop.f32.mrb[0].mxu0
        %v4053 = vadd.f32 %v3831, %v4052
        %v4054 = vpop.f32.mrb[0].mxu0
        %4055 = vmatprep.mubr.bf16.mxu0 %v3921
        %4056 = vmatmul.mubr.bf16.gmra.mrb[0].mxu0 %v3798
        %v4057 = vpop.f32.mrb[0].mxu0
        %v4058 = vadd.f32 %v3831, %v4057
        %v4059 = vpop.f32.mrb[0].mxu0
        %v4060 = vpop.f32.mrb[0].mxu0
        %v4061 = vadd.f32 %v3831, %v4060
        %v4062 = vpop.f32.mrb[0].mxu0
        %4063 = vmatprep.mubr.bf16.mxu0 %v3924
        %4064 = vmatmul.mubr.bf16.gmra.mrb[0].mxu0 %v3800
        %v4065 = vpop.f32.mrb[0].mxu0
        %v4066 = vadd.f32 %v3831, %v4065
        %v4067 = vpop.f32.mrb[0].mxu0
        %v4068 = vpop.f32.mrb[0].mxu0
        %v4069 = vadd.f32 %v3831, %v4068
        %v4070 = vpop.f32.mrb[0].mxu0
        %4071 = vmatprep.mubr.bf16.mxu0 %v3927
        %4072 = vmatmul.mubr.bf16.gmra.mrb[0].mxu0 %v3802
        %v4073 = vpop.f32.mrb[0].mxu0
        %v4074 = vadd.f32 %v3831, %v4073
        %v4075 = vpop.f32.mrb[0].mxu0
        %v4076 = vpop.f32.mrb[0].mxu0
        %v4077 = vadd.f32 %v3831, %v4076
        %v4078 = vpop.f32.mrb[0].mxu0
        %4079 = vmatprep.mubr.bf16.mxu0 %v3930
        %4080 = vmatmul.mubr.bf16.gmra.mrb[0].mxu0 %v3804
        %v4081 = vpop.f32.mrb[0].mxu0
        %v4082 = vadd.f32 %v3831, %v4081
        %v4083 = vpop.f32.mrb[0].mxu0
        %v4084 = vpop.f32.mrb[0].mxu0
        %v4085 = vadd.f32 %v3831, %v4084
        %v4086 = vpop.f32.mrb[0].mxu0
        %4087 = vmatprep.mubr.bf16.mxu0 %v3933
        %4088 = vmatmul.mubr.bf16.gmra.mrb[0].mxu0 %v3806
        %v4089 = vpop.f32.mrb[0].mxu0
        %v4090 = vadd.f32 %v3831, %v4089
        %v4091 = vpop.f32.mrb[0].mxu0
        %v4092 = vpop.f32.mrb[0].mxu0
        %v4093 = vadd.f32 %v3831, %v4092
        %v4094 = vpop.f32.mrb[0].mxu0
        %4095 = vdwg.mxu0
        %4096 = vst [vmem:[%s217] sm:$0xff] %v3970
        %4097 = vst [vmem:[%s217 + $0x8] sm:$0xff] %v3973
        %4098 = vst [vmem:[%s217 + $0x10] sm:$0xff] %v3978
        %4099 = vst [vmem:[%s217 + $0x18] sm:$0xff] %v3981
        %4100 = vst [vmem:[%s217 + $0x20] sm:$0xff] %v3986
        %4101 = vst [vmem:[%s217 + $0x28] sm:$0xff] %v3989
        %4102 = vst [vmem:[%s217 + $0x30] sm:$0xff] %v3994
        %4103 = vst [vmem:[%s217 + $0x38] sm:$0xff] %v3997
        %4104 = vst [vmem:[%s217 + $0x40] sm:$0xff] %v4002
        %4105 = vst [vmem:[%s217 + $0x48] sm:$0xff] %v4005
        %4106 = vst [vmem:[%s217 + $0x50] sm:$0xff] %v4010
        %4107 = vst [vmem:[%s217 + $0x58] sm:$0xff] %v4013
        %4108 = vst [vmem:[%s217 + $0x60] sm:$0xff] %v4018
        %4109 = vst [vmem:[%s217 + $0x68] sm:$0xff] %v4021
        %4110 = vst [vmem:[%s217 + $0x70] sm:$0xff] %v4026
        %4111 = vst [vmem:[%s217 + $0x78] sm:$0xff] %v4029
        %4112 = vst [vmem:[%s217 + $0x80] sm:$0xff] %v4034
        %4113 = vst [vmem:[%s217 + $0x88] sm:$0xff] %v4037
        %4114 = vst [vmem:[%s217 + $0x90] sm:$0xff] %v4042
        %4115 = vst [vmem:[%s217 + $0x98] sm:$0xff] %v4045
        %4116 = vst [vmem:[%s217 + $0xa0] sm:$0xff] %v4050
        %4117 = vst [vmem:[%s217 + $0xa8] sm:$0xff] %v4053
        %4118 = vst [vmem:[%s217 + $0xb0] sm:$0xff] %v4058
        %4119 = vst [vmem:[%s217 + $0xb8] sm:$0xff] %v4061
        %4120 = vst [vmem:[%s217 + $0xc0] sm:$0xff] %v4066
        %4121 = vst [vmem:[%s217 + $0xc8] sm:$0xff] %v4069
        %4122 = vst [vmem:[%s217 + $0xd0] sm:$0xff] %v4074
        %4123 = vst [vmem:[%s217 + $0xd8] sm:$0xff] %v4077
        %4124 = vst [vmem:[%s217 + $0xe0] sm:$0xff] %v4082
        %4125 = vst [vmem:[%s217 + $0xe8] sm:$0xff] %v4085
        %4126 = vst [vmem:[%s217 + $0xf0] sm:$0xff] %v4090
        %4127 = vst [vmem:[%s217 + $0xf8] sm:$0xff] %v4093
        %s4128 = sand.u32 %s137, 1
        %s4129 = scalar_lea.sflag [#allocation5], %s4128
        %s4130 = sand.u32 %s137, 1
        %s4131 = smul.addr %s4130, 256
        %s4132 = scalar_lea.vmem [#allocation4], %s4131
        // Predicated region
        $region41: #{tpu_custom_call.1} parent=39 // pred_check
          %p4133 = pneg %p147
        $region42: #{tpu_custom_call.1} parent=39 // pred_check_branch
          %4135 = sbr.rel (%p4133) target = $region44
        $region43: #{tpu_custom_call.1} parent=39 // pred_region
          %s4137 = ssub.s32 4096, 4096
          %4138 = vsyncadd %s4129, %s4137
          %s4139 = smul.addr %s19, 32
          %s4140 = smul.addr %s4139, 128
          %s4141 = scalar_lea.hbm %s5, %s4140
          %s4142 = sshll.u32 %s4132, 4
          %s4143 = int_to_ptr.vmem [resolvable:$true] %s4142
          %4148 = dma.vmem_to_hbm [thread:$0]  %s4143, 4096, %s4141, %s4129, 128, 128, 8
        $region44: #{tpu_custom_call.1} parent=39 // pred_fallthru
          _
      $region40: #{tpu_custom_call.1} parent=5 // pred_fallthru
        _
      %p4149 = scmp.le.s32.totalorder 2, %s14
      // Predicated region
      $region45: #{tpu_custom_call.1} parent=5 // pred_check
        %p4150 = pneg %p4149
      $region46: #{tpu_custom_call.1} parent=5 // pred_check_branch
        %4152 = sbr.rel (%p4150) target = $region48
      $region47: #{tpu_custom_call.1} parent=5 // pred_region
        %s4153 = ssub.s32 %s14, 2
        // Predicated region
        $region49: #{tpu_custom_call.1} parent=47 // pred_check
          %p4154 = pneg %p153
        $region50: #{tpu_custom_call.1} parent=47 // pred_check_branch
          %4156 = sbr.rel (%p4154) target = $region52
        $region51: #{tpu_custom_call.1} parent=47 // pred_region
          %s4157 = sand.u32 %s138, 1
          %s4158 = scalar_lea.sflag [#allocation5], %s4157
          %s4159 = sand.u32 %s138, 1
          %s4160 = smul.addr %s4159, 256
          %s4161 = scalar_lea.vmem [#allocation4], %s4160
          %4162 = dma.done %s4158, 4096
        $region52: #{tpu_custom_call.1} parent=47 // pred_fallthru
          _
      $region48: #{tpu_custom_call.1} parent=5 // pred_fallthru
        _
    $region6: #{tpu_custom_call.1} parent=1 // loop_footer
      %s18 = sadd.s32 1, %s14
    $region7: #{tpu_custom_call.1} parent=1 // loop_footer_branch
      %13 = sbr.rel target = $region3
    $region8: #{tpu_custom_call.1} parent=1 // loop_exit
      _
    %4163 = vsyncpa [#allocation5], 1
    %s4164 = scalar_lea.sflag [#allocation5], 1
    %4165 = vsyncpa %s4164, 1

</llo_original>
